<compile_context>
chip_gen: v7x
topology: tpu7x:2x2x1
jax: 0.10.0
libtpu: 0.0.40
codegen_flags: <defaults>
</compile_context>

<pallas_src>
import functools

import jax
import jax.numpy as jnp
from jax import lax
from jax.experimental import pallas as pl
from jax.experimental.pallas import tpu as pltpu


def _round_up(x, m):
    return ((x + m - 1) // m) * m


# -----------------------------------------------------------------------------
# One-time weight preparation: fold conv / deconv spatial structure into dense
# (K, N) operators over NCHW-flattened activations, pad, cast to bf16.
# -----------------------------------------------------------------------------
def _conv_dense_matrix(w, H, W, stride, padding):
    """Dense (Cin*H*W, Cout*OH*OW) matrix == Conv2d(w, stride, padding).

    Both sides are NCHW-flattened (matching torch .view(B, -1)).  Built once
    by pushing the identity basis through lax.conv; runs only at prepare time.
    """
    Cout, Cin, kh, kw = w.shape
    D = Cin * H * W
    basis = jnp.eye(D, dtype=jnp.float32).reshape(D, Cin, H, W)
    y = lax.conv_general_dilated(
        basis, w.astype(jnp.float32),
        window_strides=(stride, stride),
        padding=[(padding, padding), (padding, padding)],
        dimension_numbers=("NCHW", "OIHW", "NCHW"))
    return y.reshape(D, -1)


def _deconv_dense_matrix(w, H, W, stride, padding):
    """Dense matrix == ConvTranspose2d(w, stride, padding); w: (Cin,Cout,kh,kw).

    ConvTranspose == lhs-dilated cross-correlation with the spatially flipped,
    channel-swapped kernel and padding (k-1-p).  output_padding=0 assumed.
    """
    Cin, Cout, kh, kw = w.shape
    w_t = jnp.flip(w.astype(jnp.float32), axis=(2, 3)).transpose(1, 0, 2, 3)
    D = Cin * H * W
    basis = jnp.eye(D, dtype=jnp.float32).reshape(D, Cin, H, W)
    y = lax.conv_general_dilated(
        basis, w_t,
        window_strides=(1, 1),
        padding=[(kh - 1 - padding, kh - 1 - padding),
                 (kw - 1 - padding, kw - 1 - padding)],
        lhs_dilation=(stride, stride),
        dimension_numbers=("NCHW", "OIHW", "NCHW"))
    return y.reshape(D, -1)


def prepare_params(params, *, image_size, image_channel, std_channel, latent_dim):
    """One-time transform of PyTorch-layout params into padded bf16 operators."""
    del latent_dim  # implied by the fc weight shapes
    c1, c2 = std_channel, std_channel * 2
    s2, s4 = image_size // 2, image_size // 4

    w1 = _conv_dense_matrix(params["enc_conv1_w"], image_size, image_size, 2, 1)
    w2 = _conv_dense_matrix(params["enc_conv2_w"], s2, s2, 2, 1)
    w3 = params["enc_fc_w"].astype(jnp.float32).T            # (flat, latent)
    w4 = params["dec_fc_w"].astype(jnp.float32).T            # (latent, flat)
    w5 = _deconv_dense_matrix(params["dec_deconv1_w"], s4, s4, 2, 1)
    w6 = _deconv_dense_matrix(params["dec_deconv2_w"], s2, s2, 2, 1)

    def conv_bias(b, oh, ow):
        # per-channel bias broadcast over spatial, NCHW (channel-major) flatten
        return jnp.repeat(b.astype(jnp.float32), oh * ow)

    b1 = conv_bias(params["enc_conv1_b"], s2, s2)
    b2 = conv_bias(params["enc_conv2_b"], s4, s4)
    b3 = params["enc_fc_b"].astype(jnp.float32)
    b4 = params["dec_fc_b"].astype(jnp.float32)
    b5 = conv_bias(params["dec_deconv1_b"], s2, s2)
    b6 = conv_bias(params["dec_deconv2_b"], image_size, image_size)

    def pad_w(w):
        K, N = w.shape
        Kp, Np = _round_up(K, 128), _round_up(N, 128)
        return jnp.pad(w, ((0, Kp - K), (0, Np - N))).astype(jnp.bfloat16)

    def pad_b(b):
        N = b.shape[0]
        Np = _round_up(N, 128)
        return jnp.pad(b, (0, Np - N)).astype(jnp.float32).reshape(1, Np)

    return {
        "w": [pad_w(w) for w in (w1, w2, w3, w4, w5, w6)],
        "b": [pad_b(b) for b in (b1, b2, b3, b4, b5, b6)],
    }


# -----------------------------------------------------------------------------
# Single fused Pallas kernel: the whole network, activations resident in VMEM.
# -----------------------------------------------------------------------------
def _ae_fused_kernel(x_ref,
                     w1, b1, w2, b2, w3, b3, w4, b4, w5, b5, w6, b6,
                     o_ref, *, norm):
    def layer(h, w_ref, b_ref, act):
        # bf16 x bf16 on the MXU, f32 accumulate; f32 epilogue (v5e-safe).
        acc = jnp.dot(h, w_ref[...], preferred_element_type=jnp.float32)
        acc = acc + b_ref[...]
        if act == "relu":
            acc = jnp.maximum(acc, 0.0)
        elif act == "sigmoid":
            acc = jax.nn.sigmoid(acc)
        elif act == "tanh":
            acc = jnp.tanh(acc)
        return acc

    h = x_ref[...]                                               # bf16 (tm, Din)
    h = layer(h, w1, b1, "relu").astype(jnp.bfloat16)            # conv1
    h = layer(h, w2, b2, "relu").astype(jnp.bfloat16)            # conv2
    h = layer(h, w3, b3, "none").astype(jnp.bfloat16)            # enc fc -> latent
    h = layer(h, w4, b4, "relu").astype(jnp.bfloat16)            # dec fc
    h = layer(h, w5, b5, "relu").astype(jnp.bfloat16)            # deconv1
    out = layer(h, w6, b6, "sigmoid" if norm else "tanh")        # deconv2 + out act
    o_ref[...] = out.astype(o_ref.dtype)


def ae_forward(prepared, x, *, norm, block_m=128):
    """x: (B, C, H, W) f32 -> (B, C, H, W) f32, one pallas_call per forward."""
    B, C, H, W = x.shape
    D_img = C * H * W
    ws, bs = prepared["w"], prepared["b"]
    K_in = ws[0].shape[0]
    D_out = ws[-1].shape[1]

    # NCHW flatten matches torch .view(B, -1); operators were built in that order.
    x_flat = x.reshape(B, D_img).astype(jnp.bfloat16)

    tm = min(block_m, _round_up(B, 8))
    Mp = _round_up(B, tm)
    x_p = jnp.pad(x_flat, ((0, Mp - B), (0, K_in - D_img)))

    in_specs = [pl.BlockSpec((tm, K_in), lambda i: (i, 0))]
    for w_i, b_i in zip(ws, bs):
        in_specs.append(pl.BlockSpec(w_i.shape, lambda i: (0, 0)))   # VMEM-resident
        in_specs.append(pl.BlockSpec(b_i.shape, lambda i: (0, 0)))
    out_spec = pl.BlockSpec((tm, D_out), lambda i: (i, 0))

    n_blocks = Mp // tm
    flops = 2 * Mp * sum(w_i.shape[0] * w_i.shape[1] for w_i in ws)
    bytes_accessed = (2 * Mp * K_in + 4 * Mp * D_out
                      + 2 * sum(w_i.size for w_i in ws)
                      + 4 * sum(b_i.size for b_i in bs))
    cost = pl.CostEstimate(flops=flops, transcendentals=Mp * D_out,
                           bytes_accessed=bytes_accessed)

    args = [x_p]
    for w_i, b_i in zip(ws, bs):
        args += [w_i, b_i]

    out = pl.pallas_call(
        functools.partial(_ae_fused_kernel, norm=norm),
        out_shape=jax.ShapeDtypeStruct((Mp, D_out), jnp.float32),
        grid_spec=pltpu.PrefetchScalarGridSpec(
            num_scalar_prefetch=0,
            grid=(n_blocks,),
            in_specs=in_specs,
            out_specs=out_spec,
        ),
        compiler_params=pltpu.CompilerParams(
            # Batch blocks are independent -> megacore-shardable on v7x.
            dimension_semantics=("parallel",),
            # Total footprint (weights + per-block activations) is ~6 MiB;
            # 32 MiB leaves headroom and overrides v5e's 16 MiB default.
            vmem_limit_bytes=32 * 1024 * 1024,
        ),
        cost_estimate=cost,
    )(*args)

    return out[:B, :D_img].reshape(B, C, H, W)


# -----------------------------------------------------------------------------
# Parameter init (PyTorch-style layouts / default uniform init).
# -----------------------------------------------------------------------------
def init_params(key, image_size, image_channel, std_channel, latent_dim):
    c1, c2 = std_channel, std_channel * 2
    s4 = image_size // 4
    flat = c2 * s4 * s4
    ks = jax.random.split(key, 12)

    def u(k, shape, fan_in):
        bound = 1.0 / float(fan_in) ** 0.5
        return jax.random.uniform(k, shape, jnp.float32, -bound, bound)

    return {
        "enc_conv1_w": u(ks[0], (c1, image_channel, 4, 4), image_channel * 16),
        "enc_conv1_b": u(ks[1], (c1,), image_channel * 16),
        "enc_conv2_w": u(ks[2], (c2, c1, 4, 4), c1 * 16),
        "enc_conv2_b": u(ks[3], (c2,), c1 * 16),
        "enc_fc_w":    u(ks[4], (latent_dim, flat), flat),
        "enc_fc_b":    u(ks[5], (latent_dim,), flat),
        "dec_fc_w":    u(ks[6], (flat, latent_dim), latent_dim),
        "dec_fc_b":    u(ks[7], (flat,), latent_dim),
        "dec_deconv1_w": u(ks[8], (c2, c1, 4, 4), c2 * 16),      # (Cin, Cout, kh, kw)
        "dec_deconv1_b": u(ks[9], (c1,), c2 * 16),
        "dec_deconv2_w": u(ks[10], (c1, image_channel, 4, 4), c1 * 16),
        "dec_deconv2_b": u(ks[11], (image_channel,), c1 * 16),
    }


if __name__ == "__main__":
    image_size, image_channel, std_channel, latent_dim, norm = 16, 4, 8, 32, True
    batch = 2

    key = jax.random.PRNGKey(0)
    pkey, xkey = jax.random.split(key)
    params = init_params(pkey, image_size, image_channel, std_channel, latent_dim)
    prepared = prepare_params(params, image_size=image_size,
                              image_channel=image_channel,
                              std_channel=std_channel, latent_dim=latent_dim)

    x = jax.random.normal(xkey, (batch, image_channel, image_size, image_size),
                          jnp.float32)

    fwd = jax.jit(functools.partial(ae_forward, norm=norm))
    out = fwd(prepared, x)
    jax.block_until_ready(out)

    assert out.shape == x.shape, (out.shape, x.shape)
    assert bool(jnp.all(jnp.isfinite(out)))
    # norm=True -> final sigmoid, so outputs must lie in (0, 1)
    assert bool(jnp.all((out >= 0.0) & (out <= 1.0)))
    print("KERNEL_OK")
</pallas_src>

<mosaic_0001>
module attributes {stable_mosaic.version = 11 : i64} {
  func.func @_ae_fused_kernel(%arg0: i32, %arg1: memref<8x1024xbf16, #tpu.memory_space<vmem>>, %arg2: memref<1024x512xbf16, #tpu.memory_space<vmem>>, %arg3: memref<1x512xf32, #tpu.memory_space<vmem>>, %arg4: memref<512x256xbf16, #tpu.memory_space<vmem>>, %arg5: memref<1x256xf32, #tpu.memory_space<vmem>>, %arg6: memref<256x128xbf16, #tpu.memory_space<vmem>>, %arg7: memref<1x128xf32, #tpu.memory_space<vmem>>, %arg8: memref<128x256xbf16, #tpu.memory_space<vmem>>, %arg9: memref<1x256xf32, #tpu.memory_space<vmem>>, %arg10: memref<256x512xbf16, #tpu.memory_space<vmem>>, %arg11: memref<1x512xf32, #tpu.memory_space<vmem>>, %arg12: memref<512x1024xbf16, #tpu.memory_space<vmem>>, %arg13: memref<1x1024xf32, #tpu.memory_space<vmem>>, %arg14: memref<8x1024xf32, #tpu.memory_space<vmem>>) attributes {dimension_semantics = [#tpu.dimension_semantics<parallel>], iteration_bounds = array<i64: 1>, scalar_prefetch = 0 : i64, scratch_operands = 0 : i64, tpu.core_type = #tpu.core_type<tc>, window_params = [{transform_indices = @transform_0, window_bounds = array<i64: 8, 1024>}, {pipeline_mode = #tpu.pipeline_mode<synchronous>, transform_indices = @transform_1, window_bounds = array<i64: 1024, 512>}, {pipeline_mode = #tpu.pipeline_mode<synchronous>, transform_indices = @transform_2, window_bounds = array<i64: 1, 512>}, {pipeline_mode = #tpu.pipeline_mode<synchronous>, transform_indices = @transform_3, window_bounds = array<i64: 512, 256>}, {pipeline_mode = #tpu.pipeline_mode<synchronous>, transform_indices = @transform_4, window_bounds = array<i64: 1, 256>}, {pipeline_mode = #tpu.pipeline_mode<synchronous>, transform_indices = @transform_5, window_bounds = array<i64: 256, 128>}, {pipeline_mode = #tpu.pipeline_mode<synchronous>, transform_indices = @transform_6, window_bounds = array<i64: 1, 128>}, {pipeline_mode = #tpu.pipeline_mode<synchronous>, transform_indices = @transform_7, window_bounds = array<i64: 128, 256>}, {pipeline_mode = #tpu.pipeline_mode<synchronous>, transform_indices = @transform_8, window_bounds = array<i64: 1, 256>}, {pipeline_mode = #tpu.pipeline_mode<synchronous>, transform_indices = @transform_9, window_bounds = array<i64: 256, 512>}, {pipeline_mode = #tpu.pipeline_mode<synchronous>, transform_indices = @transform_10, window_bounds = array<i64: 1, 512>}, {pipeline_mode = #tpu.pipeline_mode<synchronous>, transform_indices = @transform_11, window_bounds = array<i64: 512, 1024>}, {pipeline_mode = #tpu.pipeline_mode<synchronous>, transform_indices = @transform_12, window_bounds = array<i64: 1, 1024>}, {transform_indices = @transform_13, window_bounds = array<i64: 8, 1024>}]} {
    %c0 = arith.constant 0 : index
    %c0_0 = arith.constant 0 : index
    %0 = vector.load %arg1[%c0, %c0_0] : memref<8x1024xbf16, #tpu.memory_space<vmem>>, vector<8x1024xbf16>
    %c0_1 = arith.constant 0 : index
    %c0_2 = arith.constant 0 : index
    %1 = vector.load %arg2[%c0_1, %c0_2] : memref<1024x512xbf16, #tpu.memory_space<vmem>>, vector<1024x512xbf16>
    %cst = arith.constant dense<0.000000e+00> : vector<8x512xf32>
    %2 = tpu.matmul %0, %1, %cst {dimension_numbers = #tpu.dot_dimension_numbers<[1], [0], [0], [1], [0, 0, 1, 1], [], []>} : vector<8x1024xbf16>, vector<1024x512xbf16>, vector<8x512xf32> -> vector<8x512xf32>
    %c0_3 = arith.constant 0 : index
    %c0_4 = arith.constant 0 : index
    %3 = vector.load %arg3[%c0_3, %c0_4] : memref<1x512xf32, #tpu.memory_space<vmem>>, vector<1x512xf32>
    %4 = vector.broadcast %3 : vector<1x512xf32> to vector<8x512xf32>
    %5 = arith.addf %2, %4 : vector<8x512xf32>
    %cst_5 = arith.constant 0.000000e+00 : f32
    %6 = vector.broadcast %cst_5 : f32 to vector<8x512xf32>
    %7 = arith.maximumf %5, %6 : vector<8x512xf32>
    %8 = arith.truncf %7 : vector<8x512xf32> to vector<8x512xbf16>
    %c0_6 = arith.constant 0 : index
    %c0_7 = arith.constant 0 : index
    %9 = vector.load %arg4[%c0_6, %c0_7] : memref<512x256xbf16, #tpu.memory_space<vmem>>, vector<512x256xbf16>
    %cst_8 = arith.constant dense<0.000000e+00> : vector<8x256xf32>
    %10 = tpu.matmul %8, %9, %cst_8 {dimension_numbers = #tpu.dot_dimension_numbers<[1], [0], [0], [1], [0, 0, 1, 1], [], []>} : vector<8x512xbf16>, vector<512x256xbf16>, vector<8x256xf32> -> vector<8x256xf32>
    %c0_9 = arith.constant 0 : index
    %c0_10 = arith.constant 0 : index
    %11 = vector.load %arg5[%c0_9, %c0_10] : memref<1x256xf32, #tpu.memory_space<vmem>>, vector<1x256xf32>
    %12 = vector.broadcast %11 : vector<1x256xf32> to vector<8x256xf32>
    %13 = arith.addf %10, %12 : vector<8x256xf32>
    %cst_11 = arith.constant 0.000000e+00 : f32
    %14 = vector.broadcast %cst_11 : f32 to vector<8x256xf32>
    %15 = arith.maximumf %13, %14 : vector<8x256xf32>
    %16 = arith.truncf %15 : vector<8x256xf32> to vector<8x256xbf16>
    %c0_12 = arith.constant 0 : index
    %c0_13 = arith.constant 0 : index
    %17 = vector.load %arg6[%c0_12, %c0_13] : memref<256x128xbf16, #tpu.memory_space<vmem>>, vector<256x128xbf16>
    %cst_14 = arith.constant dense<0.000000e+00> : vector<8x128xf32>
    %18 = tpu.matmul %16, %17, %cst_14 {dimension_numbers = #tpu.dot_dimension_numbers<[1], [0], [0], [1], [0, 0, 1, 1], [], []>} : vector<8x256xbf16>, vector<256x128xbf16>, vector<8x128xf32> -> vector<8x128xf32>
    %c0_15 = arith.constant 0 : index
    %c0_16 = arith.constant 0 : index
    %19 = vector.load %arg7[%c0_15, %c0_16] : memref<1x128xf32, #tpu.memory_space<vmem>>, vector<1x128xf32>
    %20 = vector.broadcast %19 : vector<1x128xf32> to vector<8x128xf32>
    %21 = arith.addf %18, %20 : vector<8x128xf32>
    %22 = arith.truncf %21 : vector<8x128xf32> to vector<8x128xbf16>
    %c0_17 = arith.constant 0 : index
    %c0_18 = arith.constant 0 : index
    %23 = vector.load %arg8[%c0_17, %c0_18] : memref<128x256xbf16, #tpu.memory_space<vmem>>, vector<128x256xbf16>
    %cst_19 = arith.constant dense<0.000000e+00> : vector<8x256xf32>
    %24 = tpu.matmul %22, %23, %cst_19 {dimension_numbers = #tpu.dot_dimension_numbers<[1], [0], [0], [1], [0, 0, 1, 1], [], []>} : vector<8x128xbf16>, vector<128x256xbf16>, vector<8x256xf32> -> vector<8x256xf32>
    %c0_20 = arith.constant 0 : index
    %c0_21 = arith.constant 0 : index
    %25 = vector.load %arg9[%c0_20, %c0_21] : memref<1x256xf32, #tpu.memory_space<vmem>>, vector<1x256xf32>
    %26 = vector.broadcast %25 : vector<1x256xf32> to vector<8x256xf32>
    %27 = arith.addf %24, %26 : vector<8x256xf32>
    %cst_22 = arith.constant 0.000000e+00 : f32
    %28 = vector.broadcast %cst_22 : f32 to vector<8x256xf32>
    %29 = arith.maximumf %27, %28 : vector<8x256xf32>
    %30 = arith.truncf %29 : vector<8x256xf32> to vector<8x256xbf16>
    %c0_23 = arith.constant 0 : index
    %c0_24 = arith.constant 0 : index
    %31 = vector.load %arg10[%c0_23, %c0_24] : memref<256x512xbf16, #tpu.memory_space<vmem>>, vector<256x512xbf16>
    %cst_25 = arith.constant dense<0.000000e+00> : vector<8x512xf32>
    %32 = tpu.matmul %30, %31, %cst_25 {dimension_numbers = #tpu.dot_dimension_numbers<[1], [0], [0], [1], [0, 0, 1, 1], [], []>} : vector<8x256xbf16>, vector<256x512xbf16>, vector<8x512xf32> -> vector<8x512xf32>
    %c0_26 = arith.constant 0 : index
    %c0_27 = arith.constant 0 : index
    %33 = vector.load %arg11[%c0_26, %c0_27] : memref<1x512xf32, #tpu.memory_space<vmem>>, vector<1x512xf32>
    %34 = vector.broadcast %33 : vector<1x512xf32> to vector<8x512xf32>
    %35 = arith.addf %32, %34 : vector<8x512xf32>
    %cst_28 = arith.constant 0.000000e+00 : f32
    %36 = vector.broadcast %cst_28 : f32 to vector<8x512xf32>
    %37 = arith.maximumf %35, %36 : vector<8x512xf32>
    %38 = arith.truncf %37 : vector<8x512xf32> to vector<8x512xbf16>
    %c0_29 = arith.constant 0 : index
    %c0_30 = arith.constant 0 : index
    %39 = vector.load %arg12[%c0_29, %c0_30] : memref<512x1024xbf16, #tpu.memory_space<vmem>>, vector<512x1024xbf16>
    %cst_31 = arith.constant dense<0.000000e+00> : vector<8x1024xf32>
    %40 = tpu.matmul %38, %39, %cst_31 {dimension_numbers = #tpu.dot_dimension_numbers<[1], [0], [0], [1], [0, 0, 1, 1], [], []>} : vector<8x512xbf16>, vector<512x1024xbf16>, vector<8x1024xf32> -> vector<8x1024xf32>
    %c0_32 = arith.constant 0 : index
    %c0_33 = arith.constant 0 : index
    %41 = vector.load %arg13[%c0_32, %c0_33] : memref<1x1024xf32, #tpu.memory_space<vmem>>, vector<1x1024xf32>
    %42 = vector.broadcast %41 : vector<1x1024xf32> to vector<8x1024xf32>
    %43 = arith.addf %40, %42 : vector<8x1024xf32>
    %44 = arith.negf %43 : vector<8x1024xf32>
    %45 = math.exp %44 : vector<8x1024xf32>
    %cst_34 = arith.constant 1.000000e+00 : f32
    %46 = vector.broadcast %cst_34 : f32 to vector<8x1024xf32>
    %47 = arith.addf %46, %45 : vector<8x1024xf32>
    %48 = arith.divf %46, %47 : vector<8x1024xf32>
    %c0_35 = arith.constant 0 : index
    %c0_36 = arith.constant 0 : index
    %49 = vector.load %arg14[%c0_35, %c0_36] : memref<8x1024xf32, #tpu.memory_space<vmem>>, vector<8x1024xf32>
    tpu.vector_store %arg14[%c0_35, %c0_36], %48 {strides = array<i32>} : memref<8x1024xf32, #tpu.memory_space<vmem>>, vector<8x1024xf32>,
    return
  }
  func.func @transform_0(%arg0: i32) -> (i32, i32) {
    %c0_i32 = arith.constant 0 : i32
    %c0_i32_0 = arith.constant 0 : i32
    return %arg0, %c0_i32 : i32, i32
  }
  func.func @transform_1(%arg0: i32) -> (i32, i32) {
    %c0_i32 = arith.constant 0 : i32
    %c0_i32_0 = arith.constant 0 : i32
    %c0_i32_1 = arith.constant 0 : i32
    return %c0_i32, %c0_i32_0 : i32, i32
  }
  func.func @transform_2(%arg0: i32) -> (i32, i32) {
    %c0_i32 = arith.constant 0 : i32
    %c0_i32_0 = arith.constant 0 : i32
    %c0_i32_1 = arith.constant 0 : i32
    return %c0_i32, %c0_i32_0 : i32, i32
  }
  func.func @transform_3(%arg0: i32) -> (i32, i32) {
    %c0_i32 = arith.constant 0 : i32
    %c0_i32_0 = arith.constant 0 : i32
    %c0_i32_1 = arith.constant 0 : i32
    return %c0_i32, %c0_i32_0 : i32, i32
  }
  func.func @transform_4(%arg0: i32) -> (i32, i32) {
    %c0_i32 = arith.constant 0 : i32
    %c0_i32_0 = arith.constant 0 : i32
    %c0_i32_1 = arith.constant 0 : i32
    return %c0_i32, %c0_i32_0 : i32, i32
  }
  func.func @transform_5(%arg0: i32) -> (i32, i32) {
    %c0_i32 = arith.constant 0 : i32
    %c0_i32_0 = arith.constant 0 : i32
    %c0_i32_1 = arith.constant 0 : i32
    return %c0_i32, %c0_i32_0 : i32, i32
  }
  func.func @transform_6(%arg0: i32) -> (i32, i32) {
    %c0_i32 = arith.constant 0 : i32
    %c0_i32_0 = arith.constant 0 : i32
    %c0_i32_1 = arith.constant 0 : i32
    return %c0_i32, %c0_i32_0 : i32, i32
  }
  func.func @transform_7(%arg0: i32) -> (i32, i32) {
    %c0_i32 = arith.constant 0 : i32
    %c0_i32_0 = arith.constant 0 : i32
    %c0_i32_1 = arith.constant 0 : i32
    return %c0_i32, %c0_i32_0 : i32, i32
  }
  func.func @transform_8(%arg0: i32) -> (i32, i32) {
    %c0_i32 = arith.constant 0 : i32
    %c0_i32_0 = arith.constant 0 : i32
    %c0_i32_1 = arith.constant 0 : i32
    return %c0_i32, %c0_i32_0 : i32, i32
  }
  func.func @transform_9(%arg0: i32) -> (i32, i32) {
    %c0_i32 = arith.constant 0 : i32
    %c0_i32_0 = arith.constant 0 : i32
    %c0_i32_1 = arith.constant 0 : i32
    return %c0_i32, %c0_i32_0 : i32, i32
  }
  func.func @transform_10(%arg0: i32) -> (i32, i32) {
    %c0_i32 = arith.constant 0 : i32
    %c0_i32_0 = arith.constant 0 : i32
    %c0_i32_1 = arith.constant 0 : i32
    return %c0_i32, %c0_i32_0 : i32, i32
  }
  func.func @transform_11(%arg0: i32) -> (i32, i32) {
    %c0_i32 = arith.constant 0 : i32
    %c0_i32_0 = arith.constant 0 : i32
    %c0_i32_1 = arith.constant 0 : i32
    return %c0_i32, %c0_i32_0 : i32, i32
  }
  func.func @transform_12(%arg0: i32) -> (i32, i32) {
    %c0_i32 = arith.constant 0 : i32
    %c0_i32_0 = arith.constant 0 : i32
    %c0_i32_1 = arith.constant 0 : i32
    return %c0_i32, %c0_i32_0 : i32, i32
  }
  func.func @transform_13(%arg0: i32) -> (i32, i32) {
    %c0_i32 = arith.constant 0 : i32
    %c0_i32_0 = arith.constant 0 : i32
    return %arg0, %c0_i32 : i32, i32
  }
}

</mosaic_0001>

<llo_original>
// kernel: ae_forward.1
$region0: #{ae_forward.1}
  #allocation0 [shape = 'u32[]', space=smem, size = 0x4, offset = 0x4, fixed_abs, tag = 'smem constant byte address 0x4 - core index']
  #allocation1 [shape = 'u32[144,128]{1,0:T(1,128)}', space=vmem, size = 0x12000, scoped, tag = 'internal scratch']
  %s0 = inlined_call_operand.vmem [shape: bf16[8,1024], index: 0, kind: input, shape index: {}]
  %s1 = inlined_call_operand.hbm [shape: bf16[1024,512], index: 1, kind: input, shape index: {}]
  %s2 = inlined_call_operand.vmem [shape: f32[1,512], index: 2, kind: input, shape index: {}]
  %s3 = inlined_call_operand.hbm [shape: bf16[512,256], index: 3, kind: input, shape index: {}]
  %s4 = inlined_call_operand.vmem [shape: f32[1,256], index: 4, kind: input, shape index: {}]
  %s5 = inlined_call_operand.vmem [shape: bf16[256,128], index: 5, kind: input, shape index: {}]
  %s6 = inlined_call_operand.vmem [shape: f32[1,128], index: 6, kind: input, shape index: {}]
  %s7 = inlined_call_operand.vmem [shape: bf16[128,256], index: 7, kind: input, shape index: {}]
  %s8 = inlined_call_operand.vmem [shape: f32[1,256], index: 8, kind: input, shape index: {}]
  %s9 = inlined_call_operand.hbm [shape: bf16[256,512], index: 9, kind: input, shape index: {}]
  %s10 = inlined_call_operand.vmem [shape: f32[1,512], index: 10, kind: input, shape index: {}]
  %s11 = inlined_call_operand.hbm [shape: bf16[512,1024], index: 11, kind: input, shape index: {}]
  %s12 = inlined_call_operand.vmem [shape: f32[1,1024], index: 12, kind: input, shape index: {}]
  %s13 = inlined_call_operand.vmem [shape: f32[8,1024], index: 13, kind: output, shape index: {}]
  %s14 = sld [smem:[#allocation0]]
  $region78: #{ae_forward.1} parent=0
    _
  %s16 = ssub.s32 1, %s14
  %s17 = scalar_select 0, %s16, %s14
  $region1: #{ae_forward.1} parent=0
    #allocation2 [shape = 'u8[1048576]{0}', space=vmem, size = 0x100000, scoped, tag = 'input window, operand 1, single buffered']
    #allocation3 [shape = 's32[1]{0}', space=sflag, size = 0x4, scoped, tag = 'scoped memory for ae_forward.1']
    #allocation4 [shape = 'u8[262144]{0}', space=vmem, size = 0x40000, scoped, tag = 'input window, operand 3, single buffered']
    #allocation5 [shape = 's32[1]{0}', space=sflag, size = 0x4, scoped, tag = 'scoped memory for ae_forward.1']
    #allocation6 [shape = 'u8[262144]{0}', space=vmem, size = 0x40000, scoped, tag = 'input window, operand 9, single buffered']
    #allocation7 [shape = 'u8[1048576]{0}', space=vmem, size = 0x100000, scoped, tag = 'input window, operand 11, single buffered']
    #allocation8 [shape = 's32[1]{0}', space=sflag, size = 0x4, scoped, tag = 'scoped memory for ae_forward.1']
    %18 = vsyncpa [#allocation3], 0
    %19 = vsyncpa [#allocation5], 0
    %20 = vsyncpa [#allocation8], 0
    // Predicated region
    $region2: #{ae_forward.1} parent=1 // pred_check
      _
    $region3: #{ae_forward.1} parent=1 // pred_check_branch
      %22 = sbr.rel (0) target = $region5
    $region4: #{ae_forward.1} parent=1 // pred_region
      _
    $region5: #{ae_forward.1} parent=1 // pred_fallthru
      _
    // Predicated region
    $region6: #{ae_forward.1} parent=1 // pred_check
      _
    $region7: #{ae_forward.1} parent=1 // pred_check_branch
      %24 = sbr.rel (0) target = $region9
    $region8: #{ae_forward.1} parent=1 // pred_region
      %s26 = ssub.s32 32768, 32768
      %27 = vsyncadd [#allocation3], %s26
      %s28 = sshll.u32 [#allocation2], 4
      %s29 = int_to_ptr.vmem [resolvable:$true] %s28
      %34 = dma.hbm_to_vmem [thread:$0]  %s1, 32768, %s29, [#allocation3], 256, 256, 16
    $region9: #{ae_forward.1} parent=1 // pred_fallthru
      _
    // Predicated region
    $region10: #{ae_forward.1} parent=1 // pred_check
      _
    $region11: #{ae_forward.1} parent=1 // pred_check_branch
      %36 = sbr.rel (0) target = $region13
    $region12: #{ae_forward.1} parent=1 // pred_region
      _
    $region13: #{ae_forward.1} parent=1 // pred_fallthru
      _
    // Predicated region
    $region14: #{ae_forward.1} parent=1 // pred_check
      _
    $region15: #{ae_forward.1} parent=1 // pred_check_branch
      %38 = sbr.rel (0) target = $region17
    $region16: #{ae_forward.1} parent=1 // pred_region
      %s40 = ssub.s32 8192, 8192
      %41 = vsyncadd [#allocation5], %s40
      %s42 = sshll.u32 [#allocation4], 4
      %s43 = int_to_ptr.vmem [resolvable:$true] %s42
      %48 = dma.hbm_to_vmem [thread:$0]  %s3, 8192, %s43, [#allocation5], 128, 128, 8
    $region17: #{ae_forward.1} parent=1 // pred_fallthru
      _
    // Predicated region
    $region18: #{ae_forward.1} parent=1 // pred_check
      _
    $region19: #{ae_forward.1} parent=1 // pred_check_branch
      %50 = sbr.rel (0) target = $region21
    $region20: #{ae_forward.1} parent=1 // pred_region
      _
    $region21: #{ae_forward.1} parent=1 // pred_fallthru
      _
    // Predicated region
    $region22: #{ae_forward.1} parent=1 // pred_check
      _
    $region23: #{ae_forward.1} parent=1 // pred_check_branch
      %52 = sbr.rel (0) target = $region25
    $region24: #{ae_forward.1} parent=1 // pred_region
      _
    $region25: #{ae_forward.1} parent=1 // pred_fallthru
      _
    // Predicated region
    $region26: #{ae_forward.1} parent=1 // pred_check
      _
    $region27: #{ae_forward.1} parent=1 // pred_check_branch
      %54 = sbr.rel (0) target = $region29
    $region28: #{ae_forward.1} parent=1 // pred_region
      _
    $region29: #{ae_forward.1} parent=1 // pred_fallthru
      _
    // Predicated region
    $region30: #{ae_forward.1} parent=1 // pred_check
      _
    $region31: #{ae_forward.1} parent=1 // pred_check_branch
      %56 = sbr.rel (0) target = $region33
    $region32: #{ae_forward.1} parent=1 // pred_region
      _
    $region33: #{ae_forward.1} parent=1 // pred_fallthru
      _
    // Predicated region
    $region34: #{ae_forward.1} parent=1 // pred_check
      _
    $region35: #{ae_forward.1} parent=1 // pred_check_branch
      %58 = sbr.rel (0) target = $region37
    $region36: #{ae_forward.1} parent=1 // pred_region
      _
    $region37: #{ae_forward.1} parent=1 // pred_fallthru
      _
    // Predicated region
    $region38: #{ae_forward.1} parent=1 // pred_check
      _
    $region39: #{ae_forward.1} parent=1 // pred_check_branch
      %60 = sbr.rel (0) target = $region41
    $region40: #{ae_forward.1} parent=1 // pred_region
      %s62 = ssub.s32 8192, 8192
      %63 = vsyncadd [#allocation5], %s62
      %s64 = sshll.u32 [#allocation6], 4
      %s65 = int_to_ptr.vmem [resolvable:$true] %s64
      %70 = dma.hbm_to_vmem [thread:$0]  %s9, 8192, %s65, [#allocation5], 256, 256, 16
    $region41: #{ae_forward.1} parent=1 // pred_fallthru
      _
    // Predicated region
    $region42: #{ae_forward.1} parent=1 // pred_check
      _
    $region43: #{ae_forward.1} parent=1 // pred_check_branch
      %72 = sbr.rel (0) target = $region45
    $region44: #{ae_forward.1} parent=1 // pred_region
      _
    $region45: #{ae_forward.1} parent=1 // pred_fallthru
      _
    // Predicated region
    $region46: #{ae_forward.1} parent=1 // pred_check
      _
    $region47: #{ae_forward.1} parent=1 // pred_check_branch
      %74 = sbr.rel (0) target = $region49
    $region48: #{ae_forward.1} parent=1 // pred_region
      %s76 = ssub.s32 32768, 32768
      %77 = vsyncadd [#allocation8], %s76
      %s78 = sshll.u32 [#allocation7], 4
      %s79 = int_to_ptr.vmem [resolvable:$true] %s78
      %84 = dma.hbm_to_vmem [thread:$0]  %s11, 32768, %s79, [#allocation8], 512, 512, 32
    $region49: #{ae_forward.1} parent=1 // pred_fallthru
      _
    // Predicated region
    $region50: #{ae_forward.1} parent=1 // pred_check
      _
    $region51: #{ae_forward.1} parent=1 // pred_check_branch
      %86 = sbr.rel (0) target = $region53
    $region52: #{ae_forward.1} parent=1 // pred_region
      _
    $region53: #{ae_forward.1} parent=1 // pred_fallthru
      _
    // Predicated region
    $region54: #{ae_forward.1} parent=1 // pred_check
      _
    $region55: #{ae_forward.1} parent=1 // pred_check_branch
      %88 = sbr.rel (0) target = $region57
    $region56: #{ae_forward.1} parent=1 // pred_region
      %89 = dma.done [#allocation3], 32768
    $region57: #{ae_forward.1} parent=1 // pred_fallthru
      _
    // Predicated region
    $region58: #{ae_forward.1} parent=1 // pred_check
      _
    $region59: #{ae_forward.1} parent=1 // pred_check_branch
      %91 = sbr.rel (0) target = $region61
    $region60: #{ae_forward.1} parent=1 // pred_region
      %92 = dma.done [#allocation5], 8192
    $region61: #{ae_forward.1} parent=1 // pred_fallthru
      _
    // Predicated region
    $region62: #{ae_forward.1} parent=1 // pred_check
      _
    $region63: #{ae_forward.1} parent=1 // pred_check_branch
      %94 = sbr.rel (0) target = $region65
    $region64: #{ae_forward.1} parent=1 // pred_region
      %95 = dma.done [#allocation5], 8192
    $region65: #{ae_forward.1} parent=1 // pred_fallthru
      _
    // Predicated region
    $region66: #{ae_forward.1} parent=1 // pred_check
      _
    $region67: #{ae_forward.1} parent=1 // pred_check_branch
      %97 = sbr.rel (0) target = $region69
    $region68: #{ae_forward.1} parent=1 // pred_region
      %98 = dma.done [#allocation8], 32768
    $region69: #{ae_forward.1} parent=1 // pred_fallthru
      _
    %v100 = vld [vmem:[%s0] sm:$0xff]
    %v101 = vld [vmem:[%s0 + $0x8] sm:$0xff]
    %v102 = vld [vmem:[%s0 + $0x10] sm:$0xff]
    %v103 = vld [vmem:[%s0 + $0x18] sm:$0xff]
    %v104 = vld [vmem:[#allocation2] sm:$0xff]
    %v105 = vld [vmem:[#allocation2 + $0x8] sm:$0xff]
    %v106 = vld [vmem:[#allocation2 + $0x10] sm:$0xff]
    %v107 = vld [vmem:[#allocation2 + $0x18] sm:$0xff]
    %v108 = vld [vmem:[#allocation2 + $0x20] sm:$0xff]
    %v109 = vld [vmem:[#allocation2 + $0x28] sm:$0xff]
    %v110 = vld [vmem:[#allocation2 + $0x30] sm:$0xff]
    %v111 = vld [vmem:[#allocation2 + $0x38] sm:$0xff]
    %v112 = vld [vmem:[#allocation2 + $0x40] sm:$0xff]
    %v113 = vld [vmem:[#allocation2 + $0x48] sm:$0xff]
    %v114 = vld [vmem:[#allocation2 + $0x50] sm:$0xff]
    %v115 = vld [vmem:[#allocation2 + $0x58] sm:$0xff]
    %v116 = vld [vmem:[#allocation2 + $0x60] sm:$0xff]
    %v117 = vld [vmem:[#allocation2 + $0x68] sm:$0xff]
    %v118 = vld [vmem:[#allocation2 + $0x70] sm:$0xff]
    %v119 = vld [vmem:[#allocation2 + $0x78] sm:$0xff]
    %v120 = vld [vmem:[#allocation2 + $0x80] sm:$0xff]
    %v121 = vld [vmem:[#allocation2 + $0x88] sm:$0xff]
    %v122 = vld [vmem:[#allocation2 + $0x90] sm:$0xff]
    %v123 = vld [vmem:[#allocation2 + $0x98] sm:$0xff]
    %v124 = vld [vmem:[#allocation2 + $0xa0] sm:$0xff]
    %v125 = vld [vmem:[#allocation2 + $0xa8] sm:$0xff]
    %v126 = vld [vmem:[#allocation2 + $0xb0] sm:$0xff]
    %v127 = vld [vmem:[#allocation2 + $0xb8] sm:$0xff]
    %v128 = vld [vmem:[#allocation2 + $0xc0] sm:$0xff]
    %v129 = vld [vmem:[#allocation2 + $0xc8] sm:$0xff]
    %v130 = vld [vmem:[#allocation2 + $0xd0] sm:$0xff]
    %v131 = vld [vmem:[#allocation2 + $0xd8] sm:$0xff]
    %v132 = vld [vmem:[#allocation2 + $0xe0] sm:$0xff]
    %v133 = vld [vmem:[#allocation2 + $0xe8] sm:$0xff]
    %v134 = vld [vmem:[#allocation2 + $0xf0] sm:$0xff]
    %v135 = vld [vmem:[#allocation2 + $0xf8] sm:$0xff]
    %v136 = vld [vmem:[#allocation2 + $0x100] sm:$0xff]
    %v137 = vld [vmem:[#allocation2 + $0x108] sm:$0xff]
    %v138 = vld [vmem:[#allocation2 + $0x110] sm:$0xff]
    %v139 = vld [vmem:[#allocation2 + $0x118] sm:$0xff]
    %v140 = vld [vmem:[#allocation2 + $0x120] sm:$0xff]
    %v141 = vld [vmem:[#allocation2 + $0x128] sm:$0xff]
    %v142 = vld [vmem:[#allocation2 + $0x130] sm:$0xff]
    %v143 = vld [vmem:[#allocation2 + $0x138] sm:$0xff]
    %v144 = vld [vmem:[#allocation2 + $0x140] sm:$0xff]
    %v145 = vld [vmem:[#allocation2 + $0x148] sm:$0xff]
    %v146 = vld [vmem:[#allocation2 + $0x150] sm:$0xff]
    %v147 = vld [vmem:[#allocation2 + $0x158] sm:$0xff]
    %v148 = vld [vmem:[#allocation2 + $0x160] sm:$0xff]
    %v149 = vld [vmem:[#allocation2 + $0x168] sm:$0xff]
    %v150 = vld [vmem:[#allocation2 + $0x170] sm:$0xff]
    %v151 = vld [vmem:[#allocation2 + $0x178] sm:$0xff]
    %v152 = vld [vmem:[#allocation2 + $0x180] sm:$0xff]
    %v153 = vld [vmem:[#allocation2 + $0x188] sm:$0xff]
    %v154 = vld [vmem:[#allocation2 + $0x190] sm:$0xff]
    %v155 = vld [vmem:[#allocation2 + $0x198] sm:$0xff]
    %v156 = vld [vmem:[#allocation2 + $0x1a0] sm:$0xff]
    %v157 = vld [vmem:[#allocation2 + $0x1a8] sm:$0xff]
    %v158 = vld [vmem:[#allocation2 + $0x1b0] sm:$0xff]
    %v159 = vld [vmem:[#allocation2 + $0x1b8] sm:$0xff]
    %v160 = vld [vmem:[#allocation2 + $0x1c0] sm:$0xff]
    %v161 = vld [vmem:[#allocation2 + $0x1c8] sm:$0xff]
    %v162 = vld [vmem:[#allocation2 + $0x1d0] sm:$0xff]
    %v163 = vld [vmem:[#allocation2 + $0x1d8] sm:$0xff]
    %v164 = vld [vmem:[#allocation2 + $0x1e0] sm:$0xff]
    %v165 = vld [vmem:[#allocation2 + $0x1e8] sm:$0xff]
    %v166 = vld [vmem:[#allocation2 + $0x1f0] sm:$0xff]
    %v167 = vld [vmem:[#allocation2 + $0x1f8] sm:$0xff]
    %v168 = vld [vmem:[#allocation2 + $0x200] sm:$0xff]
    %v169 = vld [vmem:[#allocation2 + $0x208] sm:$0xff]
    %v170 = vld [vmem:[#allocation2 + $0x210] sm:$0xff]
    %v171 = vld [vmem:[#allocation2 + $0x218] sm:$0xff]
    %v172 = vld [vmem:[#allocation2 + $0x220] sm:$0xff]
    %v173 = vld [vmem:[#allocation2 + $0x228] sm:$0xff]
    %v174 = vld [vmem:[#allocation2 + $0x230] sm:$0xff]
    %v175 = vld [vmem:[#allocation2 + $0x238] sm:$0xff]
    %v176 = vld [vmem:[#allocation2 + $0x240] sm:$0xff]
    %v177 = vld [vmem:[#allocation2 + $0x248] sm:$0xff]
    %v178 = vld [vmem:[#allocation2 + $0x250] sm:$0xff]
    %v179 = vld [vmem:[#allocation2 + $0x258] sm:$0xff]
    %v180 = vld [vmem:[#allocation2 + $0x260] sm:$0xff]
    %v181 = vld [vmem:[#allocation2 + $0x268] sm:$0xff]
    %v182 = vld [vmem:[#allocation2 + $0x270] sm:$0xff]
    %v183 = vld [vmem:[#allocation2 + $0x278] sm:$0xff]
    %v184 = vld [vmem:[#allocation2 + $0x280] sm:$0xff]
    %v185 = vld [vmem:[#allocation2 + $0x288] sm:$0xff]
    %v186 = vld [vmem:[#allocation2 + $0x290] sm:$0xff]
    %v187 = vld [vmem:[#allocation2 + $0x298] sm:$0xff]
    %v188 = vld [vmem:[#allocation2 + $0x2a0] sm:$0xff]
    %v189 = vld [vmem:[#allocation2 + $0x2a8] sm:$0xff]
    %v190 = vld [vmem:[#allocation2 + $0x2b0] sm:$0xff]
    %v191 = vld [vmem:[#allocation2 + $0x2b8] sm:$0xff]
    %v192 = vld [vmem:[#allocation2 + $0x2c0] sm:$0xff]
    %v193 = vld [vmem:[#allocation2 + $0x2c8] sm:$0xff]
    %v194 = vld [vmem:[#allocation2 + $0x2d0] sm:$0xff]
    %v195 = vld [vmem:[#allocation2 + $0x2d8] sm:$0xff]
    %v196 = vld [vmem:[#allocation2 + $0x2e0] sm:$0xff]
    %v197 = vld [vmem:[#allocation2 + $0x2e8] sm:$0xff]
    %v198 = vld [vmem:[#allocation2 + $0x2f0] sm:$0xff]
    %v199 = vld [vmem:[#allocation2 + $0x2f8] sm:$0xff]
    %v200 = vld [vmem:[#allocation2 + $0x300] sm:$0xff]
    %v201 = vld [vmem:[#allocation2 + $0x308] sm:$0xff]
    %v202 = vld [vmem:[#allocation2 + $0x310] sm:$0xff]
    %v203 = vld [vmem:[#allocation2 + $0x318] sm:$0xff]
    %v204 = vld [vmem:[#allocation2 + $0x320] sm:$0xff]
    %v205 = vld [vmem:[#allocation2 + $0x328] sm:$0xff]
    %v206 = vld [vmem:[#allocation2 + $0x330] sm:$0xff]
    %v207 = vld [vmem:[#allocation2 + $0x338] sm:$0xff]
    %v208 = vld [vmem:[#allocation2 + $0x340] sm:$0xff]
    %v209 = vld [vmem:[#allocation2 + $0x348] sm:$0xff]
    %v210 = vld [vmem:[#allocation2 + $0x350] sm:$0xff]
    %v211 = vld [vmem:[#allocation2 + $0x358] sm:$0xff]
    %v212 = vld [vmem:[#allocation2 + $0x360] sm:$0xff]
    %v213 = vld [vmem:[#allocation2 + $0x368] sm:$0xff]
    %v214 = vld [vmem:[#allocation2 + $0x370] sm:$0xff]
    %v215 = vld [vmem:[#allocation2 + $0x378] sm:$0xff]
    %v216 = vld [vmem:[#allocation2 + $0x380] sm:$0xff]
    %v217 = vld [vmem:[#allocation2 + $0x388] sm:$0xff]
    %v218 = vld [vmem:[#allocation2 + $0x390] sm:$0xff]
    %v219 = vld [vmem:[#allocation2 + $0x398] sm:$0xff]
    %v220 = vld [vmem:[#allocation2 + $0x3a0] sm:$0xff]
    %v221 = vld [vmem:[#allocation2 + $0x3a8] sm:$0xff]
    %v222 = vld [vmem:[#allocation2 + $0x3b0] sm:$0xff]
    %v223 = vld [vmem:[#allocation2 + $0x3b8] sm:$0xff]
    %v224 = vld [vmem:[#allocation2 + $0x3c0] sm:$0xff]
    %v225 = vld [vmem:[#allocation2 + $0x3c8] sm:$0xff]
    %v226 = vld [vmem:[#allocation2 + $0x3d0] sm:$0xff]
    %v227 = vld [vmem:[#allocation2 + $0x3d8] sm:$0xff]
    %v228 = vld [vmem:[#allocation2 + $0x3e0] sm:$0xff]
    %v229 = vld [vmem:[#allocation2 + $0x3e8] sm:$0xff]
    %v230 = vld [vmem:[#allocation2 + $0x3f0] sm:$0xff]
    %v231 = vld [vmem:[#allocation2 + $0x3f8] sm:$0xff]
    %v232 = vld [vmem:[#allocation2 + $0x400] sm:$0xff]
    %v233 = vld [vmem:[#allocation2 + $0x408] sm:$0xff]
    %v234 = vld [vmem:[#allocation2 + $0x410] sm:$0xff]
    %v235 = vld [vmem:[#allocation2 + $0x418] sm:$0xff]
    %v236 = vld [vmem:[#allocation2 + $0x420] sm:$0xff]
    %v237 = vld [vmem:[#allocation2 + $0x428] sm:$0xff]
    %v238 = vld [vmem:[#allocation2 + $0x430] sm:$0xff]
    %v239 = vld [vmem:[#allocation2 + $0x438] sm:$0xff]
    %v240 = vld [vmem:[#allocation2 + $0x440] sm:$0xff]
    %v241 = vld [vmem:[#allocation2 + $0x448] sm:$0xff]
    %v242 = vld [vmem:[#allocation2 + $0x450] sm:$0xff]
    %v243 = vld [vmem:[#allocation2 + $0x458] sm:$0xff]
    %v244 = vld [vmem:[#allocation2 + $0x460] sm:$0xff]
    %v245 = vld [vmem:[#allocation2 + $0x468] sm:$0xff]
    %v246 = vld [vmem:[#allocation2 + $0x470] sm:$0xff]
    %v247 = vld [vmem:[#allocation2 + $0x478] sm:$0xff]
    %v248 = vld [vmem:[#allocation2 + $0x480] sm:$0xff]
    %v249 = vld [vmem:[#allocation2 + $0x488] sm:$0xff]
    %v250 = vld [vmem:[#allocation2 + $0x490] sm:$0xff]
    %v251 = vld [vmem:[#allocation2 + $0x498] sm:$0xff]
    %v252 = vld [vmem:[#allocation2 + $0x4a0] sm:$0xff]
    %v253 = vld [vmem:[#allocation2 + $0x4a8] sm:$0xff]
    %v254 = vld [vmem:[#allocation2 + $0x4b0] sm:$0xff]
    %v255 = vld [vmem:[#allocation2 + $0x4b8] sm:$0xff]
    %v256 = vld [vmem:[#allocation2 + $0x4c0] sm:$0xff]
    %v257 = vld [vmem:[#allocation2 + $0x4c8] sm:$0xff]
    %v258 = vld [vmem:[#allocation2 + $0x4d0] sm:$0xff]
    %v259 = vld [vmem:[#allocation2 + $0x4d8] sm:$0xff]
    %v260 = vld [vmem:[#allocation2 + $0x4e0] sm:$0xff]
    %v261 = vld [vmem:[#allocation2 + $0x4e8] sm:$0xff]
    %v262 = vld [vmem:[#allocation2 + $0x4f0] sm:$0xff]
    %v263 = vld [vmem:[#allocation2 + $0x4f8] sm:$0xff]
    %v264 = vld [vmem:[#allocation2 + $0x500] sm:$0xff]
    %v265 = vld [vmem:[#allocation2 + $0x508] sm:$0xff]
    %v266 = vld [vmem:[#allocation2 + $0x510] sm:$0xff]
    %v267 = vld [vmem:[#allocation2 + $0x518] sm:$0xff]
    %v268 = vld [vmem:[#allocation2 + $0x520] sm:$0xff]
    %v269 = vld [vmem:[#allocation2 + $0x528] sm:$0xff]
    %v270 = vld [vmem:[#allocation2 + $0x530] sm:$0xff]
    %v271 = vld [vmem:[#allocation2 + $0x538] sm:$0xff]
    %v272 = vld [vmem:[#allocation2 + $0x540] sm:$0xff]
    %v273 = vld [vmem:[#allocation2 + $0x548] sm:$0xff]
    %v274 = vld [vmem:[#allocation2 + $0x550] sm:$0xff]
    %v275 = vld [vmem:[#allocation2 + $0x558] sm:$0xff]
    %v276 = vld [vmem:[#allocation2 + $0x560] sm:$0xff]
    %v277 = vld [vmem:[#allocation2 + $0x568] sm:$0xff]
    %v278 = vld [vmem:[#allocation2 + $0x570] sm:$0xff]
    %v279 = vld [vmem:[#allocation2 + $0x578] sm:$0xff]
    %v280 = vld [vmem:[#allocation2 + $0x580] sm:$0xff]
    %v281 = vld [vmem:[#allocation2 + $0x588] sm:$0xff]
    %v282 = vld [vmem:[#allocation2 + $0x590] sm:$0xff]
    %v283 = vld [vmem:[#allocation2 + $0x598] sm:$0xff]
    %v284 = vld [vmem:[#allocation2 + $0x5a0] sm:$0xff]
    %v285 = vld [vmem:[#allocation2 + $0x5a8] sm:$0xff]
    %v286 = vld [vmem:[#allocation2 + $0x5b0] sm:$0xff]
    %v287 = vld [vmem:[#allocation2 + $0x5b8] sm:$0xff]
    %v288 = vld [vmem:[#allocation2 + $0x5c0] sm:$0xff]
    %v289 = vld [vmem:[#allocation2 + $0x5c8] sm:$0xff]
    %v290 = vld [vmem:[#allocation2 + $0x5d0] sm:$0xff]
    %v291 = vld [vmem:[#allocation2 + $0x5d8] sm:$0xff]
    %v292 = vld [vmem:[#allocation2 + $0x5e0] sm:$0xff]
    %v293 = vld [vmem:[#allocation2 + $0x5e8] sm:$0xff]
    %v294 = vld [vmem:[#allocation2 + $0x5f0] sm:$0xff]
    %v295 = vld [vmem:[#allocation2 + $0x5f8] sm:$0xff]
    %v296 = vld [vmem:[#allocation2 + $0x600] sm:$0xff]
    %v297 = vld [vmem:[#allocation2 + $0x608] sm:$0xff]
    %v298 = vld [vmem:[#allocation2 + $0x610] sm:$0xff]
    %v299 = vld [vmem:[#allocation2 + $0x618] sm:$0xff]
    %v300 = vld [vmem:[#allocation2 + $0x620] sm:$0xff]
    %v301 = vld [vmem:[#allocation2 + $0x628] sm:$0xff]
    %v302 = vld [vmem:[#allocation2 + $0x630] sm:$0xff]
    %v303 = vld [vmem:[#allocation2 + $0x638] sm:$0xff]
    %v304 = vld [vmem:[#allocation2 + $0x640] sm:$0xff]
    %v305 = vld [vmem:[#allocation2 + $0x648] sm:$0xff]
    %v306 = vld [vmem:[#allocation2 + $0x650] sm:$0xff]
    %v307 = vld [vmem:[#allocation2 + $0x658] sm:$0xff]
    %v308 = vld [vmem:[#allocation2 + $0x660] sm:$0xff]
    %v309 = vld [vmem:[#allocation2 + $0x668] sm:$0xff]
    %v310 = vld [vmem:[#allocation2 + $0x670] sm:$0xff]
    %v311 = vld [vmem:[#allocation2 + $0x678] sm:$0xff]
    %v312 = vld [vmem:[#allocation2 + $0x680] sm:$0xff]
    %v313 = vld [vmem:[#allocation2 + $0x688] sm:$0xff]
    %v314 = vld [vmem:[#allocation2 + $0x690] sm:$0xff]
    %v315 = vld [vmem:[#allocation2 + $0x698] sm:$0xff]
    %v316 = vld [vmem:[#allocation2 + $0x6a0] sm:$0xff]
    %v317 = vld [vmem:[#allocation2 + $0x6a8] sm:$0xff]
    %v318 = vld [vmem:[#allocation2 + $0x6b0] sm:$0xff]
    %v319 = vld [vmem:[#allocation2 + $0x6b8] sm:$0xff]
    %v320 = vld [vmem:[#allocation2 + $0x6c0] sm:$0xff]
    %v321 = vld [vmem:[#allocation2 + $0x6c8] sm:$0xff]
    %v322 = vld [vmem:[#allocation2 + $0x6d0] sm:$0xff]
    %v323 = vld [vmem:[#allocation2 + $0x6d8] sm:$0xff]
    %v324 = vld [vmem:[#allocation2 + $0x6e0] sm:$0xff]
    %v325 = vld [vmem:[#allocation2 + $0x6e8] sm:$0xff]
    %v326 = vld [vmem:[#allocation2 + $0x6f0] sm:$0xff]
    %v327 = vld [vmem:[#allocation2 + $0x6f8] sm:$0xff]
    %v328 = vld [vmem:[#allocation2 + $0x700] sm:$0xff]
    %v329 = vld [vmem:[#allocation2 + $0x708] sm:$0xff]
    %v330 = vld [vmem:[#allocation2 + $0x710] sm:$0xff]
    %v331 = vld [vmem:[#allocation2 + $0x718] sm:$0xff]
    %v332 = vld [vmem:[#allocation2 + $0x720] sm:$0xff]
    %v333 = vld [vmem:[#allocation2 + $0x728] sm:$0xff]
    %v334 = vld [vmem:[#allocation2 + $0x730] sm:$0xff]
    %v335 = vld [vmem:[#allocation2 + $0x738] sm:$0xff]
    %v336 = vld [vmem:[#allocation2 + $0x740] sm:$0xff]
    %v337 = vld [vmem:[#allocation2 + $0x748] sm:$0xff]
    %v338 = vld [vmem:[#allocation2 + $0x750] sm:$0xff]
    %v339 = vld [vmem:[#allocation2 + $0x758] sm:$0xff]
    %v340 = vld [vmem:[#allocation2 + $0x760] sm:$0xff]
    %v341 = vld [vmem:[#allocation2 + $0x768] sm:$0xff]
    %v342 = vld [vmem:[#allocation2 + $0x770] sm:$0xff]
    %v343 = vld [vmem:[#allocation2 + $0x778] sm:$0xff]
    %v344 = vld [vmem:[#allocation2 + $0x780] sm:$0xff]
    %v345 = vld [vmem:[#allocation2 + $0x788] sm:$0xff]
    %v346 = vld [vmem:[#allocation2 + $0x790] sm:$0xff]
    %v347 = vld [vmem:[#allocation2 + $0x798] sm:$0xff]
    %v348 = vld [vmem:[#allocation2 + $0x7a0] sm:$0xff]
    %v349 = vld [vmem:[#allocation2 + $0x7a8] sm:$0xff]
    %v350 = vld [vmem:[#allocation2 + $0x7b0] sm:$0xff]
    %v351 = vld [vmem:[#allocation2 + $0x7b8] sm:$0xff]
    %v352 = vld [vmem:[#allocation2 + $0x7c0] sm:$0xff]
    %v353 = vld [vmem:[#allocation2 + $0x7c8] sm:$0xff]
    %v354 = vld [vmem:[#allocation2 + $0x7d0] sm:$0xff]
    %v355 = vld [vmem:[#allocation2 + $0x7d8] sm:$0xff]
    %v356 = vld [vmem:[#allocation2 + $0x7e0] sm:$0xff]
    %v357 = vld [vmem:[#allocation2 + $0x7e8] sm:$0xff]
    %v358 = vld [vmem:[#allocation2 + $0x7f0] sm:$0xff]
    %v359 = vld [vmem:[#allocation2 + $0x7f8] sm:$0xff]
    %v360 = vld [vmem:[%s2] sm:$0xf]
    %v362 = vlaneseq
    %v363 = vshrl.u32 %v362, 7
    %v364 = vsub.s32 0, %v363
    %v365 = vrot.slane %v360, %v364
    %v366 = vlaneseq
    %v367 = vshrl.u32 %v366, 7
    %v368 = vsub.s32 1, %v367
    %v369 = vrot.slane %v360, %v368
    %v370 = vlaneseq
    %v371 = vshrl.u32 %v370, 7
    %v372 = vsub.s32 2, %v371
    %v373 = vrot.slane %v360, %v372
    %v374 = vlaneseq
    %v375 = vshrl.u32 %v374, 7
    %v376 = vsub.s32 3, %v375
    %v377 = vrot.slane %v360, %v376
    %v386 = vunpack.c.l.b16 %v100
    %v387 = vunpack.c.h.b16 %v100
    %v388 = vunpack.c.l.b16 %v101
    %v389 = vunpack.c.h.b16 %v101
    %v390 = vunpack.c.l.b16 %v102
    %v391 = vunpack.c.h.b16 %v102
    %v392 = vunpack.c.l.b16 %v103
    %v393 = vunpack.c.h.b16 %v103
    %v394 = vpack.c.b16 %v386, %v386
    %v395 = vpack.c.b16 %v387, %v387
    %v396 = vpack.c.b16 %v388, %v388
    %v397 = vpack.c.b16 %v389, %v389
    %v398 = vpack.c.b16 %v390, %v390
    %v399 = vpack.c.b16 %v391, %v391
    %v400 = vpack.c.b16 %v392, %v392
    %v401 = vpack.c.b16 %v393, %v393
    %v666 = vunpack.c.l.b16 %v104
    %v667 = vunpack.c.h.b16 %v104
    %v668 = vunpack.c.l.b16 %v105
    %v669 = vunpack.c.h.b16 %v105
    %v670 = vunpack.c.l.b16 %v106
    %v671 = vunpack.c.h.b16 %v106
    %v672 = vunpack.c.l.b16 %v107
    %v673 = vunpack.c.h.b16 %v107
    %v674 = vunpack.c.l.b16 %v108
    %v675 = vunpack.c.h.b16 %v108
    %v676 = vunpack.c.l.b16 %v109
    %v677 = vunpack.c.h.b16 %v109
    %v678 = vunpack.c.l.b16 %v110
    %v679 = vunpack.c.h.b16 %v110
    %v680 = vunpack.c.l.b16 %v111
    %v681 = vunpack.c.h.b16 %v111
    %v682 = vunpack.c.l.b16 %v112
    %v683 = vunpack.c.h.b16 %v112
    %v684 = vunpack.c.l.b16 %v113
    %v685 = vunpack.c.h.b16 %v113
    %v686 = vunpack.c.l.b16 %v114
    %v687 = vunpack.c.h.b16 %v114
    %v688 = vunpack.c.l.b16 %v115
    %v689 = vunpack.c.h.b16 %v115
    %v690 = vunpack.c.l.b16 %v116
    %v691 = vunpack.c.h.b16 %v116
    %v692 = vunpack.c.l.b16 %v117
    %v693 = vunpack.c.h.b16 %v117
    %v694 = vunpack.c.l.b16 %v118
    %v695 = vunpack.c.h.b16 %v118
    %v696 = vunpack.c.l.b16 %v119
    %v697 = vunpack.c.h.b16 %v119
    %v698 = vunpack.c.l.b16 %v120
    %v699 = vunpack.c.h.b16 %v120
    %v700 = vunpack.c.l.b16 %v121
    %v701 = vunpack.c.h.b16 %v121
    %v702 = vunpack.c.l.b16 %v122
    %v703 = vunpack.c.h.b16 %v122
    %v704 = vunpack.c.l.b16 %v123
    %v705 = vunpack.c.h.b16 %v123
    %v706 = vunpack.c.l.b16 %v124
    %v707 = vunpack.c.h.b16 %v124
    %v708 = vunpack.c.l.b16 %v125
    %v709 = vunpack.c.h.b16 %v125
    %v710 = vunpack.c.l.b16 %v126
    %v711 = vunpack.c.h.b16 %v126
    %v712 = vunpack.c.l.b16 %v127
    %v713 = vunpack.c.h.b16 %v127
    %v714 = vunpack.c.l.b16 %v128
    %v715 = vunpack.c.h.b16 %v128
    %v716 = vunpack.c.l.b16 %v129
    %v717 = vunpack.c.h.b16 %v129
    %v718 = vunpack.c.l.b16 %v130
    %v719 = vunpack.c.h.b16 %v130
    %v720 = vunpack.c.l.b16 %v131
    %v721 = vunpack.c.h.b16 %v131
    %v722 = vunpack.c.l.b16 %v132
    %v723 = vunpack.c.h.b16 %v132
    %v724 = vunpack.c.l.b16 %v133
    %v725 = vunpack.c.h.b16 %v133
    %v726 = vunpack.c.l.b16 %v134
    %v727 = vunpack.c.h.b16 %v134
    %v728 = vunpack.c.l.b16 %v135
    %v729 = vunpack.c.h.b16 %v135
    %v730 = vunpack.c.l.b16 %v136
    %v731 = vunpack.c.h.b16 %v136
    %v732 = vunpack.c.l.b16 %v137
    %v733 = vunpack.c.h.b16 %v137
    %v734 = vunpack.c.l.b16 %v138
    %v735 = vunpack.c.h.b16 %v138
    %v736 = vunpack.c.l.b16 %v139
    %v737 = vunpack.c.h.b16 %v139
    %v738 = vunpack.c.l.b16 %v140
    %v739 = vunpack.c.h.b16 %v140
    %v740 = vunpack.c.l.b16 %v141
    %v741 = vunpack.c.h.b16 %v141
    %v742 = vunpack.c.l.b16 %v142
    %v743 = vunpack.c.h.b16 %v142
    %v744 = vunpack.c.l.b16 %v143
    %v745 = vunpack.c.h.b16 %v143
    %v746 = vunpack.c.l.b16 %v144
    %v747 = vunpack.c.h.b16 %v144
    %v748 = vunpack.c.l.b16 %v145
    %v749 = vunpack.c.h.b16 %v145
    %v750 = vunpack.c.l.b16 %v146
    %v751 = vunpack.c.h.b16 %v146
    %v752 = vunpack.c.l.b16 %v147
    %v753 = vunpack.c.h.b16 %v147
    %v754 = vunpack.c.l.b16 %v148
    %v755 = vunpack.c.h.b16 %v148
    %v756 = vunpack.c.l.b16 %v149
    %v757 = vunpack.c.h.b16 %v149
    %v758 = vunpack.c.l.b16 %v150
    %v759 = vunpack.c.h.b16 %v150
    %v760 = vunpack.c.l.b16 %v151
    %v761 = vunpack.c.h.b16 %v151
    %v762 = vunpack.c.l.b16 %v152
    %v763 = vunpack.c.h.b16 %v152
    %v764 = vunpack.c.l.b16 %v153
    %v765 = vunpack.c.h.b16 %v153
    %v766 = vunpack.c.l.b16 %v154
    %v767 = vunpack.c.h.b16 %v154
    %v768 = vunpack.c.l.b16 %v155
    %v769 = vunpack.c.h.b16 %v155
    %v770 = vunpack.c.l.b16 %v156
    %v771 = vunpack.c.h.b16 %v156
    %v772 = vunpack.c.l.b16 %v157
    %v773 = vunpack.c.h.b16 %v157
    %v774 = vunpack.c.l.b16 %v158
    %v775 = vunpack.c.h.b16 %v158
    %v776 = vunpack.c.l.b16 %v159
    %v777 = vunpack.c.h.b16 %v159
    %v778 = vunpack.c.l.b16 %v160
    %v779 = vunpack.c.h.b16 %v160
    %v780 = vunpack.c.l.b16 %v161
    %v781 = vunpack.c.h.b16 %v161
    %v782 = vunpack.c.l.b16 %v162
    %v783 = vunpack.c.h.b16 %v162
    %v784 = vunpack.c.l.b16 %v163
    %v785 = vunpack.c.h.b16 %v163
    %v786 = vunpack.c.l.b16 %v164
    %v787 = vunpack.c.h.b16 %v164
    %v788 = vunpack.c.l.b16 %v165
    %v789 = vunpack.c.h.b16 %v165
    %v790 = vunpack.c.l.b16 %v166
    %v791 = vunpack.c.h.b16 %v166
    %v792 = vunpack.c.l.b16 %v167
    %v793 = vunpack.c.h.b16 %v167
    %v794 = vunpack.c.l.b16 %v168
    %v795 = vunpack.c.h.b16 %v168
    %v796 = vunpack.c.l.b16 %v169
    %v797 = vunpack.c.h.b16 %v169
    %v798 = vunpack.c.l.b16 %v170
    %v799 = vunpack.c.h.b16 %v170
    %v800 = vunpack.c.l.b16 %v171
    %v801 = vunpack.c.h.b16 %v171
    %v802 = vunpack.c.l.b16 %v172
    %v803 = vunpack.c.h.b16 %v172
    %v804 = vunpack.c.l.b16 %v173
    %v805 = vunpack.c.h.b16 %v173
    %v806 = vunpack.c.l.b16 %v174
    %v807 = vunpack.c.h.b16 %v174
    %v808 = vunpack.c.l.b16 %v175
    %v809 = vunpack.c.h.b16 %v175
    %v810 = vunpack.c.l.b16 %v176
    %v811 = vunpack.c.h.b16 %v176
    %v812 = vunpack.c.l.b16 %v177
    %v813 = vunpack.c.h.b16 %v177
    %v814 = vunpack.c.l.b16 %v178
    %v815 = vunpack.c.h.b16 %v178
    %v816 = vunpack.c.l.b16 %v179
    %v817 = vunpack.c.h.b16 %v179
    %v818 = vunpack.c.l.b16 %v180
    %v819 = vunpack.c.h.b16 %v180
    %v820 = vunpack.c.l.b16 %v181
    %v821 = vunpack.c.h.b16 %v181
    %v822 = vunpack.c.l.b16 %v182
    %v823 = vunpack.c.h.b16 %v182
    %v824 = vunpack.c.l.b16 %v183
    %v825 = vunpack.c.h.b16 %v183
    %v826 = vunpack.c.l.b16 %v184
    %v827 = vunpack.c.h.b16 %v184
    %v828 = vunpack.c.l.b16 %v185
    %v829 = vunpack.c.h.b16 %v185
    %v830 = vunpack.c.l.b16 %v186
    %v831 = vunpack.c.h.b16 %v186
    %v832 = vunpack.c.l.b16 %v187
    %v833 = vunpack.c.h.b16 %v187
    %v834 = vunpack.c.l.b16 %v188
    %v835 = vunpack.c.h.b16 %v188
    %v836 = vunpack.c.l.b16 %v189
    %v837 = vunpack.c.h.b16 %v189
    %v838 = vunpack.c.l.b16 %v190
    %v839 = vunpack.c.h.b16 %v190
    %v840 = vunpack.c.l.b16 %v191
    %v841 = vunpack.c.h.b16 %v191
    %v842 = vunpack.c.l.b16 %v192
    %v843 = vunpack.c.h.b16 %v192
    %v844 = vunpack.c.l.b16 %v193
    %v845 = vunpack.c.h.b16 %v193
    %v846 = vunpack.c.l.b16 %v194
    %v847 = vunpack.c.h.b16 %v194
    %v848 = vunpack.c.l.b16 %v195
    %v849 = vunpack.c.h.b16 %v195
    %v850 = vunpack.c.l.b16 %v196
    %v851 = vunpack.c.h.b16 %v196
    %v852 = vunpack.c.l.b16 %v197
    %v853 = vunpack.c.h.b16 %v197
    %v854 = vunpack.c.l.b16 %v198
    %v855 = vunpack.c.h.b16 %v198
    %v856 = vunpack.c.l.b16 %v199
    %v857 = vunpack.c.h.b16 %v199
    %v858 = vunpack.c.l.b16 %v200
    %v859 = vunpack.c.h.b16 %v200
    %v860 = vunpack.c.l.b16 %v201
    %v861 = vunpack.c.h.b16 %v201
    %v862 = vunpack.c.l.b16 %v202
    %v863 = vunpack.c.h.b16 %v202
    %v864 = vunpack.c.l.b16 %v203
    %v865 = vunpack.c.h.b16 %v203
    %v866 = vunpack.c.l.b16 %v204
    %v867 = vunpack.c.h.b16 %v204
    %v868 = vunpack.c.l.b16 %v205
    %v869 = vunpack.c.h.b16 %v205
    %v870 = vunpack.c.l.b16 %v206
    %v871 = vunpack.c.h.b16 %v206
    %v872 = vunpack.c.l.b16 %v207
    %v873 = vunpack.c.h.b16 %v207
    %v874 = vunpack.c.l.b16 %v208
    %v875 = vunpack.c.h.b16 %v208
    %v876 = vunpack.c.l.b16 %v209
    %v877 = vunpack.c.h.b16 %v209
    %v878 = vunpack.c.l.b16 %v210
    %v879 = vunpack.c.h.b16 %v210
    %v880 = vunpack.c.l.b16 %v211
    %v881 = vunpack.c.h.b16 %v211
    %v882 = vunpack.c.l.b16 %v212
    %v883 = vunpack.c.h.b16 %v212
    %v884 = vunpack.c.l.b16 %v213
    %v885 = vunpack.c.h.b16 %v213
    %v886 = vunpack.c.l.b16 %v214
    %v887 = vunpack.c.h.b16 %v214
    %v888 = vunpack.c.l.b16 %v215
    %v889 = vunpack.c.h.b16 %v215
    %v890 = vunpack.c.l.b16 %v216
    %v891 = vunpack.c.h.b16 %v216
    %v892 = vunpack.c.l.b16 %v217
    %v893 = vunpack.c.h.b16 %v217
    %v894 = vunpack.c.l.b16 %v218
    %v895 = vunpack.c.h.b16 %v218
    %v896 = vunpack.c.l.b16 %v219
    %v897 = vunpack.c.h.b16 %v219
    %v898 = vunpack.c.l.b16 %v220
    %v899 = vunpack.c.h.b16 %v220
    %v900 = vunpack.c.l.b16 %v221
    %v901 = vunpack.c.h.b16 %v221
    %v902 = vunpack.c.l.b16 %v222
    %v903 = vunpack.c.h.b16 %v222
    %v904 = vunpack.c.l.b16 %v223
    %v905 = vunpack.c.h.b16 %v223
    %v906 = vunpack.c.l.b16 %v224
    %v907 = vunpack.c.h.b16 %v224
    %v908 = vunpack.c.l.b16 %v225
    %v909 = vunpack.c.h.b16 %v225
    %v910 = vunpack.c.l.b16 %v226
    %v911 = vunpack.c.h.b16 %v226
    %v912 = vunpack.c.l.b16 %v227
    %v913 = vunpack.c.h.b16 %v227
    %v914 = vunpack.c.l.b16 %v228
    %v915 = vunpack.c.h.b16 %v228
    %v916 = vunpack.c.l.b16 %v229
    %v917 = vunpack.c.h.b16 %v229
    %v918 = vunpack.c.l.b16 %v230
    %v919 = vunpack.c.h.b16 %v230
    %v920 = vunpack.c.l.b16 %v231
    %v921 = vunpack.c.h.b16 %v231
    %v922 = vunpack.c.l.b16 %v232
    %v923 = vunpack.c.h.b16 %v232
    %v924 = vunpack.c.l.b16 %v233
    %v925 = vunpack.c.h.b16 %v233
    %v926 = vunpack.c.l.b16 %v234
    %v927 = vunpack.c.h.b16 %v234
    %v928 = vunpack.c.l.b16 %v235
    %v929 = vunpack.c.h.b16 %v235
    %v930 = vunpack.c.l.b16 %v236
    %v931 = vunpack.c.h.b16 %v236
    %v932 = vunpack.c.l.b16 %v237
    %v933 = vunpack.c.h.b16 %v237
    %v934 = vunpack.c.l.b16 %v238
    %v935 = vunpack.c.h.b16 %v238
    %v936 = vunpack.c.l.b16 %v239
    %v937 = vunpack.c.h.b16 %v239
    %v938 = vunpack.c.l.b16 %v240
    %v939 = vunpack.c.h.b16 %v240
    %v940 = vunpack.c.l.b16 %v241
    %v941 = vunpack.c.h.b16 %v241
    %v942 = vunpack.c.l.b16 %v242
    %v943 = vunpack.c.h.b16 %v242
    %v944 = vunpack.c.l.b16 %v243
    %v945 = vunpack.c.h.b16 %v243
    %v946 = vunpack.c.l.b16 %v244
    %v947 = vunpack.c.h.b16 %v244
    %v948 = vunpack.c.l.b16 %v245
    %v949 = vunpack.c.h.b16 %v245
    %v950 = vunpack.c.l.b16 %v246
    %v951 = vunpack.c.h.b16 %v246
    %v952 = vunpack.c.l.b16 %v247
    %v953 = vunpack.c.h.b16 %v247
    %v954 = vunpack.c.l.b16 %v248
    %v955 = vunpack.c.h.b16 %v248
    %v956 = vunpack.c.l.b16 %v249
    %v957 = vunpack.c.h.b16 %v249
    %v958 = vunpack.c.l.b16 %v250
    %v959 = vunpack.c.h.b16 %v250
    %v960 = vunpack.c.l.b16 %v251
    %v961 = vunpack.c.h.b16 %v251
    %v962 = vunpack.c.l.b16 %v252
    %v963 = vunpack.c.h.b16 %v252
    %v964 = vunpack.c.l.b16 %v253
    %v965 = vunpack.c.h.b16 %v253
    %v966 = vunpack.c.l.b16 %v254
    %v967 = vunpack.c.h.b16 %v254
    %v968 = vunpack.c.l.b16 %v255
    %v969 = vunpack.c.h.b16 %v255
    %v970 = vunpack.c.l.b16 %v256
    %v971 = vunpack.c.h.b16 %v256
    %v972 = vunpack.c.l.b16 %v257
    %v973 = vunpack.c.h.b16 %v257
    %v974 = vunpack.c.l.b16 %v258
    %v975 = vunpack.c.h.b16 %v258
    %v976 = vunpack.c.l.b16 %v259
    %v977 = vunpack.c.h.b16 %v259
    %v978 = vunpack.c.l.b16 %v260
    %v979 = vunpack.c.h.b16 %v260
    %v980 = vunpack.c.l.b16 %v261
    %v981 = vunpack.c.h.b16 %v261
    %v982 = vunpack.c.l.b16 %v262
    %v983 = vunpack.c.h.b16 %v262
    %v984 = vunpack.c.l.b16 %v263
    %v985 = vunpack.c.h.b16 %v263
    %v986 = vunpack.c.l.b16 %v264
    %v987 = vunpack.c.h.b16 %v264
    %v988 = vunpack.c.l.b16 %v265
    %v989 = vunpack.c.h.b16 %v265
    %v990 = vunpack.c.l.b16 %v266
    %v991 = vunpack.c.h.b16 %v266
    %v992 = vunpack.c.l.b16 %v267
    %v993 = vunpack.c.h.b16 %v267
    %v994 = vunpack.c.l.b16 %v268
    %v995 = vunpack.c.h.b16 %v268
    %v996 = vunpack.c.l.b16 %v269
    %v997 = vunpack.c.h.b16 %v269
    %v998 = vunpack.c.l.b16 %v270
    %v999 = vunpack.c.h.b16 %v270
    %v1000 = vunpack.c.l.b16 %v271
    %v1001 = vunpack.c.h.b16 %v271
    %v1002 = vunpack.c.l.b16 %v272
    %v1003 = vunpack.c.h.b16 %v272
    %v1004 = vunpack.c.l.b16 %v273
    %v1005 = vunpack.c.h.b16 %v273
    %v1006 = vunpack.c.l.b16 %v274
    %v1007 = vunpack.c.h.b16 %v274
    %v1008 = vunpack.c.l.b16 %v275
    %v1009 = vunpack.c.h.b16 %v275
    %v1010 = vunpack.c.l.b16 %v276
    %v1011 = vunpack.c.h.b16 %v276
    %v1012 = vunpack.c.l.b16 %v277
    %v1013 = vunpack.c.h.b16 %v277
    %v1014 = vunpack.c.l.b16 %v278
    %v1015 = vunpack.c.h.b16 %v278
    %v1016 = vunpack.c.l.b16 %v279
    %v1017 = vunpack.c.h.b16 %v279
    %v1018 = vunpack.c.l.b16 %v280
    %v1019 = vunpack.c.h.b16 %v280
    %v1020 = vunpack.c.l.b16 %v281
    %v1021 = vunpack.c.h.b16 %v281
    %v1022 = vunpack.c.l.b16 %v282
    %v1023 = vunpack.c.h.b16 %v282
    %v1024 = vunpack.c.l.b16 %v283
    %v1025 = vunpack.c.h.b16 %v283
    %v1026 = vunpack.c.l.b16 %v284
    %v1027 = vunpack.c.h.b16 %v284
    %v1028 = vunpack.c.l.b16 %v285
    %v1029 = vunpack.c.h.b16 %v285
    %v1030 = vunpack.c.l.b16 %v286
    %v1031 = vunpack.c.h.b16 %v286
    %v1032 = vunpack.c.l.b16 %v287
    %v1033 = vunpack.c.h.b16 %v287
    %v1034 = vunpack.c.l.b16 %v288
    %v1035 = vunpack.c.h.b16 %v288
    %v1036 = vunpack.c.l.b16 %v289
    %v1037 = vunpack.c.h.b16 %v289
    %v1038 = vunpack.c.l.b16 %v290
    %v1039 = vunpack.c.h.b16 %v290
    %v1040 = vunpack.c.l.b16 %v291
    %v1041 = vunpack.c.h.b16 %v291
    %v1042 = vunpack.c.l.b16 %v292
    %v1043 = vunpack.c.h.b16 %v292
    %v1044 = vunpack.c.l.b16 %v293
    %v1045 = vunpack.c.h.b16 %v293
    %v1046 = vunpack.c.l.b16 %v294
    %v1047 = vunpack.c.h.b16 %v294
    %v1048 = vunpack.c.l.b16 %v295
    %v1049 = vunpack.c.h.b16 %v295
    %v1050 = vunpack.c.l.b16 %v296
    %v1051 = vunpack.c.h.b16 %v296
    %v1052 = vunpack.c.l.b16 %v297
    %v1053 = vunpack.c.h.b16 %v297
    %v1054 = vunpack.c.l.b16 %v298
    %v1055 = vunpack.c.h.b16 %v298
    %v1056 = vunpack.c.l.b16 %v299
    %v1057 = vunpack.c.h.b16 %v299
    %v1058 = vunpack.c.l.b16 %v300
    %v1059 = vunpack.c.h.b16 %v300
    %v1060 = vunpack.c.l.b16 %v301
    %v1061 = vunpack.c.h.b16 %v301
    %v1062 = vunpack.c.l.b16 %v302
    %v1063 = vunpack.c.h.b16 %v302
    %v1064 = vunpack.c.l.b16 %v303
    %v1065 = vunpack.c.h.b16 %v303
    %v1066 = vunpack.c.l.b16 %v304
    %v1067 = vunpack.c.h.b16 %v304
    %v1068 = vunpack.c.l.b16 %v305
    %v1069 = vunpack.c.h.b16 %v305
    %v1070 = vunpack.c.l.b16 %v306
    %v1071 = vunpack.c.h.b16 %v306
    %v1072 = vunpack.c.l.b16 %v307
    %v1073 = vunpack.c.h.b16 %v307
    %v1074 = vunpack.c.l.b16 %v308
    %v1075 = vunpack.c.h.b16 %v308
    %v1076 = vunpack.c.l.b16 %v309
    %v1077 = vunpack.c.h.b16 %v309
    %v1078 = vunpack.c.l.b16 %v310
    %v1079 = vunpack.c.h.b16 %v310
    %v1080 = vunpack.c.l.b16 %v311
    %v1081 = vunpack.c.h.b16 %v311
    %v1082 = vunpack.c.l.b16 %v312
    %v1083 = vunpack.c.h.b16 %v312
    %v1084 = vunpack.c.l.b16 %v313
    %v1085 = vunpack.c.h.b16 %v313
    %v1086 = vunpack.c.l.b16 %v314
    %v1087 = vunpack.c.h.b16 %v314
    %v1088 = vunpack.c.l.b16 %v315
    %v1089 = vunpack.c.h.b16 %v315
    %v1090 = vunpack.c.l.b16 %v316
    %v1091 = vunpack.c.h.b16 %v316
    %v1092 = vunpack.c.l.b16 %v317
    %v1093 = vunpack.c.h.b16 %v317
    %v1094 = vunpack.c.l.b16 %v318
    %v1095 = vunpack.c.h.b16 %v318
    %v1096 = vunpack.c.l.b16 %v319
    %v1097 = vunpack.c.h.b16 %v319
    %v1098 = vunpack.c.l.b16 %v320
    %v1099 = vunpack.c.h.b16 %v320
    %v1100 = vunpack.c.l.b16 %v321
    %v1101 = vunpack.c.h.b16 %v321
    %v1102 = vunpack.c.l.b16 %v322
    %v1103 = vunpack.c.h.b16 %v322
    %v1104 = vunpack.c.l.b16 %v323
    %v1105 = vunpack.c.h.b16 %v323
    %v1106 = vunpack.c.l.b16 %v324
    %v1107 = vunpack.c.h.b16 %v324
    %v1108 = vunpack.c.l.b16 %v325
    %v1109 = vunpack.c.h.b16 %v325
    %v1110 = vunpack.c.l.b16 %v326
    %v1111 = vunpack.c.h.b16 %v326
    %v1112 = vunpack.c.l.b16 %v327
    %v1113 = vunpack.c.h.b16 %v327
    %v1114 = vunpack.c.l.b16 %v328
    %v1115 = vunpack.c.h.b16 %v328
    %v1116 = vunpack.c.l.b16 %v329
    %v1117 = vunpack.c.h.b16 %v329
    %v1118 = vunpack.c.l.b16 %v330
    %v1119 = vunpack.c.h.b16 %v330
    %v1120 = vunpack.c.l.b16 %v331
    %v1121 = vunpack.c.h.b16 %v331
    %v1122 = vunpack.c.l.b16 %v332
    %v1123 = vunpack.c.h.b16 %v332
    %v1124 = vunpack.c.l.b16 %v333
    %v1125 = vunpack.c.h.b16 %v333
    %v1126 = vunpack.c.l.b16 %v334
    %v1127 = vunpack.c.h.b16 %v334
    %v1128 = vunpack.c.l.b16 %v335
    %v1129 = vunpack.c.h.b16 %v335
    %v1130 = vunpack.c.l.b16 %v336
    %v1131 = vunpack.c.h.b16 %v336
    %v1132 = vunpack.c.l.b16 %v337
    %v1133 = vunpack.c.h.b16 %v337
    %v1134 = vunpack.c.l.b16 %v338
    %v1135 = vunpack.c.h.b16 %v338
    %v1136 = vunpack.c.l.b16 %v339
    %v1137 = vunpack.c.h.b16 %v339
    %v1138 = vunpack.c.l.b16 %v340
    %v1139 = vunpack.c.h.b16 %v340
    %v1140 = vunpack.c.l.b16 %v341
    %v1141 = vunpack.c.h.b16 %v341
    %v1142 = vunpack.c.l.b16 %v342
    %v1143 = vunpack.c.h.b16 %v342
    %v1144 = vunpack.c.l.b16 %v343
    %v1145 = vunpack.c.h.b16 %v343
    %v1146 = vunpack.c.l.b16 %v344
    %v1147 = vunpack.c.h.b16 %v344
    %v1148 = vunpack.c.l.b16 %v345
    %v1149 = vunpack.c.h.b16 %v345
    %v1150 = vunpack.c.l.b16 %v346
    %v1151 = vunpack.c.h.b16 %v346
    %v1152 = vunpack.c.l.b16 %v347
    %v1153 = vunpack.c.h.b16 %v347
    %v1154 = vunpack.c.l.b16 %v348
    %v1155 = vunpack.c.h.b16 %v348
    %v1156 = vunpack.c.l.b16 %v349
    %v1157 = vunpack.c.h.b16 %v349
    %v1158 = vunpack.c.l.b16 %v350
    %v1159 = vunpack.c.h.b16 %v350
    %v1160 = vunpack.c.l.b16 %v351
    %v1161 = vunpack.c.h.b16 %v351
    %v1162 = vunpack.c.l.b16 %v352
    %v1163 = vunpack.c.h.b16 %v352
    %v1164 = vunpack.c.l.b16 %v353
    %v1165 = vunpack.c.h.b16 %v353
    %v1166 = vunpack.c.l.b16 %v354
    %v1167 = vunpack.c.h.b16 %v354
    %v1168 = vunpack.c.l.b16 %v355
    %v1169 = vunpack.c.h.b16 %v355
    %v1170 = vunpack.c.l.b16 %v356
    %v1171 = vunpack.c.h.b16 %v356
    %v1172 = vunpack.c.l.b16 %v357
    %v1173 = vunpack.c.h.b16 %v357
    %v1174 = vunpack.c.l.b16 %v358
    %v1175 = vunpack.c.h.b16 %v358
    %v1176 = vunpack.c.l.b16 %v359
    %v1177 = vunpack.c.h.b16 %v359
    %v1178 = vpack.c.b16 %v670, %v666
    %v1179 = vpack.c.b16 %v671, %v667
    %v1180 = vpack.c.b16 %v672, %v668
    %v1181 = vpack.c.b16 %v673, %v669
    %v1182 = vpack.c.b16 %v678, %v674
    %v1183 = vpack.c.b16 %v679, %v675
    %v1184 = vpack.c.b16 %v680, %v676
    %v1185 = vpack.c.b16 %v681, %v677
    %v1186 = vpack.c.b16 %v686, %v682
    %v1187 = vpack.c.b16 %v687, %v683
    %v1188 = vpack.c.b16 %v688, %v684
    %v1189 = vpack.c.b16 %v689, %v685
    %v1190 = vpack.c.b16 %v694, %v690
    %v1191 = vpack.c.b16 %v695, %v691
    %v1192 = vpack.c.b16 %v696, %v692
    %v1193 = vpack.c.b16 %v697, %v693
    %v1194 = vpack.c.b16 %v702, %v698
    %v1195 = vpack.c.b16 %v703, %v699
    %v1196 = vpack.c.b16 %v704, %v700
    %v1197 = vpack.c.b16 %v705, %v701
    %v1198 = vpack.c.b16 %v710, %v706
    %v1199 = vpack.c.b16 %v711, %v707
    %v1200 = vpack.c.b16 %v712, %v708
    %v1201 = vpack.c.b16 %v713, %v709
    %v1202 = vpack.c.b16 %v718, %v714
    %v1203 = vpack.c.b16 %v719, %v715
    %v1204 = vpack.c.b16 %v720, %v716
    %v1205 = vpack.c.b16 %v721, %v717
    %v1206 = vpack.c.b16 %v726, %v722
    %v1207 = vpack.c.b16 %v727, %v723
    %v1208 = vpack.c.b16 %v728, %v724
    %v1209 = vpack.c.b16 %v729, %v725
    %v1210 = vpack.c.b16 %v734, %v730
    %v1211 = vpack.c.b16 %v735, %v731
    %v1212 = vpack.c.b16 %v736, %v732
    %v1213 = vpack.c.b16 %v737, %v733
    %v1214 = vpack.c.b16 %v742, %v738
    %v1215 = vpack.c.b16 %v743, %v739
    %v1216 = vpack.c.b16 %v744, %v740
    %v1217 = vpack.c.b16 %v745, %v741
    %v1218 = vpack.c.b16 %v750, %v746
    %v1219 = vpack.c.b16 %v751, %v747
    %v1220 = vpack.c.b16 %v752, %v748
    %v1221 = vpack.c.b16 %v753, %v749
    %v1222 = vpack.c.b16 %v758, %v754
    %v1223 = vpack.c.b16 %v759, %v755
    %v1224 = vpack.c.b16 %v760, %v756
    %v1225 = vpack.c.b16 %v761, %v757
    %v1226 = vpack.c.b16 %v766, %v762
    %v1227 = vpack.c.b16 %v767, %v763
    %v1228 = vpack.c.b16 %v768, %v764
    %v1229 = vpack.c.b16 %v769, %v765
    %v1230 = vpack.c.b16 %v774, %v770
    %v1231 = vpack.c.b16 %v775, %v771
    %v1232 = vpack.c.b16 %v776, %v772
    %v1233 = vpack.c.b16 %v777, %v773
    %v1234 = vpack.c.b16 %v782, %v778
    %v1235 = vpack.c.b16 %v783, %v779
    %v1236 = vpack.c.b16 %v784, %v780
    %v1237 = vpack.c.b16 %v785, %v781
    %v1238 = vpack.c.b16 %v790, %v786
    %v1239 = vpack.c.b16 %v791, %v787
    %v1240 = vpack.c.b16 %v792, %v788
    %v1241 = vpack.c.b16 %v793, %v789
    %v1242 = vpack.c.b16 %v798, %v794
    %v1243 = vpack.c.b16 %v799, %v795
    %v1244 = vpack.c.b16 %v800, %v796
    %v1245 = vpack.c.b16 %v801, %v797
    %v1246 = vpack.c.b16 %v806, %v802
    %v1247 = vpack.c.b16 %v807, %v803
    %v1248 = vpack.c.b16 %v808, %v804
    %v1249 = vpack.c.b16 %v809, %v805
    %v1250 = vpack.c.b16 %v814, %v810
    %v1251 = vpack.c.b16 %v815, %v811
    %v1252 = vpack.c.b16 %v816, %v812
    %v1253 = vpack.c.b16 %v817, %v813
    %v1254 = vpack.c.b16 %v822, %v818
    %v1255 = vpack.c.b16 %v823, %v819
    %v1256 = vpack.c.b16 %v824, %v820
    %v1257 = vpack.c.b16 %v825, %v821
    %v1258 = vpack.c.b16 %v830, %v826
    %v1259 = vpack.c.b16 %v831, %v827
    %v1260 = vpack.c.b16 %v832, %v828
    %v1261 = vpack.c.b16 %v833, %v829
    %v1262 = vpack.c.b16 %v838, %v834
    %v1263 = vpack.c.b16 %v839, %v835
    %v1264 = vpack.c.b16 %v840, %v836
    %v1265 = vpack.c.b16 %v841, %v837
    %v1266 = vpack.c.b16 %v846, %v842
    %v1267 = vpack.c.b16 %v847, %v843
    %v1268 = vpack.c.b16 %v848, %v844
    %v1269 = vpack.c.b16 %v849, %v845
    %v1270 = vpack.c.b16 %v854, %v850
    %v1271 = vpack.c.b16 %v855, %v851
    %v1272 = vpack.c.b16 %v856, %v852
    %v1273 = vpack.c.b16 %v857, %v853
    %v1274 = vpack.c.b16 %v862, %v858
    %v1275 = vpack.c.b16 %v863, %v859
    %v1276 = vpack.c.b16 %v864, %v860
    %v1277 = vpack.c.b16 %v865, %v861
    %v1278 = vpack.c.b16 %v870, %v866
    %v1279 = vpack.c.b16 %v871, %v867
    %v1280 = vpack.c.b16 %v872, %v868
    %v1281 = vpack.c.b16 %v873, %v869
    %v1282 = vpack.c.b16 %v878, %v874
    %v1283 = vpack.c.b16 %v879, %v875
    %v1284 = vpack.c.b16 %v880, %v876
    %v1285 = vpack.c.b16 %v881, %v877
    %v1286 = vpack.c.b16 %v886, %v882
    %v1287 = vpack.c.b16 %v887, %v883
    %v1288 = vpack.c.b16 %v888, %v884
    %v1289 = vpack.c.b16 %v889, %v885
    %v1290 = vpack.c.b16 %v894, %v890
    %v1291 = vpack.c.b16 %v895, %v891
    %v1292 = vpack.c.b16 %v896, %v892
    %v1293 = vpack.c.b16 %v897, %v893
    %v1294 = vpack.c.b16 %v902, %v898
    %v1295 = vpack.c.b16 %v903, %v899
    %v1296 = vpack.c.b16 %v904, %v900
    %v1297 = vpack.c.b16 %v905, %v901
    %v1298 = vpack.c.b16 %v910, %v906
    %v1299 = vpack.c.b16 %v911, %v907
    %v1300 = vpack.c.b16 %v912, %v908
    %v1301 = vpack.c.b16 %v913, %v909
    %v1302 = vpack.c.b16 %v918, %v914
    %v1303 = vpack.c.b16 %v919, %v915
    %v1304 = vpack.c.b16 %v920, %v916
    %v1305 = vpack.c.b16 %v921, %v917
    %v1306 = vpack.c.b16 %v926, %v922
    %v1307 = vpack.c.b16 %v927, %v923
    %v1308 = vpack.c.b16 %v928, %v924
    %v1309 = vpack.c.b16 %v929, %v925
    %v1310 = vpack.c.b16 %v934, %v930
    %v1311 = vpack.c.b16 %v935, %v931
    %v1312 = vpack.c.b16 %v936, %v932
    %v1313 = vpack.c.b16 %v937, %v933
    %v1314 = vpack.c.b16 %v942, %v938
    %v1315 = vpack.c.b16 %v943, %v939
    %v1316 = vpack.c.b16 %v944, %v940
    %v1317 = vpack.c.b16 %v945, %v941
    %v1318 = vpack.c.b16 %v950, %v946
    %v1319 = vpack.c.b16 %v951, %v947
    %v1320 = vpack.c.b16 %v952, %v948
    %v1321 = vpack.c.b16 %v953, %v949
    %v1322 = vpack.c.b16 %v958, %v954
    %v1323 = vpack.c.b16 %v959, %v955
    %v1324 = vpack.c.b16 %v960, %v956
    %v1325 = vpack.c.b16 %v961, %v957
    %v1326 = vpack.c.b16 %v966, %v962
    %v1327 = vpack.c.b16 %v967, %v963
    %v1328 = vpack.c.b16 %v968, %v964
    %v1329 = vpack.c.b16 %v969, %v965
    %v1330 = vpack.c.b16 %v974, %v970
    %v1331 = vpack.c.b16 %v975, %v971
    %v1332 = vpack.c.b16 %v976, %v972
    %v1333 = vpack.c.b16 %v977, %v973
    %v1334 = vpack.c.b16 %v982, %v978
    %v1335 = vpack.c.b16 %v983, %v979
    %v1336 = vpack.c.b16 %v984, %v980
    %v1337 = vpack.c.b16 %v985, %v981
    %v1338 = vpack.c.b16 %v990, %v986
    %v1339 = vpack.c.b16 %v991, %v987
    %v1340 = vpack.c.b16 %v992, %v988
    %v1341 = vpack.c.b16 %v993, %v989
    %v1342 = vpack.c.b16 %v998, %v994
    %v1343 = vpack.c.b16 %v999, %v995
    %v1344 = vpack.c.b16 %v1000, %v996
    %v1345 = vpack.c.b16 %v1001, %v997
    %v1346 = vpack.c.b16 %v1006, %v1002
    %v1347 = vpack.c.b16 %v1007, %v1003
    %v1348 = vpack.c.b16 %v1008, %v1004
    %v1349 = vpack.c.b16 %v1009, %v1005
    %v1350 = vpack.c.b16 %v1014, %v1010
    %v1351 = vpack.c.b16 %v1015, %v1011
    %v1352 = vpack.c.b16 %v1016, %v1012
    %v1353 = vpack.c.b16 %v1017, %v1013
    %v1354 = vpack.c.b16 %v1022, %v1018
    %v1355 = vpack.c.b16 %v1023, %v1019
    %v1356 = vpack.c.b16 %v1024, %v1020
    %v1357 = vpack.c.b16 %v1025, %v1021
    %v1358 = vpack.c.b16 %v1030, %v1026
    %v1359 = vpack.c.b16 %v1031, %v1027
    %v1360 = vpack.c.b16 %v1032, %v1028
    %v1361 = vpack.c.b16 %v1033, %v1029
    %v1362 = vpack.c.b16 %v1038, %v1034
    %v1363 = vpack.c.b16 %v1039, %v1035
    %v1364 = vpack.c.b16 %v1040, %v1036
    %v1365 = vpack.c.b16 %v1041, %v1037
    %v1366 = vpack.c.b16 %v1046, %v1042
    %v1367 = vpack.c.b16 %v1047, %v1043
    %v1368 = vpack.c.b16 %v1048, %v1044
    %v1369 = vpack.c.b16 %v1049, %v1045
    %v1370 = vpack.c.b16 %v1054, %v1050
    %v1371 = vpack.c.b16 %v1055, %v1051
    %v1372 = vpack.c.b16 %v1056, %v1052
    %v1373 = vpack.c.b16 %v1057, %v1053
    %v1374 = vpack.c.b16 %v1062, %v1058
    %v1375 = vpack.c.b16 %v1063, %v1059
    %v1376 = vpack.c.b16 %v1064, %v1060
    %v1377 = vpack.c.b16 %v1065, %v1061
    %v1378 = vpack.c.b16 %v1070, %v1066
    %v1379 = vpack.c.b16 %v1071, %v1067
    %v1380 = vpack.c.b16 %v1072, %v1068
    %v1381 = vpack.c.b16 %v1073, %v1069
    %v1382 = vpack.c.b16 %v1078, %v1074
    %v1383 = vpack.c.b16 %v1079, %v1075
    %v1384 = vpack.c.b16 %v1080, %v1076
    %v1385 = vpack.c.b16 %v1081, %v1077
    %v1386 = vpack.c.b16 %v1086, %v1082
    %v1387 = vpack.c.b16 %v1087, %v1083
    %v1388 = vpack.c.b16 %v1088, %v1084
    %v1389 = vpack.c.b16 %v1089, %v1085
    %v1390 = vpack.c.b16 %v1094, %v1090
    %v1391 = vpack.c.b16 %v1095, %v1091
    %v1392 = vpack.c.b16 %v1096, %v1092
    %v1393 = vpack.c.b16 %v1097, %v1093
    %v1394 = vpack.c.b16 %v1102, %v1098
    %v1395 = vpack.c.b16 %v1103, %v1099
    %v1396 = vpack.c.b16 %v1104, %v1100
    %v1397 = vpack.c.b16 %v1105, %v1101
    %v1398 = vpack.c.b16 %v1110, %v1106
    %v1399 = vpack.c.b16 %v1111, %v1107
    %v1400 = vpack.c.b16 %v1112, %v1108
    %v1401 = vpack.c.b16 %v1113, %v1109
    %v1402 = vpack.c.b16 %v1118, %v1114
    %v1403 = vpack.c.b16 %v1119, %v1115
    %v1404 = vpack.c.b16 %v1120, %v1116
    %v1405 = vpack.c.b16 %v1121, %v1117
    %v1406 = vpack.c.b16 %v1126, %v1122
    %v1407 = vpack.c.b16 %v1127, %v1123
    %v1408 = vpack.c.b16 %v1128, %v1124
    %v1409 = vpack.c.b16 %v1129, %v1125
    %v1410 = vpack.c.b16 %v1134, %v1130
    %v1411 = vpack.c.b16 %v1135, %v1131
    %v1412 = vpack.c.b16 %v1136, %v1132
    %v1413 = vpack.c.b16 %v1137, %v1133
    %v1414 = vpack.c.b16 %v1142, %v1138
    %v1415 = vpack.c.b16 %v1143, %v1139
    %v1416 = vpack.c.b16 %v1144, %v1140
    %v1417 = vpack.c.b16 %v1145, %v1141
    %v1418 = vpack.c.b16 %v1150, %v1146
    %v1419 = vpack.c.b16 %v1151, %v1147
    %v1420 = vpack.c.b16 %v1152, %v1148
    %v1421 = vpack.c.b16 %v1153, %v1149
    %v1422 = vpack.c.b16 %v1158, %v1154
    %v1423 = vpack.c.b16 %v1159, %v1155
    %v1424 = vpack.c.b16 %v1160, %v1156
    %v1425 = vpack.c.b16 %v1161, %v1157
    %v1426 = vpack.c.b16 %v1166, %v1162
    %v1427 = vpack.c.b16 %v1167, %v1163
    %v1428 = vpack.c.b16 %v1168, %v1164
    %v1429 = vpack.c.b16 %v1169, %v1165
    %v1430 = vpack.c.b16 %v1174, %v1170
    %v1431 = vpack.c.b16 %v1175, %v1171
    %v1432 = vpack.c.b16 %v1176, %v1172
    %v1433 = vpack.c.b16 %v1177, %v1173
    %1690 = vmatprep.subr.bf16.mxu0 %v1179
    %1691 = vmatpush1.bf16.msra.mxu0 %v1178
    %1692 = vmatprep.subr.bf16.mxu0 %v1183
    %1693 = vmatpush1.bf16.msra.mxu0 %v1182
    %1694 = vmatprep.subr.bf16.mxu0 %v1187
    %1695 = vmatpush1.bf16.msra.mxu0 %v1186
    %1696 = vmatprep.subr.bf16.mxu0 %v1191
    %1697 = vmatpush1.bf16.msra.mxu0 %v1190
    %1698 = vmatprep.subr.bf16.mxu0 %v1195
    %1699 = vmatpush1.bf16.msra.mxu0 %v1194
    %1700 = vmatprep.subr.bf16.mxu0 %v1199
    %1701 = vmatpush1.bf16.msra.mxu0 %v1198
    %1702 = vmatprep.subr.bf16.mxu0 %v1203
    %1703 = vmatpush1.bf16.msra.mxu0 %v1202
    %1704 = vmatprep.subr.bf16.mxu0 %v1207
    %1705 = vmatpush1.bf16.msra.mxu0 %v1206
    %1706 = vmatprep.subr.bf16.mxu0 %v1211
    %1707 = vmatpush1.bf16.msra.mxu0 %v1210
    %1708 = vmatprep.subr.bf16.mxu0 %v1215
    %1709 = vmatpush1.bf16.msra.mxu0 %v1214
    %1710 = vmatprep.subr.bf16.mxu0 %v1219
    %1711 = vmatpush1.bf16.msra.mxu0 %v1218
    %1712 = vmatprep.subr.bf16.mxu0 %v1223
    %1713 = vmatpush1.bf16.msra.mxu0 %v1222
    %1714 = vmatprep.subr.bf16.mxu0 %v1227
    %1715 = vmatpush1.bf16.msra.mxu0 %v1226
    %1716 = vmatprep.subr.bf16.mxu0 %v1231
    %1717 = vmatpush1.bf16.msra.mxu0 %v1230
    %1718 = vmatprep.subr.bf16.mxu0 %v1235
    %1719 = vmatpush1.bf16.msra.mxu0 %v1234
    %1720 = vmatprep.subr.bf16.mxu0 %v1239
    %1721 = vmatpush1.bf16.msra.mxu0 %v1238
    %1722 = vmatprep.mubr.bf16.mxu0 %v395
    %1723 = vmatmul.mubr.bf16.gmra.mrb[0].mxu0 %v394
    %v1724 = vpop.f32.mrb[0].mxu0
    %v1725 = vadd.f32 %v365, %v1724
    %v1726 = vpop.f32.mrb[0].mxu0
    %v1727 = vadd.f32 %v369, %v1726
    %v1728 = vpop.f32.mrb[0].mxu0
    %v1729 = vpop.f32.mrb[0].mxu0
    %1730 = vdwg.mxu0
    %1731 = vmatprep.subr.bf16.mxu0 %v1243
    %1732 = vmatpush1.bf16.msra.mxu0 %v1242
    %1733 = vmatprep.subr.bf16.mxu0 %v1247
    %1734 = vmatpush1.bf16.msra.mxu0 %v1246
    %1735 = vmatprep.subr.bf16.mxu0 %v1251
    %1736 = vmatpush1.bf16.msra.mxu0 %v1250
    %1737 = vmatprep.subr.bf16.mxu0 %v1255
    %1738 = vmatpush1.bf16.msra.mxu0 %v1254
    %1739 = vmatprep.subr.bf16.mxu0 %v1259
    %1740 = vmatpush1.bf16.msra.mxu0 %v1258
    %1741 = vmatprep.subr.bf16.mxu0 %v1263
    %1742 = vmatpush1.bf16.msra.mxu0 %v1262
    %1743 = vmatprep.subr.bf16.mxu0 %v1267
    %1744 = vmatpush1.bf16.msra.mxu0 %v1266
    %1745 = vmatprep.subr.bf16.mxu0 %v1271
    %1746 = vmatpush1.bf16.msra.mxu0 %v1270
    %1747 = vmatprep.subr.bf16.mxu0 %v1275
    %1748 = vmatpush1.bf16.msra.mxu0 %v1274
    %1749 = vmatprep.subr.bf16.mxu0 %v1279
    %1750 = vmatpush1.bf16.msra.mxu0 %v1278
    %1751 = vmatprep.subr.bf16.mxu0 %v1283
    %1752 = vmatpush1.bf16.msra.mxu0 %v1282
    %1753 = vmatprep.subr.bf16.mxu0 %v1287
    %1754 = vmatpush1.bf16.msra.mxu0 %v1286
    %1755 = vmatprep.subr.bf16.mxu0 %v1291
    %1756 = vmatpush1.bf16.msra.mxu0 %v1290
    %1757 = vmatprep.subr.bf16.mxu0 %v1295
    %1758 = vmatpush1.bf16.msra.mxu0 %v1294
    %1759 = vmatprep.subr.bf16.mxu0 %v1299
    %1760 = vmatpush1.bf16.msra.mxu0 %v1298
    %1761 = vmatprep.subr.bf16.mxu0 %v1303
    %1762 = vmatpush1.bf16.msra.mxu0 %v1302
    %1763 = vmatprep.mubr.bf16.mxu0 %v397
    %1764 = vmatmul.mubr.bf16.gmra.mrb[0].mxu0 %v396
    %v1765 = vpop.f32.mrb[0].mxu0
    %v1766 = vadd.f32 %v1725, %v1765
    %v1767 = vpop.f32.mrb[0].mxu0
    %v1768 = vadd.f32 %v1727, %v1767
    %v1769 = vpop.f32.mrb[0].mxu0
    %v1770 = vpop.f32.mrb[0].mxu0
    %1771 = vdwg.mxu0
    %1772 = vmatprep.subr.bf16.mxu0 %v1307
    %1773 = vmatpush1.bf16.msra.mxu0 %v1306
    %1774 = vmatprep.subr.bf16.mxu0 %v1311
    %1775 = vmatpush1.bf16.msra.mxu0 %v1310
    %1776 = vmatprep.subr.bf16.mxu0 %v1315
    %1777 = vmatpush1.bf16.msra.mxu0 %v1314
    %1778 = vmatprep.subr.bf16.mxu0 %v1319
    %1779 = vmatpush1.bf16.msra.mxu0 %v1318
    %1780 = vmatprep.subr.bf16.mxu0 %v1323
    %1781 = vmatpush1.bf16.msra.mxu0 %v1322
    %1782 = vmatprep.subr.bf16.mxu0 %v1327
    %1783 = vmatpush1.bf16.msra.mxu0 %v1326
    %1784 = vmatprep.subr.bf16.mxu0 %v1331
    %1785 = vmatpush1.bf16.msra.mxu0 %v1330
    %1786 = vmatprep.subr.bf16.mxu0 %v1335
    %1787 = vmatpush1.bf16.msra.mxu0 %v1334
    %1788 = vmatprep.subr.bf16.mxu0 %v1339
    %1789 = vmatpush1.bf16.msra.mxu0 %v1338
    %1790 = vmatprep.subr.bf16.mxu0 %v1343
    %1791 = vmatpush1.bf16.msra.mxu0 %v1342
    %1792 = vmatprep.subr.bf16.mxu0 %v1347
    %1793 = vmatpush1.bf16.msra.mxu0 %v1346
    %1794 = vmatprep.subr.bf16.mxu0 %v1351
    %1795 = vmatpush1.bf16.msra.mxu0 %v1350
    %1796 = vmatprep.subr.bf16.mxu0 %v1355
    %1797 = vmatpush1.bf16.msra.mxu0 %v1354
    %1798 = vmatprep.subr.bf16.mxu0 %v1359
    %1799 = vmatpush1.bf16.msra.mxu0 %v1358
    %1800 = vmatprep.subr.bf16.mxu0 %v1363
    %1801 = vmatpush1.bf16.msra.mxu0 %v1362
    %1802 = vmatprep.subr.bf16.mxu0 %v1367
    %1803 = vmatpush1.bf16.msra.mxu0 %v1366
    %1804 = vmatprep.mubr.bf16.mxu0 %v399
    %1805 = vmatmul.mubr.bf16.gmra.mrb[0].mxu0 %v398
    %v1806 = vpop.f32.mrb[0].mxu0
    %v1807 = vadd.f32 %v1766, %v1806
    %v1808 = vpop.f32.mrb[0].mxu0
    %v1809 = vadd.f32 %v1768, %v1808
    %v1810 = vpop.f32.mrb[0].mxu0
    %v1811 = vpop.f32.mrb[0].mxu0
    %1812 = vdwg.mxu0
    %1813 = vmatprep.subr.bf16.mxu0 %v1371
    %1814 = vmatpush1.bf16.msra.mxu0 %v1370
    %1815 = vmatprep.subr.bf16.mxu0 %v1375
    %1816 = vmatpush1.bf16.msra.mxu0 %v1374
    %1817 = vmatprep.subr.bf16.mxu0 %v1379
    %1818 = vmatpush1.bf16.msra.mxu0 %v1378
    %1819 = vmatprep.subr.bf16.mxu0 %v1383
    %1820 = vmatpush1.bf16.msra.mxu0 %v1382
    %1821 = vmatprep.subr.bf16.mxu0 %v1387
    %1822 = vmatpush1.bf16.msra.mxu0 %v1386
    %1823 = vmatprep.subr.bf16.mxu0 %v1391
    %1824 = vmatpush1.bf16.msra.mxu0 %v1390
    %1825 = vmatprep.subr.bf16.mxu0 %v1395
    %1826 = vmatpush1.bf16.msra.mxu0 %v1394
    %1827 = vmatprep.subr.bf16.mxu0 %v1399
    %1828 = vmatpush1.bf16.msra.mxu0 %v1398
    %1829 = vmatprep.subr.bf16.mxu0 %v1403
    %1830 = vmatpush1.bf16.msra.mxu0 %v1402
    %1831 = vmatprep.subr.bf16.mxu0 %v1407
    %1832 = vmatpush1.bf16.msra.mxu0 %v1406
    %1833 = vmatprep.subr.bf16.mxu0 %v1411
    %1834 = vmatpush1.bf16.msra.mxu0 %v1410
    %1835 = vmatprep.subr.bf16.mxu0 %v1415
    %1836 = vmatpush1.bf16.msra.mxu0 %v1414
    %1837 = vmatprep.subr.bf16.mxu0 %v1419
    %1838 = vmatpush1.bf16.msra.mxu0 %v1418
    %1839 = vmatprep.subr.bf16.mxu0 %v1423
    %1840 = vmatpush1.bf16.msra.mxu0 %v1422
    %1841 = vmatprep.subr.bf16.mxu0 %v1427
    %1842 = vmatpush1.bf16.msra.mxu0 %v1426
    %1843 = vmatprep.subr.bf16.mxu0 %v1431
    %1844 = vmatpush1.bf16.msra.mxu0 %v1430
    %1845 = vmatprep.mubr.bf16.mxu0 %v401
    %1846 = vmatmul.mubr.bf16.gmra.mrb[0].mxu0 %v400
    %v1847 = vpop.f32.mrb[0].mxu0
    %v1848 = vadd.f32 %v1807, %v1847
    %v1849 = vpop.f32.mrb[0].mxu0
    %v1850 = vadd.f32 %v1809, %v1849
    %v1851 = vpop.f32.mrb[0].mxu0
    %v1852 = vpop.f32.mrb[0].mxu0
    %1853 = vdwg.mxu0
    %1854 = vmatprep.subr.bf16.mxu0 %v1181
    %1855 = vmatpush1.bf16.msra.mxu0 %v1180
    %1856 = vmatprep.subr.bf16.mxu0 %v1185
    %1857 = vmatpush1.bf16.msra.mxu0 %v1184
    %1858 = vmatprep.subr.bf16.mxu0 %v1189
    %1859 = vmatpush1.bf16.msra.mxu0 %v1188
    %1860 = vmatprep.subr.bf16.mxu0 %v1193
    %1861 = vmatpush1.bf16.msra.mxu0 %v1192
    %1862 = vmatprep.subr.bf16.mxu0 %v1197
    %1863 = vmatpush1.bf16.msra.mxu0 %v1196
    %1864 = vmatprep.subr.bf16.mxu0 %v1201
    %1865 = vmatpush1.bf16.msra.mxu0 %v1200
    %1866 = vmatprep.subr.bf16.mxu0 %v1205
    %1867 = vmatpush1.bf16.msra.mxu0 %v1204
    %1868 = vmatprep.subr.bf16.mxu0 %v1209
    %1869 = vmatpush1.bf16.msra.mxu0 %v1208
    %1870 = vmatprep.subr.bf16.mxu0 %v1213
    %1871 = vmatpush1.bf16.msra.mxu0 %v1212
    %1872 = vmatprep.subr.bf16.mxu0 %v1217
    %1873 = vmatpush1.bf16.msra.mxu0 %v1216
    %1874 = vmatprep.subr.bf16.mxu0 %v1221
    %1875 = vmatpush1.bf16.msra.mxu0 %v1220
    %1876 = vmatprep.subr.bf16.mxu0 %v1225
    %1877 = vmatpush1.bf16.msra.mxu0 %v1224
    %1878 = vmatprep.subr.bf16.mxu0 %v1229
    %1879 = vmatpush1.bf16.msra.mxu0 %v1228
    %1880 = vmatprep.subr.bf16.mxu0 %v1233
    %1881 = vmatpush1.bf16.msra.mxu0 %v1232
    %1882 = vmatprep.subr.bf16.mxu0 %v1237
    %1883 = vmatpush1.bf16.msra.mxu0 %v1236
    %1884 = vmatprep.subr.bf16.mxu0 %v1241
    %1885 = vmatpush1.bf16.msra.mxu0 %v1240
    %1886 = vmatprep.mubr.bf16.mxu0 %v395
    %1887 = vmatmul.mubr.bf16.gmra.mrb[0].mxu0 %v394
    %v1888 = vpop.f32.mrb[0].mxu0
    %v1889 = vadd.f32 %v373, %v1888
    %v1890 = vpop.f32.mrb[0].mxu0
    %v1891 = vadd.f32 %v377, %v1890
    %v1892 = vpop.f32.mrb[0].mxu0
    %v1893 = vpop.f32.mrb[0].mxu0
    %1894 = vdwg.mxu0
    %1895 = vmatprep.subr.bf16.mxu0 %v1245
    %1896 = vmatpush1.bf16.msra.mxu0 %v1244
    %1897 = vmatprep.subr.bf16.mxu0 %v1249
    %1898 = vmatpush1.bf16.msra.mxu0 %v1248
    %1899 = vmatprep.subr.bf16.mxu0 %v1253
    %1900 = vmatpush1.bf16.msra.mxu0 %v1252
    %1901 = vmatprep.subr.bf16.mxu0 %v1257
    %1902 = vmatpush1.bf16.msra.mxu0 %v1256
    %1903 = vmatprep.subr.bf16.mxu0 %v1261
    %1904 = vmatpush1.bf16.msra.mxu0 %v1260
    %1905 = vmatprep.subr.bf16.mxu0 %v1265
    %1906 = vmatpush1.bf16.msra.mxu0 %v1264
    %1907 = vmatprep.subr.bf16.mxu0 %v1269
    %1908 = vmatpush1.bf16.msra.mxu0 %v1268
    %1909 = vmatprep.subr.bf16.mxu0 %v1273
    %1910 = vmatpush1.bf16.msra.mxu0 %v1272
    %1911 = vmatprep.subr.bf16.mxu0 %v1277
    %1912 = vmatpush1.bf16.msra.mxu0 %v1276
    %1913 = vmatprep.subr.bf16.mxu0 %v1281
    %1914 = vmatpush1.bf16.msra.mxu0 %v1280
    %1915 = vmatprep.subr.bf16.mxu0 %v1285
    %1916 = vmatpush1.bf16.msra.mxu0 %v1284
    %1917 = vmatprep.subr.bf16.mxu0 %v1289
    %1918 = vmatpush1.bf16.msra.mxu0 %v1288
    %1919 = vmatprep.subr.bf16.mxu0 %v1293
    %1920 = vmatpush1.bf16.msra.mxu0 %v1292
    %1921 = vmatprep.subr.bf16.mxu0 %v1297
    %1922 = vmatpush1.bf16.msra.mxu0 %v1296
    %1923 = vmatprep.subr.bf16.mxu0 %v1301
    %1924 = vmatpush1.bf16.msra.mxu0 %v1300
    %1925 = vmatprep.subr.bf16.mxu0 %v1305
    %1926 = vmatpush1.bf16.msra.mxu0 %v1304
    %1927 = vmatprep.mubr.bf16.mxu0 %v397
    %1928 = vmatmul.mubr.bf16.gmra.mrb[0].mxu0 %v396
    %v1929 = vpop.f32.mrb[0].mxu0
    %v1930 = vadd.f32 %v1889, %v1929
    %v1931 = vpop.f32.mrb[0].mxu0
    %v1932 = vadd.f32 %v1891, %v1931
    %v1933 = vpop.f32.mrb[0].mxu0
    %v1934 = vpop.f32.mrb[0].mxu0
    %1935 = vdwg.mxu0
    %1936 = vmatprep.subr.bf16.mxu0 %v1309
    %1937 = vmatpush1.bf16.msra.mxu0 %v1308
    %1938 = vmatprep.subr.bf16.mxu0 %v1313
    %1939 = vmatpush1.bf16.msra.mxu0 %v1312
    %1940 = vmatprep.subr.bf16.mxu0 %v1317
    %1941 = vmatpush1.bf16.msra.mxu0 %v1316
    %1942 = vmatprep.subr.bf16.mxu0 %v1321
    %1943 = vmatpush1.bf16.msra.mxu0 %v1320
    %1944 = vmatprep.subr.bf16.mxu0 %v1325
    %1945 = vmatpush1.bf16.msra.mxu0 %v1324
    %1946 = vmatprep.subr.bf16.mxu0 %v1329
    %1947 = vmatpush1.bf16.msra.mxu0 %v1328
    %1948 = vmatprep.subr.bf16.mxu0 %v1333
    %1949 = vmatpush1.bf16.msra.mxu0 %v1332
    %1950 = vmatprep.subr.bf16.mxu0 %v1337
    %1951 = vmatpush1.bf16.msra.mxu0 %v1336
    %1952 = vmatprep.subr.bf16.mxu0 %v1341
    %1953 = vmatpush1.bf16.msra.mxu0 %v1340
    %1954 = vmatprep.subr.bf16.mxu0 %v1345
    %1955 = vmatpush1.bf16.msra.mxu0 %v1344
    %1956 = vmatprep.subr.bf16.mxu0 %v1349
    %1957 = vmatpush1.bf16.msra.mxu0 %v1348
    %1958 = vmatprep.subr.bf16.mxu0 %v1353
    %1959 = vmatpush1.bf16.msra.mxu0 %v1352
    %1960 = vmatprep.subr.bf16.mxu0 %v1357
    %1961 = vmatpush1.bf16.msra.mxu0 %v1356
    %1962 = vmatprep.subr.bf16.mxu0 %v1361
    %1963 = vmatpush1.bf16.msra.mxu0 %v1360
    %1964 = vmatprep.subr.bf16.mxu0 %v1365
    %1965 = vmatpush1.bf16.msra.mxu0 %v1364
    %1966 = vmatprep.subr.bf16.mxu0 %v1369
    %1967 = vmatpush1.bf16.msra.mxu0 %v1368
    %1968 = vmatprep.mubr.bf16.mxu0 %v399
    %1969 = vmatmul.mubr.bf16.gmra.mrb[0].mxu0 %v398
    %v1970 = vpop.f32.mrb[0].mxu0
    %v1971 = vadd.f32 %v1930, %v1970
    %v1972 = vpop.f32.mrb[0].mxu0
    %v1973 = vadd.f32 %v1932, %v1972
    %v1974 = vpop.f32.mrb[0].mxu0
    %v1975 = vpop.f32.mrb[0].mxu0
    %1976 = vdwg.mxu0
    %1977 = vmatprep.subr.bf16.mxu0 %v1373
    %1978 = vmatpush1.bf16.msra.mxu0 %v1372
    %1979 = vmatprep.subr.bf16.mxu0 %v1377
    %1980 = vmatpush1.bf16.msra.mxu0 %v1376
    %1981 = vmatprep.subr.bf16.mxu0 %v1381
    %1982 = vmatpush1.bf16.msra.mxu0 %v1380
    %1983 = vmatprep.subr.bf16.mxu0 %v1385
    %1984 = vmatpush1.bf16.msra.mxu0 %v1384
    %1985 = vmatprep.subr.bf16.mxu0 %v1389
    %1986 = vmatpush1.bf16.msra.mxu0 %v1388
    %1987 = vmatprep.subr.bf16.mxu0 %v1393
    %1988 = vmatpush1.bf16.msra.mxu0 %v1392
    %1989 = vmatprep.subr.bf16.mxu0 %v1397
    %1990 = vmatpush1.bf16.msra.mxu0 %v1396
    %1991 = vmatprep.subr.bf16.mxu0 %v1401
    %1992 = vmatpush1.bf16.msra.mxu0 %v1400
    %1993 = vmatprep.subr.bf16.mxu0 %v1405
    %1994 = vmatpush1.bf16.msra.mxu0 %v1404
    %1995 = vmatprep.subr.bf16.mxu0 %v1409
    %1996 = vmatpush1.bf16.msra.mxu0 %v1408
    %1997 = vmatprep.subr.bf16.mxu0 %v1413
    %1998 = vmatpush1.bf16.msra.mxu0 %v1412
    %1999 = vmatprep.subr.bf16.mxu0 %v1417
    %2000 = vmatpush1.bf16.msra.mxu0 %v1416
    %2001 = vmatprep.subr.bf16.mxu0 %v1421
    %2002 = vmatpush1.bf16.msra.mxu0 %v1420
    %2003 = vmatprep.subr.bf16.mxu0 %v1425
    %2004 = vmatpush1.bf16.msra.mxu0 %v1424
    %2005 = vmatprep.subr.bf16.mxu0 %v1429
    %2006 = vmatpush1.bf16.msra.mxu0 %v1428
    %2007 = vmatprep.subr.bf16.mxu0 %v1433
    %2008 = vmatpush1.bf16.msra.mxu0 %v1432
    %2009 = vmatprep.mubr.bf16.mxu0 %v401
    %2010 = vmatmul.mubr.bf16.gmra.mrb[0].mxu0 %v400
    %v2011 = vpop.f32.mrb[0].mxu0
    %v2012 = vadd.f32 %v1971, %v2011
    %v2013 = vpop.f32.mrb[0].mxu0
    %v2014 = vadd.f32 %v1973, %v2013
    %v2015 = vpop.f32.mrb[0].mxu0
    %v2016 = vpop.f32.mrb[0].mxu0
    %2017 = vdwg.mxu0
    %v2018 = vmax.f32 %v1848, 0.0
    %v2019 = vmax.f32 %v1850, 0.0
    %v2020 = vmax.f32 %v2012, 0.0
    %v2021 = vmax.f32 %v2014, 0.0
    %v2022 = vpack.c.bf16 %v2018, %v2018
    %v2023 = vpack.c.bf16 %v2019, %v2019
    %v2024 = vpack.c.bf16 %v2020, %v2020
    %v2025 = vpack.c.bf16 %v2021, %v2021
    %v2026 = vld [vmem:[#allocation4] sm:$0xff]
    %v2027 = vld [vmem:[#allocation4 + $0x8] sm:$0xff]
    %v2028 = vld [vmem:[#allocation4 + $0x10] sm:$0xff]
    %v2029 = vld [vmem:[#allocation4 + $0x18] sm:$0xff]
    %v2030 = vld [vmem:[#allocation4 + $0x20] sm:$0xff]
    %v2031 = vld [vmem:[#allocation4 + $0x28] sm:$0xff]
    %v2032 = vld [vmem:[#allocation4 + $0x30] sm:$0xff]
    %v2033 = vld [vmem:[#allocation4 + $0x38] sm:$0xff]
    %v2034 = vld [vmem:[#allocation4 + $0x40] sm:$0xff]
    %v2035 = vld [vmem:[#allocation4 + $0x48] sm:$0xff]
    %v2036 = vld [vmem:[#allocation4 + $0x50] sm:$0xff]
    %v2037 = vld [vmem:[#allocation4 + $0x58] sm:$0xff]
    %v2038 = vld [vmem:[#allocation4 + $0x60] sm:$0xff]
    %v2039 = vld [vmem:[#allocation4 + $0x68] sm:$0xff]
    %v2040 = vld [vmem:[#allocation4 + $0x70] sm:$0xff]
    %v2041 = vld [vmem:[#allocation4 + $0x78] sm:$0xff]
    %v2042 = vld [vmem:[#allocation4 + $0x80] sm:$0xff]
    %v2043 = vld [vmem:[#allocation4 + $0x88] sm:$0xff]
    %v2044 = vld [vmem:[#allocation4 + $0x90] sm:$0xff]
    %v2045 = vld [vmem:[#allocation4 + $0x98] sm:$0xff]
    %v2046 = vld [vmem:[#allocation4 + $0xa0] sm:$0xff]
    %v2047 = vld [vmem:[#allocation4 + $0xa8] sm:$0xff]
    %v2048 = vld [vmem:[#allocation4 + $0xb0] sm:$0xff]
    %v2049 = vld [vmem:[#allocation4 + $0xb8] sm:$0xff]
    %v2050 = vld [vmem:[#allocation4 + $0xc0] sm:$0xff]
    %v2051 = vld [vmem:[#allocation4 + $0xc8] sm:$0xff]
    %v2052 = vld [vmem:[#allocation4 + $0xd0] sm:$0xff]
    %v2053 = vld [vmem:[#allocation4 + $0xd8] sm:$0xff]
    %v2054 = vld [vmem:[#allocation4 + $0xe0] sm:$0xff]
    %v2055 = vld [vmem:[#allocation4 + $0xe8] sm:$0xff]
    %v2056 = vld [vmem:[#allocation4 + $0xf0] sm:$0xff]
    %v2057 = vld [vmem:[#allocation4 + $0xf8] sm:$0xff]
    %v2058 = vld [vmem:[#allocation4 + $0x100] sm:$0xff]
    %v2059 = vld [vmem:[#allocation4 + $0x108] sm:$0xff]
    %v2060 = vld [vmem:[#allocation4 + $0x110] sm:$0xff]
    %v2061 = vld [vmem:[#allocation4 + $0x118] sm:$0xff]
    %v2062 = vld [vmem:[#allocation4 + $0x120] sm:$0xff]
    %v2063 = vld [vmem:[#allocation4 + $0x128] sm:$0xff]
    %v2064 = vld [vmem:[#allocation4 + $0x130] sm:$0xff]
    %v2065 = vld [vmem:[#allocation4 + $0x138] sm:$0xff]
    %v2066 = vld [vmem:[#allocation4 + $0x140] sm:$0xff]
    %v2067 = vld [vmem:[#allocation4 + $0x148] sm:$0xff]
    %v2068 = vld [vmem:[#allocation4 + $0x150] sm:$0xff]
    %v2069 = vld [vmem:[#allocation4 + $0x158] sm:$0xff]
    %v2070 = vld [vmem:[#allocation4 + $0x160] sm:$0xff]
    %v2071 = vld [vmem:[#allocation4 + $0x168] sm:$0xff]
    %v2072 = vld [vmem:[#allocation4 + $0x170] sm:$0xff]
    %v2073 = vld [vmem:[#allocation4 + $0x178] sm:$0xff]
    %v2074 = vld [vmem:[#allocation4 + $0x180] sm:$0xff]
    %v2075 = vld [vmem:[#allocation4 + $0x188] sm:$0xff]
    %v2076 = vld [vmem:[#allocation4 + $0x190] sm:$0xff]
    %v2077 = vld [vmem:[#allocation4 + $0x198] sm:$0xff]
    %v2078 = vld [vmem:[#allocation4 + $0x1a0] sm:$0xff]
    %v2079 = vld [vmem:[#allocation4 + $0x1a8] sm:$0xff]
    %v2080 = vld [vmem:[#allocation4 + $0x1b0] sm:$0xff]
    %v2081 = vld [vmem:[#allocation4 + $0x1b8] sm:$0xff]
    %v2082 = vld [vmem:[#allocation4 + $0x1c0] sm:$0xff]
    %v2083 = vld [vmem:[#allocation4 + $0x1c8] sm:$0xff]
    %v2084 = vld [vmem:[#allocation4 + $0x1d0] sm:$0xff]
    %v2085 = vld [vmem:[#allocation4 + $0x1d8] sm:$0xff]
    %v2086 = vld [vmem:[#allocation4 + $0x1e0] sm:$0xff]
    %v2087 = vld [vmem:[#allocation4 + $0x1e8] sm:$0xff]
    %v2088 = vld [vmem:[#allocation4 + $0x1f0] sm:$0xff]
    %v2089 = vld [vmem:[#allocation4 + $0x1f8] sm:$0xff]
    %v2090 = vld [vmem:[%s4] sm:$0x3]
    %v2092 = vlaneseq
    %v2093 = vshrl.u32 %v2092, 7
    %v2094 = vsub.s32 0, %v2093
    %v2095 = vrot.slane %v2090, %v2094
    %v2096 = vlaneseq
    %v2097 = vshrl.u32 %v2096, 7
    %v2098 = vsub.s32 1, %v2097
    %v2099 = vrot.slane %v2090, %v2098
    %v2166 = vunpack.c.l.b16 %v2026
    %v2167 = vunpack.c.h.b16 %v2026
    %v2168 = vunpack.c.l.b16 %v2027
    %v2169 = vunpack.c.h.b16 %v2027
    %v2170 = vunpack.c.l.b16 %v2028
    %v2171 = vunpack.c.h.b16 %v2028
    %v2172 = vunpack.c.l.b16 %v2029
    %v2173 = vunpack.c.h.b16 %v2029
    %v2174 = vunpack.c.l.b16 %v2030
    %v2175 = vunpack.c.h.b16 %v2030
    %v2176 = vunpack.c.l.b16 %v2031
    %v2177 = vunpack.c.h.b16 %v2031
    %v2178 = vunpack.c.l.b16 %v2032
    %v2179 = vunpack.c.h.b16 %v2032
    %v2180 = vunpack.c.l.b16 %v2033
    %v2181 = vunpack.c.h.b16 %v2033
    %v2182 = vunpack.c.l.b16 %v2034
    %v2183 = vunpack.c.h.b16 %v2034
    %v2184 = vunpack.c.l.b16 %v2035
    %v2185 = vunpack.c.h.b16 %v2035
    %v2186 = vunpack.c.l.b16 %v2036
    %v2187 = vunpack.c.h.b16 %v2036
    %v2188 = vunpack.c.l.b16 %v2037
    %v2189 = vunpack.c.h.b16 %v2037
    %v2190 = vunpack.c.l.b16 %v2038
    %v2191 = vunpack.c.h.b16 %v2038
    %v2192 = vunpack.c.l.b16 %v2039
    %v2193 = vunpack.c.h.b16 %v2039
    %v2194 = vunpack.c.l.b16 %v2040
    %v2195 = vunpack.c.h.b16 %v2040
    %v2196 = vunpack.c.l.b16 %v2041
    %v2197 = vunpack.c.h.b16 %v2041
    %v2198 = vunpack.c.l.b16 %v2042
    %v2199 = vunpack.c.h.b16 %v2042
    %v2200 = vunpack.c.l.b16 %v2043
    %v2201 = vunpack.c.h.b16 %v2043
    %v2202 = vunpack.c.l.b16 %v2044
    %v2203 = vunpack.c.h.b16 %v2044
    %v2204 = vunpack.c.l.b16 %v2045
    %v2205 = vunpack.c.h.b16 %v2045
    %v2206 = vunpack.c.l.b16 %v2046
    %v2207 = vunpack.c.h.b16 %v2046
    %v2208 = vunpack.c.l.b16 %v2047
    %v2209 = vunpack.c.h.b16 %v2047
    %v2210 = vunpack.c.l.b16 %v2048
    %v2211 = vunpack.c.h.b16 %v2048
    %v2212 = vunpack.c.l.b16 %v2049
    %v2213 = vunpack.c.h.b16 %v2049
    %v2214 = vunpack.c.l.b16 %v2050
    %v2215 = vunpack.c.h.b16 %v2050
    %v2216 = vunpack.c.l.b16 %v2051
    %v2217 = vunpack.c.h.b16 %v2051
    %v2218 = vunpack.c.l.b16 %v2052
    %v2219 = vunpack.c.h.b16 %v2052
    %v2220 = vunpack.c.l.b16 %v2053
    %v2221 = vunpack.c.h.b16 %v2053
    %v2222 = vunpack.c.l.b16 %v2054
    %v2223 = vunpack.c.h.b16 %v2054
    %v2224 = vunpack.c.l.b16 %v2055
    %v2225 = vunpack.c.h.b16 %v2055
    %v2226 = vunpack.c.l.b16 %v2056
    %v2227 = vunpack.c.h.b16 %v2056
    %v2228 = vunpack.c.l.b16 %v2057
    %v2229 = vunpack.c.h.b16 %v2057
    %v2230 = vunpack.c.l.b16 %v2058
    %v2231 = vunpack.c.h.b16 %v2058
    %v2232 = vunpack.c.l.b16 %v2059
    %v2233 = vunpack.c.h.b16 %v2059
    %v2234 = vunpack.c.l.b16 %v2060
    %v2235 = vunpack.c.h.b16 %v2060
    %v2236 = vunpack.c.l.b16 %v2061
    %v2237 = vunpack.c.h.b16 %v2061
    %v2238 = vunpack.c.l.b16 %v2062
    %v2239 = vunpack.c.h.b16 %v2062
    %v2240 = vunpack.c.l.b16 %v2063
    %v2241 = vunpack.c.h.b16 %v2063
    %v2242 = vunpack.c.l.b16 %v2064
    %v2243 = vunpack.c.h.b16 %v2064
    %v2244 = vunpack.c.l.b16 %v2065
    %v2245 = vunpack.c.h.b16 %v2065
    %v2246 = vunpack.c.l.b16 %v2066
    %v2247 = vunpack.c.h.b16 %v2066
    %v2248 = vunpack.c.l.b16 %v2067
    %v2249 = vunpack.c.h.b16 %v2067
    %v2250 = vunpack.c.l.b16 %v2068
    %v2251 = vunpack.c.h.b16 %v2068
    %v2252 = vunpack.c.l.b16 %v2069
    %v2253 = vunpack.c.h.b16 %v2069
    %v2254 = vunpack.c.l.b16 %v2070
    %v2255 = vunpack.c.h.b16 %v2070
    %v2256 = vunpack.c.l.b16 %v2071
    %v2257 = vunpack.c.h.b16 %v2071
    %v2258 = vunpack.c.l.b16 %v2072
    %v2259 = vunpack.c.h.b16 %v2072
    %v2260 = vunpack.c.l.b16 %v2073
    %v2261 = vunpack.c.h.b16 %v2073
    %v2262 = vunpack.c.l.b16 %v2074
    %v2263 = vunpack.c.h.b16 %v2074
    %v2264 = vunpack.c.l.b16 %v2075
    %v2265 = vunpack.c.h.b16 %v2075
    %v2266 = vunpack.c.l.b16 %v2076
    %v2267 = vunpack.c.h.b16 %v2076
    %v2268 = vunpack.c.l.b16 %v2077
    %v2269 = vunpack.c.h.b16 %v2077
    %v2270 = vunpack.c.l.b16 %v2078
    %v2271 = vunpack.c.h.b16 %v2078
    %v2272 = vunpack.c.l.b16 %v2079
    %v2273 = vunpack.c.h.b16 %v2079
    %v2274 = vunpack.c.l.b16 %v2080
    %v2275 = vunpack.c.h.b16 %v2080
    %v2276 = vunpack.c.l.b16 %v2081
    %v2277 = vunpack.c.h.b16 %v2081
    %v2278 = vunpack.c.l.b16 %v2082
    %v2279 = vunpack.c.h.b16 %v2082
    %v2280 = vunpack.c.l.b16 %v2083
    %v2281 = vunpack.c.h.b16 %v2083
    %v2282 = vunpack.c.l.b16 %v2084
    %v2283 = vunpack.c.h.b16 %v2084
    %v2284 = vunpack.c.l.b16 %v2085
    %v2285 = vunpack.c.h.b16 %v2085
    %v2286 = vunpack.c.l.b16 %v2086
    %v2287 = vunpack.c.h.b16 %v2086
    %v2288 = vunpack.c.l.b16 %v2087
    %v2289 = vunpack.c.h.b16 %v2087
    %v2290 = vunpack.c.l.b16 %v2088
    %v2291 = vunpack.c.h.b16 %v2088
    %v2292 = vunpack.c.l.b16 %v2089
    %v2293 = vunpack.c.h.b16 %v2089
    %v2294 = vpack.c.b16 %v2168, %v2166
    %v2295 = vpack.c.b16 %v2169, %v2167
    %v2296 = vpack.c.b16 %v2172, %v2170
    %v2297 = vpack.c.b16 %v2173, %v2171
    %v2298 = vpack.c.b16 %v2176, %v2174
    %v2299 = vpack.c.b16 %v2177, %v2175
    %v2300 = vpack.c.b16 %v2180, %v2178
    %v2301 = vpack.c.b16 %v2181, %v2179
    %v2302 = vpack.c.b16 %v2184, %v2182
    %v2303 = vpack.c.b16 %v2185, %v2183
    %v2304 = vpack.c.b16 %v2188, %v2186
    %v2305 = vpack.c.b16 %v2189, %v2187
    %v2306 = vpack.c.b16 %v2192, %v2190
    %v2307 = vpack.c.b16 %v2193, %v2191
    %v2308 = vpack.c.b16 %v2196, %v2194
    %v2309 = vpack.c.b16 %v2197, %v2195
    %v2310 = vpack.c.b16 %v2200, %v2198
    %v2311 = vpack.c.b16 %v2201, %v2199
    %v2312 = vpack.c.b16 %v2204, %v2202
    %v2313 = vpack.c.b16 %v2205, %v2203
    %v2314 = vpack.c.b16 %v2208, %v2206
    %v2315 = vpack.c.b16 %v2209, %v2207
    %v2316 = vpack.c.b16 %v2212, %v2210
    %v2317 = vpack.c.b16 %v2213, %v2211
    %v2318 = vpack.c.b16 %v2216, %v2214
    %v2319 = vpack.c.b16 %v2217, %v2215
    %v2320 = vpack.c.b16 %v2220, %v2218
    %v2321 = vpack.c.b16 %v2221, %v2219
    %v2322 = vpack.c.b16 %v2224, %v2222
    %v2323 = vpack.c.b16 %v2225, %v2223
    %v2324 = vpack.c.b16 %v2228, %v2226
    %v2325 = vpack.c.b16 %v2229, %v2227
    %v2326 = vpack.c.b16 %v2232, %v2230
    %v2327 = vpack.c.b16 %v2233, %v2231
    %v2328 = vpack.c.b16 %v2236, %v2234
    %v2329 = vpack.c.b16 %v2237, %v2235
    %v2330 = vpack.c.b16 %v2240, %v2238
    %v2331 = vpack.c.b16 %v2241, %v2239
    %v2332 = vpack.c.b16 %v2244, %v2242
    %v2333 = vpack.c.b16 %v2245, %v2243
    %v2334 = vpack.c.b16 %v2248, %v2246
    %v2335 = vpack.c.b16 %v2249, %v2247
    %v2336 = vpack.c.b16 %v2252, %v2250
    %v2337 = vpack.c.b16 %v2253, %v2251
    %v2338 = vpack.c.b16 %v2256, %v2254
    %v2339 = vpack.c.b16 %v2257, %v2255
    %v2340 = vpack.c.b16 %v2260, %v2258
    %v2341 = vpack.c.b16 %v2261, %v2259
    %v2342 = vpack.c.b16 %v2264, %v2262
    %v2343 = vpack.c.b16 %v2265, %v2263
    %v2344 = vpack.c.b16 %v2268, %v2266
    %v2345 = vpack.c.b16 %v2269, %v2267
    %v2346 = vpack.c.b16 %v2272, %v2270
    %v2347 = vpack.c.b16 %v2273, %v2271
    %v2348 = vpack.c.b16 %v2276, %v2274
    %v2349 = vpack.c.b16 %v2277, %v2275
    %v2350 = vpack.c.b16 %v2280, %v2278
    %v2351 = vpack.c.b16 %v2281, %v2279
    %v2352 = vpack.c.b16 %v2284, %v2282
    %v2353 = vpack.c.b16 %v2285, %v2283
    %v2354 = vpack.c.b16 %v2288, %v2286
    %v2355 = vpack.c.b16 %v2289, %v2287
    %v2356 = vpack.c.b16 %v2292, %v2290
    %v2357 = vpack.c.b16 %v2293, %v2291
    %2422 = vmatprep.subr.bf16.mxu0 %v2295
    %2423 = vmatpush1.bf16.msra.mxu0 %v2294
    %2424 = vmatprep.subr.bf16.mxu0 %v2297
    %2425 = vmatpush1.bf16.msra.mxu0 %v2296
    %2426 = vmatprep.subr.bf16.mxu0 %v2299
    %2427 = vmatpush1.bf16.msra.mxu0 %v2298
    %2428 = vmatprep.subr.bf16.mxu0 %v2301
    %2429 = vmatpush1.bf16.msra.mxu0 %v2300
    %2430 = vmatprep.subr.bf16.mxu0 %v2303
    %2431 = vmatpush1.bf16.msra.mxu0 %v2302
    %2432 = vmatprep.subr.bf16.mxu0 %v2305
    %2433 = vmatpush1.bf16.msra.mxu0 %v2304
    %2434 = vmatprep.subr.bf16.mxu0 %v2307
    %2435 = vmatpush1.bf16.msra.mxu0 %v2306
    %2436 = vmatprep.subr.bf16.mxu0 %v2309
    %2437 = vmatpush1.bf16.msra.mxu0 %v2308
    %2438 = vmatprep.subr.bf16.mxu0 %v2311
    %2439 = vmatpush1.bf16.msra.mxu0 %v2310
    %2440 = vmatprep.subr.bf16.mxu0 %v2313
    %2441 = vmatpush1.bf16.msra.mxu0 %v2312
    %2442 = vmatprep.subr.bf16.mxu0 %v2315
    %2443 = vmatpush1.bf16.msra.mxu0 %v2314
    %2444 = vmatprep.subr.bf16.mxu0 %v2317
    %2445 = vmatpush1.bf16.msra.mxu0 %v2316
    %2446 = vmatprep.subr.bf16.mxu0 %v2319
    %2447 = vmatpush1.bf16.msra.mxu0 %v2318
    %2448 = vmatprep.subr.bf16.mxu0 %v2321
    %2449 = vmatpush1.bf16.msra.mxu0 %v2320
    %2450 = vmatprep.subr.bf16.mxu0 %v2323
    %2451 = vmatpush1.bf16.msra.mxu0 %v2322
    %2452 = vmatprep.subr.bf16.mxu0 %v2325
    %2453 = vmatpush1.bf16.msra.mxu0 %v2324
    %2454 = vmatprep.mubr.bf16.mxu0 %v2023
    %2455 = vmatmul.mubr.bf16.gmra.mrb[0].mxu0 %v2022
    %v2456 = vpop.f32.mrb[0].mxu0
    %v2457 = vadd.f32 %v2095, %v2456
    %v2458 = vpop.f32.mrb[0].mxu0
    %v2459 = vadd.f32 %v2099, %v2458
    %v2460 = vpop.f32.mrb[0].mxu0
    %v2461 = vpop.f32.mrb[0].mxu0
    %2462 = vdwg.mxu0
    %2463 = vmatprep.subr.bf16.mxu0 %v2327
    %2464 = vmatpush1.bf16.msra.mxu0 %v2326
    %2465 = vmatprep.subr.bf16.mxu0 %v2329
    %2466 = vmatpush1.bf16.msra.mxu0 %v2328
    %2467 = vmatprep.subr.bf16.mxu0 %v2331
    %2468 = vmatpush1.bf16.msra.mxu0 %v2330
    %2469 = vmatprep.subr.bf16.mxu0 %v2333
    %2470 = vmatpush1.bf16.msra.mxu0 %v2332
    %2471 = vmatprep.subr.bf16.mxu0 %v2335
    %2472 = vmatpush1.bf16.msra.mxu0 %v2334
    %2473 = vmatprep.subr.bf16.mxu0 %v2337
    %2474 = vmatpush1.bf16.msra.mxu0 %v2336
    %2475 = vmatprep.subr.bf16.mxu0 %v2339
    %2476 = vmatpush1.bf16.msra.mxu0 %v2338
    %2477 = vmatprep.subr.bf16.mxu0 %v2341
    %2478 = vmatpush1.bf16.msra.mxu0 %v2340
    %2479 = vmatprep.subr.bf16.mxu0 %v2343
    %2480 = vmatpush1.bf16.msra.mxu0 %v2342
    %2481 = vmatprep.subr.bf16.mxu0 %v2345
    %2482 = vmatpush1.bf16.msra.mxu0 %v2344
    %2483 = vmatprep.subr.bf16.mxu0 %v2347
    %2484 = vmatpush1.bf16.msra.mxu0 %v2346
    %2485 = vmatprep.subr.bf16.mxu0 %v2349
    %2486 = vmatpush1.bf16.msra.mxu0 %v2348
    %2487 = vmatprep.subr.bf16.mxu0 %v2351
    %2488 = vmatpush1.bf16.msra.mxu0 %v2350
    %2489 = vmatprep.subr.bf16.mxu0 %v2353
    %2490 = vmatpush1.bf16.msra.mxu0 %v2352
    %2491 = vmatprep.subr.bf16.mxu0 %v2355
    %2492 = vmatpush1.bf16.msra.mxu0 %v2354
    %2493 = vmatprep.subr.bf16.mxu0 %v2357
    %2494 = vmatpush1.bf16.msra.mxu0 %v2356
    %2495 = vmatprep.mubr.bf16.mxu0 %v2025
    %2496 = vmatmul.mubr.bf16.gmra.mrb[0].mxu0 %v2024
    %v2497 = vpop.f32.mrb[0].mxu0
    %v2498 = vadd.f32 %v2457, %v2497
    %v2499 = vpop.f32.mrb[0].mxu0
    %v2500 = vadd.f32 %v2459, %v2499
    %v2501 = vpop.f32.mrb[0].mxu0
    %v2502 = vpop.f32.mrb[0].mxu0
    %2503 = vdwg.mxu0
    %v2504 = vmax.f32 %v2498, 0.0
    %v2505 = vmax.f32 %v2500, 0.0
    %v2506 = vpack.c.bf16 %v2504, %v2504
    %v2507 = vpack.c.bf16 %v2505, %v2505
    %v2508 = vld [vmem:[%s5] sm:$0xf]
    %v2509 = vld [vmem:[%s5 + $0x4] sm:$0xf]
    %v2510 = vld [vmem:[%s5 + $0x8] sm:$0xf]
    %v2511 = vld [vmem:[%s5 + $0xc] sm:$0xf]
    %v2512 = vld [vmem:[%s5 + $0x10] sm:$0xf]
    %v2513 = vld [vmem:[%s5 + $0x14] sm:$0xf]
    %v2514 = vld [vmem:[%s5 + $0x18] sm:$0xf]
    %v2515 = vld [vmem:[%s5 + $0x1c] sm:$0xf]
    %v2516 = vld [vmem:[%s5 + $0x20] sm:$0xf]
    %v2517 = vld [vmem:[%s5 + $0x24] sm:$0xf]
    %v2518 = vld [vmem:[%s5 + $0x28] sm:$0xf]
    %v2519 = vld [vmem:[%s5 + $0x2c] sm:$0xf]
    %v2520 = vld [vmem:[%s5 + $0x30] sm:$0xf]
    %v2521 = vld [vmem:[%s5 + $0x34] sm:$0xf]
    %v2522 = vld [vmem:[%s5 + $0x38] sm:$0xf]
    %v2523 = vld [vmem:[%s5 + $0x3c] sm:$0xf]
    %v2524 = vld [vmem:[%s5 + $0x40] sm:$0xf]
    %v2525 = vld [vmem:[%s5 + $0x44] sm:$0xf]
    %v2526 = vld [vmem:[%s5 + $0x48] sm:$0xf]
    %v2527 = vld [vmem:[%s5 + $0x4c] sm:$0xf]
    %v2528 = vld [vmem:[%s5 + $0x50] sm:$0xf]
    %v2529 = vld [vmem:[%s5 + $0x54] sm:$0xf]
    %v2530 = vld [vmem:[%s5 + $0x58] sm:$0xf]
    %v2531 = vld [vmem:[%s5 + $0x5c] sm:$0xf]
    %v2532 = vld [vmem:[%s5 + $0x60] sm:$0xf]
    %v2533 = vld [vmem:[%s5 + $0x64] sm:$0xf]
    %v2534 = vld [vmem:[%s5 + $0x68] sm:$0xf]
    %v2535 = vld [vmem:[%s5 + $0x6c] sm:$0xf]
    %v2536 = vld [vmem:[%s5 + $0x70] sm:$0xf]
    %v2537 = vld [vmem:[%s5 + $0x74] sm:$0xf]
    %v2538 = vld [vmem:[%s5 + $0x78] sm:$0xf]
    %v2539 = vld [vmem:[%s5 + $0x7c] sm:$0xf]
    %v2540 = vld [vmem:[%s6] sm:$0x1]
    %v2542 = vlaneseq
    %v2543 = vshrl.u32 %v2542, 7
    %v2544 = vsub.s32 0, %v2543
    %v2545 = vrot.slane %v2540, %v2544
    %v2579 = vunpack.c.l.b16 %v2508
    %v2580 = vunpack.c.l.b16 %v2509
    %v2581 = vunpack.c.l.b16 %v2510
    %v2582 = vunpack.c.l.b16 %v2511
    %v2583 = vunpack.c.l.b16 %v2512
    %v2584 = vunpack.c.l.b16 %v2513
    %v2585 = vunpack.c.l.b16 %v2514
    %v2586 = vunpack.c.l.b16 %v2515
    %v2587 = vunpack.c.l.b16 %v2516
    %v2588 = vunpack.c.l.b16 %v2517
    %v2589 = vunpack.c.l.b16 %v2518
    %v2590 = vunpack.c.l.b16 %v2519
    %v2591 = vunpack.c.l.b16 %v2520
    %v2592 = vunpack.c.l.b16 %v2521
    %v2593 = vunpack.c.l.b16 %v2522
    %v2594 = vunpack.c.l.b16 %v2523
    %v2595 = vunpack.c.l.b16 %v2524
    %v2596 = vunpack.c.l.b16 %v2525
    %v2597 = vunpack.c.l.b16 %v2526
    %v2598 = vunpack.c.l.b16 %v2527
    %v2599 = vunpack.c.l.b16 %v2528
    %v2600 = vunpack.c.l.b16 %v2529
    %v2601 = vunpack.c.l.b16 %v2530
    %v2602 = vunpack.c.l.b16 %v2531
    %v2603 = vunpack.c.l.b16 %v2532
    %v2604 = vunpack.c.l.b16 %v2533
    %v2605 = vunpack.c.l.b16 %v2534
    %v2606 = vunpack.c.l.b16 %v2535
    %v2607 = vunpack.c.l.b16 %v2536
    %v2608 = vunpack.c.l.b16 %v2537
    %v2609 = vunpack.c.l.b16 %v2538
    %v2610 = vunpack.c.l.b16 %v2539
    %v2611 = vpack.c.b16 %v2580, %v2579
    %v2612 = vpack.c.b16 %v2582, %v2581
    %v2613 = vpack.c.b16 %v2584, %v2583
    %v2614 = vpack.c.b16 %v2586, %v2585
    %v2615 = vpack.c.b16 %v2588, %v2587
    %v2616 = vpack.c.b16 %v2590, %v2589
    %v2617 = vpack.c.b16 %v2592, %v2591
    %v2618 = vpack.c.b16 %v2594, %v2593
    %v2619 = vpack.c.b16 %v2596, %v2595
    %v2620 = vpack.c.b16 %v2598, %v2597
    %v2621 = vpack.c.b16 %v2600, %v2599
    %v2622 = vpack.c.b16 %v2602, %v2601
    %v2623 = vpack.c.b16 %v2604, %v2603
    %v2624 = vpack.c.b16 %v2606, %v2605
    %v2625 = vpack.c.b16 %v2608, %v2607
    %v2626 = vpack.c.b16 %v2610, %v2609
    %2643 = vmatprep.subr.bf16.mxu0 0
    %2644 = vmatpush1.bf16.msra.mxu0 %v2611
    %2645 = vmatprep.subr.bf16.mxu0 0
    %2646 = vmatpush1.bf16.msra.mxu0 %v2612
    %2647 = vmatprep.subr.bf16.mxu0 0
    %2648 = vmatpush1.bf16.msra.mxu0 %v2613
    %2649 = vmatprep.subr.bf16.mxu0 0
    %2650 = vmatpush1.bf16.msra.mxu0 %v2614
    %2651 = vmatprep.subr.bf16.mxu0 0
    %2652 = vmatpush1.bf16.msra.mxu0 %v2615
    %2653 = vmatprep.subr.bf16.mxu0 0
    %2654 = vmatpush1.bf16.msra.mxu0 %v2616
    %2655 = vmatprep.subr.bf16.mxu0 0
    %2656 = vmatpush1.bf16.msra.mxu0 %v2617
    %2657 = vmatprep.subr.bf16.mxu0 0
    %2658 = vmatpush1.bf16.msra.mxu0 %v2618
    %2659 = vmatprep.subr.bf16.mxu0 0
    %2660 = vmatpush1.bf16.msra.mxu0 %v2619
    %2661 = vmatprep.subr.bf16.mxu0 0
    %2662 = vmatpush1.bf16.msra.mxu0 %v2620
    %2663 = vmatprep.subr.bf16.mxu0 0
    %2664 = vmatpush1.bf16.msra.mxu0 %v2621
    %2665 = vmatprep.subr.bf16.mxu0 0
    %2666 = vmatpush1.bf16.msra.mxu0 %v2622
    %2667 = vmatprep.subr.bf16.mxu0 0
    %2668 = vmatpush1.bf16.msra.mxu0 %v2623
    %2669 = vmatprep.subr.bf16.mxu0 0
    %2670 = vmatpush1.bf16.msra.mxu0 %v2624
    %2671 = vmatprep.subr.bf16.mxu0 0
    %2672 = vmatpush1.bf16.msra.mxu0 %v2625
    %2673 = vmatprep.subr.bf16.mxu0 0
    %2674 = vmatpush1.bf16.msra.mxu0 %v2626
    %2675 = vmatprep.mubr.bf16.mxu0 %v2507
    %2676 = vmatmul.mubr.bf16.gmra.mrb[0].mxu0 %v2506
    %v2677 = vpop.f32.mrb[0].mxu0
    %v2678 = vadd.f32 %v2545, %v2677
    %v2679 = vpop.f32.mrb[0].mxu0
    %v2680 = vpop.f32.mrb[0].mxu0
    %v2681 = vpop.f32.mrb[0].mxu0
    %2682 = vdwg.mxu0
    %v2683 = vpack.c.bf16 %v2678, %v2678
    %v2684 = vld [vmem:[%s7] sm:$0xff]
    %v2685 = vld [vmem:[%s7 + $0x8] sm:$0xff]
    %v2686 = vld [vmem:[%s7 + $0x10] sm:$0xff]
    %v2687 = vld [vmem:[%s7 + $0x18] sm:$0xff]
    %v2688 = vld [vmem:[%s7 + $0x20] sm:$0xff]
    %v2689 = vld [vmem:[%s7 + $0x28] sm:$0xff]
    %v2690 = vld [vmem:[%s7 + $0x30] sm:$0xff]
    %v2691 = vld [vmem:[%s7 + $0x38] sm:$0xff]
    %v2692 = vld [vmem:[%s7 + $0x40] sm:$0xff]
    %v2693 = vld [vmem:[%s7 + $0x48] sm:$0xff]
    %v2694 = vld [vmem:[%s7 + $0x50] sm:$0xff]
    %v2695 = vld [vmem:[%s7 + $0x58] sm:$0xff]
    %v2696 = vld [vmem:[%s7 + $0x60] sm:$0xff]
    %v2697 = vld [vmem:[%s7 + $0x68] sm:$0xff]
    %v2698 = vld [vmem:[%s7 + $0x70] sm:$0xff]
    %v2699 = vld [vmem:[%s7 + $0x78] sm:$0xff]
    %v2700 = vld [vmem:[%s8] sm:$0x3]
    %v2702 = vlaneseq
    %v2703 = vshrl.u32 %v2702, 7
    %v2704 = vsub.s32 0, %v2703
    %v2705 = vrot.slane %v2700, %v2704
    %v2706 = vlaneseq
    %v2707 = vshrl.u32 %v2706, 7
    %v2708 = vsub.s32 1, %v2707
    %v2709 = vrot.slane %v2700, %v2708
    %v2728 = vunpack.c.l.b16 %v2684
    %v2729 = vunpack.c.h.b16 %v2684
    %v2730 = vunpack.c.l.b16 %v2685
    %v2731 = vunpack.c.h.b16 %v2685
    %v2732 = vunpack.c.l.b16 %v2686
    %v2733 = vunpack.c.h.b16 %v2686
    %v2734 = vunpack.c.l.b16 %v2687
    %v2735 = vunpack.c.h.b16 %v2687
    %v2736 = vunpack.c.l.b16 %v2688
    %v2737 = vunpack.c.h.b16 %v2688
    %v2738 = vunpack.c.l.b16 %v2689
    %v2739 = vunpack.c.h.b16 %v2689
    %v2740 = vunpack.c.l.b16 %v2690
    %v2741 = vunpack.c.h.b16 %v2690
    %v2742 = vunpack.c.l.b16 %v2691
    %v2743 = vunpack.c.h.b16 %v2691
    %v2744 = vunpack.c.l.b16 %v2692
    %v2745 = vunpack.c.h.b16 %v2692
    %v2746 = vunpack.c.l.b16 %v2693
    %v2747 = vunpack.c.h.b16 %v2693
    %v2748 = vunpack.c.l.b16 %v2694
    %v2749 = vunpack.c.h.b16 %v2694
    %v2750 = vunpack.c.l.b16 %v2695
    %v2751 = vunpack.c.h.b16 %v2695
    %v2752 = vunpack.c.l.b16 %v2696
    %v2753 = vunpack.c.h.b16 %v2696
    %v2754 = vunpack.c.l.b16 %v2697
    %v2755 = vunpack.c.h.b16 %v2697
    %v2756 = vunpack.c.l.b16 %v2698
    %v2757 = vunpack.c.h.b16 %v2698
    %v2758 = vunpack.c.l.b16 %v2699
    %v2759 = vunpack.c.h.b16 %v2699
    %v2760 = vpack.c.b16 %v2730, %v2728
    %v2761 = vpack.c.b16 %v2731, %v2729
    %v2762 = vpack.c.b16 %v2734, %v2732
    %v2763 = vpack.c.b16 %v2735, %v2733
    %v2764 = vpack.c.b16 %v2738, %v2736
    %v2765 = vpack.c.b16 %v2739, %v2737
    %v2766 = vpack.c.b16 %v2742, %v2740
    %v2767 = vpack.c.b16 %v2743, %v2741
    %v2768 = vpack.c.b16 %v2746, %v2744
    %v2769 = vpack.c.b16 %v2747, %v2745
    %v2770 = vpack.c.b16 %v2750, %v2748
    %v2771 = vpack.c.b16 %v2751, %v2749
    %v2772 = vpack.c.b16 %v2754, %v2752
    %v2773 = vpack.c.b16 %v2755, %v2753
    %v2774 = vpack.c.b16 %v2758, %v2756
    %v2775 = vpack.c.b16 %v2759, %v2757
    %2792 = vmatprep.subr.bf16.mxu0 %v2761
    %2793 = vmatpush1.bf16.msra.mxu0 %v2760
    %2794 = vmatprep.subr.bf16.mxu0 %v2763
    %2795 = vmatpush1.bf16.msra.mxu0 %v2762
    %2796 = vmatprep.subr.bf16.mxu0 %v2765
    %2797 = vmatpush1.bf16.msra.mxu0 %v2764
    %2798 = vmatprep.subr.bf16.mxu0 %v2767
    %2799 = vmatpush1.bf16.msra.mxu0 %v2766
    %2800 = vmatprep.subr.bf16.mxu0 %v2769
    %2801 = vmatpush1.bf16.msra.mxu0 %v2768
    %2802 = vmatprep.subr.bf16.mxu0 %v2771
    %2803 = vmatpush1.bf16.msra.mxu0 %v2770
    %2804 = vmatprep.subr.bf16.mxu0 %v2773
    %2805 = vmatpush1.bf16.msra.mxu0 %v2772
    %2806 = vmatprep.subr.bf16.mxu0 %v2775
    %2807 = vmatpush1.bf16.msra.mxu0 %v2774
    %2808 = vmatprep.subr.bf16.mxu0 0
    %2809 = vmatpush1.bf16.msra.mxu0 0
    %2810 = vmatprep.subr.bf16.mxu0 0
    %2811 = vmatpush1.bf16.msra.mxu0 0
    %2812 = vmatprep.subr.bf16.mxu0 0
    %2813 = vmatpush1.bf16.msra.mxu0 0
    %2814 = vmatprep.subr.bf16.mxu0 0
    %2815 = vmatpush1.bf16.msra.mxu0 0
    %2816 = vmatprep.subr.bf16.mxu0 0
    %2817 = vmatpush1.bf16.msra.mxu0 0
    %2818 = vmatprep.subr.bf16.mxu0 0
    %2819 = vmatpush1.bf16.msra.mxu0 0
    %2820 = vmatprep.subr.bf16.mxu0 0
    %2821 = vmatpush1.bf16.msra.mxu0 0
    %2822 = vmatprep.subr.bf16.mxu0 0
    %2823 = vmatpush1.bf16.msra.mxu0 0
    %2824 = vmatprep.mubr.bf16.mxu0 0
    %2825 = vmatmul.mubr.bf16.gmra.mrb[0].mxu0 %v2683
    %v2826 = vpop.f32.mrb[0].mxu0
    %v2827 = vadd.f32 %v2705, %v2826
    %v2828 = vpop.f32.mrb[0].mxu0
    %v2829 = vadd.f32 %v2709, %v2828
    %v2830 = vpop.f32.mrb[0].mxu0
    %v2831 = vpop.f32.mrb[0].mxu0
    %2832 = vdwg.mxu0
    %v2833 = vmax.f32 %v2827, 0.0
    %v2834 = vmax.f32 %v2829, 0.0
    %v2835 = vpack.c.bf16 %v2833, %v2833
    %v2836 = vpack.c.bf16 %v2834, %v2834
    %v2837 = vld [vmem:[#allocation6] sm:$0xff]
    %v2838 = vld [vmem:[#allocation6 + $0x8] sm:$0xff]
    %v2839 = vld [vmem:[#allocation6 + $0x10] sm:$0xff]
    %v2840 = vld [vmem:[#allocation6 + $0x18] sm:$0xff]
    %v2841 = vld [vmem:[#allocation6 + $0x20] sm:$0xff]
    %v2842 = vld [vmem:[#allocation6 + $0x28] sm:$0xff]
    %v2843 = vld [vmem:[#allocation6 + $0x30] sm:$0xff]
    %v2844 = vld [vmem:[#allocation6 + $0x38] sm:$0xff]
    %v2845 = vld [vmem:[#allocation6 + $0x40] sm:$0xff]
    %v2846 = vld [vmem:[#allocation6 + $0x48] sm:$0xff]
    %v2847 = vld [vmem:[#allocation6 + $0x50] sm:$0xff]
    %v2848 = vld [vmem:[#allocation6 + $0x58] sm:$0xff]
    %v2849 = vld [vmem:[#allocation6 + $0x60] sm:$0xff]
    %v2850 = vld [vmem:[#allocation6 + $0x68] sm:$0xff]
    %v2851 = vld [vmem:[#allocation6 + $0x70] sm:$0xff]
    %v2852 = vld [vmem:[#allocation6 + $0x78] sm:$0xff]
    %v2853 = vld [vmem:[#allocation6 + $0x80] sm:$0xff]
    %v2854 = vld [vmem:[#allocation6 + $0x88] sm:$0xff]
    %v2855 = vld [vmem:[#allocation6 + $0x90] sm:$0xff]
    %v2856 = vld [vmem:[#allocation6 + $0x98] sm:$0xff]
    %v2857 = vld [vmem:[#allocation6 + $0xa0] sm:$0xff]
    %v2858 = vld [vmem:[#allocation6 + $0xa8] sm:$0xff]
    %v2859 = vld [vmem:[#allocation6 + $0xb0] sm:$0xff]
    %v2860 = vld [vmem:[#allocation6 + $0xb8] sm:$0xff]
    %v2861 = vld [vmem:[#allocation6 + $0xc0] sm:$0xff]
    %v2862 = vld [vmem:[#allocation6 + $0xc8] sm:$0xff]
    %v2863 = vld [vmem:[#allocation6 + $0xd0] sm:$0xff]
    %v2864 = vld [vmem:[#allocation6 + $0xd8] sm:$0xff]
    %v2865 = vld [vmem:[#allocation6 + $0xe0] sm:$0xff]
    %v2866 = vld [vmem:[#allocation6 + $0xe8] sm:$0xff]
    %v2867 = vld [vmem:[#allocation6 + $0xf0] sm:$0xff]
    %v2868 = vld [vmem:[#allocation6 + $0xf8] sm:$0xff]
    %v2869 = vld [vmem:[#allocation6 + $0x100] sm:$0xff]
    %v2870 = vld [vmem:[#allocation6 + $0x108] sm:$0xff]
    %v2871 = vld [vmem:[#allocation6 + $0x110] sm:$0xff]
    %v2872 = vld [vmem:[#allocation6 + $0x118] sm:$0xff]
    %v2873 = vld [vmem:[#allocation6 + $0x120] sm:$0xff]
    %v2874 = vld [vmem:[#allocation6 + $0x128] sm:$0xff]
    %v2875 = vld [vmem:[#allocation6 + $0x130] sm:$0xff]
    %v2876 = vld [vmem:[#allocation6 + $0x138] sm:$0xff]
    %v2877 = vld [vmem:[#allocation6 + $0x140] sm:$0xff]
    %v2878 = vld [vmem:[#allocation6 + $0x148] sm:$0xff]
    %v2879 = vld [vmem:[#allocation6 + $0x150] sm:$0xff]
    %v2880 = vld [vmem:[#allocation6 + $0x158] sm:$0xff]
    %v2881 = vld [vmem:[#allocation6 + $0x160] sm:$0xff]
    %v2882 = vld [vmem:[#allocation6 + $0x168] sm:$0xff]
    %v2883 = vld [vmem:[#allocation6 + $0x170] sm:$0xff]
    %v2884 = vld [vmem:[#allocation6 + $0x178] sm:$0xff]
    %v2885 = vld [vmem:[#allocation6 + $0x180] sm:$0xff]
    %v2886 = vld [vmem:[#allocation6 + $0x188] sm:$0xff]
    %v2887 = vld [vmem:[#allocation6 + $0x190] sm:$0xff]
    %v2888 = vld [vmem:[#allocation6 + $0x198] sm:$0xff]
    %v2889 = vld [vmem:[#allocation6 + $0x1a0] sm:$0xff]
    %v2890 = vld [vmem:[#allocation6 + $0x1a8] sm:$0xff]
    %v2891 = vld [vmem:[#allocation6 + $0x1b0] sm:$0xff]
    %v2892 = vld [vmem:[#allocation6 + $0x1b8] sm:$0xff]
    %v2893 = vld [vmem:[#allocation6 + $0x1c0] sm:$0xff]
    %v2894 = vld [vmem:[#allocation6 + $0x1c8] sm:$0xff]
    %v2895 = vld [vmem:[#allocation6 + $0x1d0] sm:$0xff]
    %v2896 = vld [vmem:[#allocation6 + $0x1d8] sm:$0xff]
    %v2897 = vld [vmem:[#allocation6 + $0x1e0] sm:$0xff]
    %v2898 = vld [vmem:[#allocation6 + $0x1e8] sm:$0xff]
    %v2899 = vld [vmem:[#allocation6 + $0x1f0] sm:$0xff]
    %v2900 = vld [vmem:[#allocation6 + $0x1f8] sm:$0xff]
    %v2901 = vld [vmem:[%s10] sm:$0xf]
    %v2903 = vlaneseq
    %v2904 = vshrl.u32 %v2903, 7
    %v2905 = vsub.s32 0, %v2904
    %v2906 = vrot.slane %v2901, %v2905
    %v2907 = vlaneseq
    %v2908 = vshrl.u32 %v2907, 7
    %v2909 = vsub.s32 1, %v2908
    %v2910 = vrot.slane %v2901, %v2909
    %v2911 = vlaneseq
    %v2912 = vshrl.u32 %v2911, 7
    %v2913 = vsub.s32 2, %v2912
    %v2914 = vrot.slane %v2901, %v2913
    %v2915 = vlaneseq
    %v2916 = vshrl.u32 %v2915, 7
    %v2917 = vsub.s32 3, %v2916
    %v2918 = vrot.slane %v2901, %v2917
    %v2987 = vunpack.c.l.b16 %v2837
    %v2988 = vunpack.c.h.b16 %v2837
    %v2989 = vunpack.c.l.b16 %v2838
    %v2990 = vunpack.c.h.b16 %v2838
    %v2991 = vunpack.c.l.b16 %v2839
    %v2992 = vunpack.c.h.b16 %v2839
    %v2993 = vunpack.c.l.b16 %v2840
    %v2994 = vunpack.c.h.b16 %v2840
    %v2995 = vunpack.c.l.b16 %v2841
    %v2996 = vunpack.c.h.b16 %v2841
    %v2997 = vunpack.c.l.b16 %v2842
    %v2998 = vunpack.c.h.b16 %v2842
    %v2999 = vunpack.c.l.b16 %v2843
    %v3000 = vunpack.c.h.b16 %v2843
    %v3001 = vunpack.c.l.b16 %v2844
    %v3002 = vunpack.c.h.b16 %v2844
    %v3003 = vunpack.c.l.b16 %v2845
    %v3004 = vunpack.c.h.b16 %v2845
    %v3005 = vunpack.c.l.b16 %v2846
    %v3006 = vunpack.c.h.b16 %v2846
    %v3007 = vunpack.c.l.b16 %v2847
    %v3008 = vunpack.c.h.b16 %v2847
    %v3009 = vunpack.c.l.b16 %v2848
    %v3010 = vunpack.c.h.b16 %v2848
    %v3011 = vunpack.c.l.b16 %v2849
    %v3012 = vunpack.c.h.b16 %v2849
    %v3013 = vunpack.c.l.b16 %v2850
    %v3014 = vunpack.c.h.b16 %v2850
    %v3015 = vunpack.c.l.b16 %v2851
    %v3016 = vunpack.c.h.b16 %v2851
    %v3017 = vunpack.c.l.b16 %v2852
    %v3018 = vunpack.c.h.b16 %v2852
    %v3019 = vunpack.c.l.b16 %v2853
    %v3020 = vunpack.c.h.b16 %v2853
    %v3021 = vunpack.c.l.b16 %v2854
    %v3022 = vunpack.c.h.b16 %v2854
    %v3023 = vunpack.c.l.b16 %v2855
    %v3024 = vunpack.c.h.b16 %v2855
    %v3025 = vunpack.c.l.b16 %v2856
    %v3026 = vunpack.c.h.b16 %v2856
    %v3027 = vunpack.c.l.b16 %v2857
    %v3028 = vunpack.c.h.b16 %v2857
    %v3029 = vunpack.c.l.b16 %v2858
    %v3030 = vunpack.c.h.b16 %v2858
    %v3031 = vunpack.c.l.b16 %v2859
    %v3032 = vunpack.c.h.b16 %v2859
    %v3033 = vunpack.c.l.b16 %v2860
    %v3034 = vunpack.c.h.b16 %v2860
    %v3035 = vunpack.c.l.b16 %v2861
    %v3036 = vunpack.c.h.b16 %v2861
    %v3037 = vunpack.c.l.b16 %v2862
    %v3038 = vunpack.c.h.b16 %v2862
    %v3039 = vunpack.c.l.b16 %v2863
    %v3040 = vunpack.c.h.b16 %v2863
    %v3041 = vunpack.c.l.b16 %v2864
    %v3042 = vunpack.c.h.b16 %v2864
    %v3043 = vunpack.c.l.b16 %v2865
    %v3044 = vunpack.c.h.b16 %v2865
    %v3045 = vunpack.c.l.b16 %v2866
    %v3046 = vunpack.c.h.b16 %v2866
    %v3047 = vunpack.c.l.b16 %v2867
    %v3048 = vunpack.c.h.b16 %v2867
    %v3049 = vunpack.c.l.b16 %v2868
    %v3050 = vunpack.c.h.b16 %v2868
    %v3051 = vunpack.c.l.b16 %v2869
    %v3052 = vunpack.c.h.b16 %v2869
    %v3053 = vunpack.c.l.b16 %v2870
    %v3054 = vunpack.c.h.b16 %v2870
    %v3055 = vunpack.c.l.b16 %v2871
    %v3056 = vunpack.c.h.b16 %v2871
    %v3057 = vunpack.c.l.b16 %v2872
    %v3058 = vunpack.c.h.b16 %v2872
    %v3059 = vunpack.c.l.b16 %v2873
    %v3060 = vunpack.c.h.b16 %v2873
    %v3061 = vunpack.c.l.b16 %v2874
    %v3062 = vunpack.c.h.b16 %v2874
    %v3063 = vunpack.c.l.b16 %v2875
    %v3064 = vunpack.c.h.b16 %v2875
    %v3065 = vunpack.c.l.b16 %v2876
    %v3066 = vunpack.c.h.b16 %v2876
    %v3067 = vunpack.c.l.b16 %v2877
    %v3068 = vunpack.c.h.b16 %v2877
    %v3069 = vunpack.c.l.b16 %v2878
    %v3070 = vunpack.c.h.b16 %v2878
    %v3071 = vunpack.c.l.b16 %v2879
    %v3072 = vunpack.c.h.b16 %v2879
    %v3073 = vunpack.c.l.b16 %v2880
    %v3074 = vunpack.c.h.b16 %v2880
    %v3075 = vunpack.c.l.b16 %v2881
    %v3076 = vunpack.c.h.b16 %v2881
    %v3077 = vunpack.c.l.b16 %v2882
    %v3078 = vunpack.c.h.b16 %v2882
    %v3079 = vunpack.c.l.b16 %v2883
    %v3080 = vunpack.c.h.b16 %v2883
    %v3081 = vunpack.c.l.b16 %v2884
    %v3082 = vunpack.c.h.b16 %v2884
    %v3083 = vunpack.c.l.b16 %v2885
    %v3084 = vunpack.c.h.b16 %v2885
    %v3085 = vunpack.c.l.b16 %v2886
    %v3086 = vunpack.c.h.b16 %v2886
    %v3087 = vunpack.c.l.b16 %v2887
    %v3088 = vunpack.c.h.b16 %v2887
    %v3089 = vunpack.c.l.b16 %v2888
    %v3090 = vunpack.c.h.b16 %v2888
    %v3091 = vunpack.c.l.b16 %v2889
    %v3092 = vunpack.c.h.b16 %v2889
    %v3093 = vunpack.c.l.b16 %v2890
    %v3094 = vunpack.c.h.b16 %v2890
    %v3095 = vunpack.c.l.b16 %v2891
    %v3096 = vunpack.c.h.b16 %v2891
    %v3097 = vunpack.c.l.b16 %v2892
    %v3098 = vunpack.c.h.b16 %v2892
    %v3099 = vunpack.c.l.b16 %v2893
    %v3100 = vunpack.c.h.b16 %v2893
    %v3101 = vunpack.c.l.b16 %v2894
    %v3102 = vunpack.c.h.b16 %v2894
    %v3103 = vunpack.c.l.b16 %v2895
    %v3104 = vunpack.c.h.b16 %v2895
    %v3105 = vunpack.c.l.b16 %v2896
    %v3106 = vunpack.c.h.b16 %v2896
    %v3107 = vunpack.c.l.b16 %v2897
    %v3108 = vunpack.c.h.b16 %v2897
    %v3109 = vunpack.c.l.b16 %v2898
    %v3110 = vunpack.c.h.b16 %v2898
    %v3111 = vunpack.c.l.b16 %v2899
    %v3112 = vunpack.c.h.b16 %v2899
    %v3113 = vunpack.c.l.b16 %v2900
    %v3114 = vunpack.c.h.b16 %v2900
    %v3115 = vpack.c.b16 %v2991, %v2987
    %v3116 = vpack.c.b16 %v2992, %v2988
    %v3117 = vpack.c.b16 %v2993, %v2989
    %v3118 = vpack.c.b16 %v2994, %v2990
    %v3119 = vpack.c.b16 %v2999, %v2995
    %v3120 = vpack.c.b16 %v3000, %v2996
    %v3121 = vpack.c.b16 %v3001, %v2997
    %v3122 = vpack.c.b16 %v3002, %v2998
    %v3123 = vpack.c.b16 %v3007, %v3003
    %v3124 = vpack.c.b16 %v3008, %v3004
    %v3125 = vpack.c.b16 %v3009, %v3005
    %v3126 = vpack.c.b16 %v3010, %v3006
    %v3127 = vpack.c.b16 %v3015, %v3011
    %v3128 = vpack.c.b16 %v3016, %v3012
    %v3129 = vpack.c.b16 %v3017, %v3013
    %v3130 = vpack.c.b16 %v3018, %v3014
    %v3131 = vpack.c.b16 %v3023, %v3019
    %v3132 = vpack.c.b16 %v3024, %v3020
    %v3133 = vpack.c.b16 %v3025, %v3021
    %v3134 = vpack.c.b16 %v3026, %v3022
    %v3135 = vpack.c.b16 %v3031, %v3027
    %v3136 = vpack.c.b16 %v3032, %v3028
    %v3137 = vpack.c.b16 %v3033, %v3029
    %v3138 = vpack.c.b16 %v3034, %v3030
    %v3139 = vpack.c.b16 %v3039, %v3035
    %v3140 = vpack.c.b16 %v3040, %v3036
    %v3141 = vpack.c.b16 %v3041, %v3037
    %v3142 = vpack.c.b16 %v3042, %v3038
    %v3143 = vpack.c.b16 %v3047, %v3043
    %v3144 = vpack.c.b16 %v3048, %v3044
    %v3145 = vpack.c.b16 %v3049, %v3045
    %v3146 = vpack.c.b16 %v3050, %v3046
    %v3147 = vpack.c.b16 %v3055, %v3051
    %v3148 = vpack.c.b16 %v3056, %v3052
    %v3149 = vpack.c.b16 %v3057, %v3053
    %v3150 = vpack.c.b16 %v3058, %v3054
    %v3151 = vpack.c.b16 %v3063, %v3059
    %v3152 = vpack.c.b16 %v3064, %v3060
    %v3153 = vpack.c.b16 %v3065, %v3061
    %v3154 = vpack.c.b16 %v3066, %v3062
    %v3155 = vpack.c.b16 %v3071, %v3067
    %v3156 = vpack.c.b16 %v3072, %v3068
    %v3157 = vpack.c.b16 %v3073, %v3069
    %v3158 = vpack.c.b16 %v3074, %v3070
    %v3159 = vpack.c.b16 %v3079, %v3075
    %v3160 = vpack.c.b16 %v3080, %v3076
    %v3161 = vpack.c.b16 %v3081, %v3077
    %v3162 = vpack.c.b16 %v3082, %v3078
    %v3163 = vpack.c.b16 %v3087, %v3083
    %v3164 = vpack.c.b16 %v3088, %v3084
    %v3165 = vpack.c.b16 %v3089, %v3085
    %v3166 = vpack.c.b16 %v3090, %v3086
    %v3167 = vpack.c.b16 %v3095, %v3091
    %v3168 = vpack.c.b16 %v3096, %v3092
    %v3169 = vpack.c.b16 %v3097, %v3093
    %v3170 = vpack.c.b16 %v3098, %v3094
    %v3171 = vpack.c.b16 %v3103, %v3099
    %v3172 = vpack.c.b16 %v3104, %v3100
    %v3173 = vpack.c.b16 %v3105, %v3101
    %v3174 = vpack.c.b16 %v3106, %v3102
    %v3175 = vpack.c.b16 %v3111, %v3107
    %v3176 = vpack.c.b16 %v3112, %v3108
    %v3177 = vpack.c.b16 %v3113, %v3109
    %v3178 = vpack.c.b16 %v3114, %v3110
    %3243 = vmatprep.subr.bf16.mxu0 %v3116
    %3244 = vmatpush1.bf16.msra.mxu0 %v3115
    %3245 = vmatprep.subr.bf16.mxu0 %v3120
    %3246 = vmatpush1.bf16.msra.mxu0 %v3119
    %3247 = vmatprep.subr.bf16.mxu0 %v3124
    %3248 = vmatpush1.bf16.msra.mxu0 %v3123
    %3249 = vmatprep.subr.bf16.mxu0 %v3128
    %3250 = vmatpush1.bf16.msra.mxu0 %v3127
    %3251 = vmatprep.subr.bf16.mxu0 %v3132
    %3252 = vmatpush1.bf16.msra.mxu0 %v3131
    %3253 = vmatprep.subr.bf16.mxu0 %v3136
    %3254 = vmatpush1.bf16.msra.mxu0 %v3135
    %3255 = vmatprep.subr.bf16.mxu0 %v3140
    %3256 = vmatpush1.bf16.msra.mxu0 %v3139
    %3257 = vmatprep.subr.bf16.mxu0 %v3144
    %3258 = vmatpush1.bf16.msra.mxu0 %v3143
    %3259 = vmatprep.subr.bf16.mxu0 %v3148
    %3260 = vmatpush1.bf16.msra.mxu0 %v3147
    %3261 = vmatprep.subr.bf16.mxu0 %v3152
    %3262 = vmatpush1.bf16.msra.mxu0 %v3151
    %3263 = vmatprep.subr.bf16.mxu0 %v3156
    %3264 = vmatpush1.bf16.msra.mxu0 %v3155
    %3265 = vmatprep.subr.bf16.mxu0 %v3160
    %3266 = vmatpush1.bf16.msra.mxu0 %v3159
    %3267 = vmatprep.subr.bf16.mxu0 %v3164
    %3268 = vmatpush1.bf16.msra.mxu0 %v3163
    %3269 = vmatprep.subr.bf16.mxu0 %v3168
    %3270 = vmatpush1.bf16.msra.mxu0 %v3167
    %3271 = vmatprep.subr.bf16.mxu0 %v3172
    %3272 = vmatpush1.bf16.msra.mxu0 %v3171
    %3273 = vmatprep.subr.bf16.mxu0 %v3176
    %3274 = vmatpush1.bf16.msra.mxu0 %v3175
    %3275 = vmatprep.mubr.bf16.mxu0 %v2836
    %3276 = vmatmul.mubr.bf16.gmra.mrb[0].mxu0 %v2835
    %v3277 = vpop.f32.mrb[0].mxu0
    %v3278 = vadd.f32 %v2906, %v3277
    %v3279 = vpop.f32.mrb[0].mxu0
    %v3280 = vadd.f32 %v2910, %v3279
    %v3281 = vpop.f32.mrb[0].mxu0
    %v3282 = vpop.f32.mrb[0].mxu0
    %3283 = vdwg.mxu0
    %3284 = vmatprep.subr.bf16.mxu0 %v3118
    %3285 = vmatpush1.bf16.msra.mxu0 %v3117
    %3286 = vmatprep.subr.bf16.mxu0 %v3122
    %3287 = vmatpush1.bf16.msra.mxu0 %v3121
    %3288 = vmatprep.subr.bf16.mxu0 %v3126
    %3289 = vmatpush1.bf16.msra.mxu0 %v3125
    %3290 = vmatprep.subr.bf16.mxu0 %v3130
    %3291 = vmatpush1.bf16.msra.mxu0 %v3129
    %3292 = vmatprep.subr.bf16.mxu0 %v3134
    %3293 = vmatpush1.bf16.msra.mxu0 %v3133
    %3294 = vmatprep.subr.bf16.mxu0 %v3138
    %3295 = vmatpush1.bf16.msra.mxu0 %v3137
    %3296 = vmatprep.subr.bf16.mxu0 %v3142
    %3297 = vmatpush1.bf16.msra.mxu0 %v3141
    %3298 = vmatprep.subr.bf16.mxu0 %v3146
    %3299 = vmatpush1.bf16.msra.mxu0 %v3145
    %3300 = vmatprep.subr.bf16.mxu0 %v3150
    %3301 = vmatpush1.bf16.msra.mxu0 %v3149
    %3302 = vmatprep.subr.bf16.mxu0 %v3154
    %3303 = vmatpush1.bf16.msra.mxu0 %v3153
    %3304 = vmatprep.subr.bf16.mxu0 %v3158
    %3305 = vmatpush1.bf16.msra.mxu0 %v3157
    %3306 = vmatprep.subr.bf16.mxu0 %v3162
    %3307 = vmatpush1.bf16.msra.mxu0 %v3161
    %3308 = vmatprep.subr.bf16.mxu0 %v3166
    %3309 = vmatpush1.bf16.msra.mxu0 %v3165
    %3310 = vmatprep.subr.bf16.mxu0 %v3170
    %3311 = vmatpush1.bf16.msra.mxu0 %v3169
    %3312 = vmatprep.subr.bf16.mxu0 %v3174
    %3313 = vmatpush1.bf16.msra.mxu0 %v3173
    %3314 = vmatprep.subr.bf16.mxu0 %v3178
    %3315 = vmatpush1.bf16.msra.mxu0 %v3177
    %3316 = vmatprep.mubr.bf16.mxu0 %v2836
    %3317 = vmatmul.mubr.bf16.gmra.mrb[0].mxu0 %v2835
    %v3318 = vpop.f32.mrb[0].mxu0
    %v3319 = vadd.f32 %v2914, %v3318
    %v3320 = vpop.f32.mrb[0].mxu0
    %v3321 = vadd.f32 %v2918, %v3320
    %v3322 = vpop.f32.mrb[0].mxu0
    %v3323 = vpop.f32.mrb[0].mxu0
    %3324 = vdwg.mxu0
    %v3325 = vmax.f32 %v3278, 0.0
    %v3326 = vmax.f32 %v3280, 0.0
    %v3327 = vmax.f32 %v3319, 0.0
    %v3328 = vmax.f32 %v3321, 0.0
    %v3329 = vpack.c.bf16 %v3325, %v3325
    %v3330 = vpack.c.bf16 %v3326, %v3326
    %v3331 = vpack.c.bf16 %v3327, %v3327
    %v3332 = vpack.c.bf16 %v3328, %v3328
    %v3333 = vld [vmem:[#allocation7] sm:$0xff]
    %v3334 = vld [vmem:[#allocation7 + $0x8] sm:$0xff]
    %v3335 = vld [vmem:[#allocation7 + $0x10] sm:$0xff]
    %v3336 = vld [vmem:[#allocation7 + $0x18] sm:$0xff]
    %v3337 = vld [vmem:[#allocation7 + $0x20] sm:$0xff]
    %v3338 = vld [vmem:[#allocation7 + $0x28] sm:$0xff]
    %v3339 = vld [vmem:[#allocation7 + $0x30] sm:$0xff]
    %v3340 = vld [vmem:[#allocation7 + $0x38] sm:$0xff]
    %v3341 = vld [vmem:[#allocation7 + $0x40] sm:$0xff]
    %v3342 = vld [vmem:[#allocation7 + $0x48] sm:$0xff]
    %v3343 = vld [vmem:[#allocation7 + $0x50] sm:$0xff]
    %v3344 = vld [vmem:[#allocation7 + $0x58] sm:$0xff]
    %v3345 = vld [vmem:[#allocation7 + $0x60] sm:$0xff]
    %v3346 = vld [vmem:[#allocation7 + $0x68] sm:$0xff]
    %v3347 = vld [vmem:[#allocation7 + $0x70] sm:$0xff]
    %v3348 = vld [vmem:[#allocation7 + $0x78] sm:$0xff]
    %v3349 = vld [vmem:[#allocation7 + $0x80] sm:$0xff]
    %v3350 = vld [vmem:[#allocation7 + $0x88] sm:$0xff]
    %v3351 = vld [vmem:[#allocation7 + $0x90] sm:$0xff]
    %v3352 = vld [vmem:[#allocation7 + $0x98] sm:$0xff]
    %v3353 = vld [vmem:[#allocation7 + $0xa0] sm:$0xff]
    %v3354 = vld [vmem:[#allocation7 + $0xa8] sm:$0xff]
    %v3355 = vld [vmem:[#allocation7 + $0xb0] sm:$0xff]
    %v3356 = vld [vmem:[#allocation7 + $0xb8] sm:$0xff]
    %v3357 = vld [vmem:[#allocation7 + $0xc0] sm:$0xff]
    %v3358 = vld [vmem:[#allocation7 + $0xc8] sm:$0xff]
    %v3359 = vld [vmem:[#allocation7 + $0xd0] sm:$0xff]
    %v3360 = vld [vmem:[#allocation7 + $0xd8] sm:$0xff]
    %v3361 = vld [vmem:[#allocation7 + $0xe0] sm:$0xff]
    %v3362 = vld [vmem:[#allocation7 + $0xe8] sm:$0xff]
    %v3363 = vld [vmem:[#allocation7 + $0xf0] sm:$0xff]
    %v3364 = vld [vmem:[#allocation7 + $0xf8] sm:$0xff]
    %v3365 = vld [vmem:[#allocation7 + $0x100] sm:$0xff]
    %v3366 = vld [vmem:[#allocation7 + $0x108] sm:$0xff]
    %v3367 = vld [vmem:[#allocation7 + $0x110] sm:$0xff]
    %v3368 = vld [vmem:[#allocation7 + $0x118] sm:$0xff]
    %v3369 = vld [vmem:[#allocation7 + $0x120] sm:$0xff]
    %v3370 = vld [vmem:[#allocation7 + $0x128] sm:$0xff]
    %v3371 = vld [vmem:[#allocation7 + $0x130] sm:$0xff]
    %v3372 = vld [vmem:[#allocation7 + $0x138] sm:$0xff]
    %v3373 = vld [vmem:[#allocation7 + $0x140] sm:$0xff]
    %v3374 = vld [vmem:[#allocation7 + $0x148] sm:$0xff]
    %v3375 = vld [vmem:[#allocation7 + $0x150] sm:$0xff]
    %v3376 = vld [vmem:[#allocation7 + $0x158] sm:$0xff]
    %v3377 = vld [vmem:[#allocation7 + $0x160] sm:$0xff]
    %v3378 = vld [vmem:[#allocation7 + $0x168] sm:$0xff]
    %v3379 = vld [vmem:[#allocation7 + $0x170] sm:$0xff]
    %v3380 = vld [vmem:[#allocation7 + $0x178] sm:$0xff]
    %v3381 = vld [vmem:[#allocation7 + $0x180] sm:$0xff]
    %v3382 = vld [vmem:[#allocation7 + $0x188] sm:$0xff]
    %v3383 = vld [vmem:[#allocation7 + $0x190] sm:$0xff]
    %v3384 = vld [vmem:[#allocation7 + $0x198] sm:$0xff]
    %v3385 = vld [vmem:[#allocation7 + $0x1a0] sm:$0xff]
    %v3386 = vld [vmem:[#allocation7 + $0x1a8] sm:$0xff]
    %v3387 = vld [vmem:[#allocation7 + $0x1b0] sm:$0xff]
    %v3388 = vld [vmem:[#allocation7 + $0x1b8] sm:$0xff]
    %v3389 = vld [vmem:[#allocation7 + $0x1c0] sm:$0xff]
    %v3390 = vld [vmem:[#allocation7 + $0x1c8] sm:$0xff]
    %v3391 = vld [vmem:[#allocation7 + $0x1d0] sm:$0xff]
    %v3392 = vld [vmem:[#allocation7 + $0x1d8] sm:$0xff]
    %v3393 = vld [vmem:[#allocation7 + $0x1e0] sm:$0xff]
    %v3394 = vld [vmem:[#allocation7 + $0x1e8] sm:$0xff]
    %v3395 = vld [vmem:[#allocation7 + $0x1f0] sm:$0xff]
    %v3396 = vld [vmem:[#allocation7 + $0x1f8] sm:$0xff]
    %v3397 = vld [vmem:[#allocation7 + $0x200] sm:$0xff]
    %v3398 = vld [vmem:[#allocation7 + $0x208] sm:$0xff]
    %v3399 = vld [vmem:[#allocation7 + $0x210] sm:$0xff]
    %v3400 = vld [vmem:[#allocation7 + $0x218] sm:$0xff]
    %v3401 = vld [vmem:[#allocation7 + $0x220] sm:$0xff]
    %v3402 = vld [vmem:[#allocation7 + $0x228] sm:$0xff]
    %v3403 = vld [vmem:[#allocation7 + $0x230] sm:$0xff]
    %v3404 = vld [vmem:[#allocation7 + $0x238] sm:$0xff]
    %v3405 = vld [vmem:[#allocation7 + $0x240] sm:$0xff]
    %v3406 = vld [vmem:[#allocation7 + $0x248] sm:$0xff]
    %v3407 = vld [vmem:[#allocation7 + $0x250] sm:$0xff]
    %v3408 = vld [vmem:[#allocation7 + $0x258] sm:$0xff]
    %v3409 = vld [vmem:[#allocation7 + $0x260] sm:$0xff]
    %v3410 = vld [vmem:[#allocation7 + $0x268] sm:$0xff]
    %v3411 = vld [vmem:[#allocation7 + $0x270] sm:$0xff]
    %v3412 = vld [vmem:[#allocation7 + $0x278] sm:$0xff]
    %v3413 = vld [vmem:[#allocation7 + $0x280] sm:$0xff]
    %v3414 = vld [vmem:[#allocation7 + $0x288] sm:$0xff]
    %v3415 = vld [vmem:[#allocation7 + $0x290] sm:$0xff]
    %v3416 = vld [vmem:[#allocation7 + $0x298] sm:$0xff]
    %v3417 = vld [vmem:[#allocation7 + $0x2a0] sm:$0xff]
    %v3418 = vld [vmem:[#allocation7 + $0x2a8] sm:$0xff]
    %v3419 = vld [vmem:[#allocation7 + $0x2b0] sm:$0xff]
    %v3420 = vld [vmem:[#allocation7 + $0x2b8] sm:$0xff]
    %v3421 = vld [vmem:[#allocation7 + $0x2c0] sm:$0xff]
    %v3422 = vld [vmem:[#allocation7 + $0x2c8] sm:$0xff]
    %v3423 = vld [vmem:[#allocation7 + $0x2d0] sm:$0xff]
    %v3424 = vld [vmem:[#allocation7 + $0x2d8] sm:$0xff]
    %v3425 = vld [vmem:[#allocation7 + $0x2e0] sm:$0xff]
    %v3426 = vld [vmem:[#allocation7 + $0x2e8] sm:$0xff]
    %v3427 = vld [vmem:[#allocation7 + $0x2f0] sm:$0xff]
    %v3428 = vld [vmem:[#allocation7 + $0x2f8] sm:$0xff]
    %v3429 = vld [vmem:[#allocation7 + $0x300] sm:$0xff]
    %v3430 = vld [vmem:[#allocation7 + $0x308] sm:$0xff]
    %v3431 = vld [vmem:[#allocation7 + $0x310] sm:$0xff]
    %v3432 = vld [vmem:[#allocation7 + $0x318] sm:$0xff]
    %v3433 = vld [vmem:[#allocation7 + $0x320] sm:$0xff]
    %v3434 = vld [vmem:[#allocation7 + $0x328] sm:$0xff]
    %v3435 = vld [vmem:[#allocation7 + $0x330] sm:$0xff]
    %v3436 = vld [vmem:[#allocation7 + $0x338] sm:$0xff]
    %v3437 = vld [vmem:[#allocation7 + $0x340] sm:$0xff]
    %v3438 = vld [vmem:[#allocation7 + $0x348] sm:$0xff]
    %v3439 = vld [vmem:[#allocation7 + $0x350] sm:$0xff]
    %v3440 = vld [vmem:[#allocation7 + $0x358] sm:$0xff]
    %v3441 = vld [vmem:[#allocation7 + $0x360] sm:$0xff]
    %v3442 = vld [vmem:[#allocation7 + $0x368] sm:$0xff]
    %v3443 = vld [vmem:[#allocation7 + $0x370] sm:$0xff]
    %v3444 = vld [vmem:[#allocation7 + $0x378] sm:$0xff]
    %v3445 = vld [vmem:[#allocation7 + $0x380] sm:$0xff]
    %v3446 = vld [vmem:[#allocation7 + $0x388] sm:$0xff]
    %v3447 = vld [vmem:[#allocation7 + $0x390] sm:$0xff]
    %v3448 = vld [vmem:[#allocation7 + $0x398] sm:$0xff]
    %v3449 = vld [vmem:[#allocation7 + $0x3a0] sm:$0xff]
    %v3450 = vld [vmem:[#allocation7 + $0x3a8] sm:$0xff]
    %v3451 = vld [vmem:[#allocation7 + $0x3b0] sm:$0xff]
    %v3452 = vld [vmem:[#allocation7 + $0x3b8] sm:$0xff]
    %v3453 = vld [vmem:[#allocation7 + $0x3c0] sm:$0xff]
    %v3454 = vld [vmem:[#allocation7 + $0x3c8] sm:$0xff]
    %v3455 = vld [vmem:[#allocation7 + $0x3d0] sm:$0xff]
    %v3456 = vld [vmem:[#allocation7 + $0x3d8] sm:$0xff]
    %v3457 = vld [vmem:[#allocation7 + $0x3e0] sm:$0xff]
    %v3458 = vld [vmem:[#allocation7 + $0x3e8] sm:$0xff]
    %v3459 = vld [vmem:[#allocation7 + $0x3f0] sm:$0xff]
    %v3460 = vld [vmem:[#allocation7 + $0x3f8] sm:$0xff]
    %v3461 = vld [vmem:[#allocation7 + $0x400] sm:$0xff]
    %v3462 = vld [vmem:[#allocation7 + $0x408] sm:$0xff]
    %v3463 = vld [vmem:[#allocation7 + $0x410] sm:$0xff]
    %v3464 = vld [vmem:[#allocation7 + $0x418] sm:$0xff]
    %v3465 = vld [vmem:[#allocation7 + $0x420] sm:$0xff]
    %v3466 = vld [vmem:[#allocation7 + $0x428] sm:$0xff]
    %v3467 = vld [vmem:[#allocation7 + $0x430] sm:$0xff]
    %v3468 = vld [vmem:[#allocation7 + $0x438] sm:$0xff]
    %v3469 = vld [vmem:[#allocation7 + $0x440] sm:$0xff]
    %v3470 = vld [vmem:[#allocation7 + $0x448] sm:$0xff]
    %v3471 = vld [vmem:[#allocation7 + $0x450] sm:$0xff]
    %v3472 = vld [vmem:[#allocation7 + $0x458] sm:$0xff]
    %v3473 = vld [vmem:[#allocation7 + $0x460] sm:$0xff]
    %v3474 = vld [vmem:[#allocation7 + $0x468] sm:$0xff]
    %v3475 = vld [vmem:[#allocation7 + $0x470] sm:$0xff]
    %v3476 = vld [vmem:[#allocation7 + $0x478] sm:$0xff]
    %v3477 = vld [vmem:[#allocation7 + $0x480] sm:$0xff]
    %v3478 = vld [vmem:[#allocation7 + $0x488] sm:$0xff]
    %v3479 = vld [vmem:[#allocation7 + $0x490] sm:$0xff]
    %v3480 = vld [vmem:[#allocation7 + $0x498] sm:$0xff]
    %v3481 = vld [vmem:[#allocation7 + $0x4a0] sm:$0xff]
    %v3482 = vld [vmem:[#allocation7 + $0x4a8] sm:$0xff]
    %v3483 = vld [vmem:[#allocation7 + $0x4b0] sm:$0xff]
    %v3484 = vld [vmem:[#allocation7 + $0x4b8] sm:$0xff]
    %v3485 = vld [vmem:[#allocation7 + $0x4c0] sm:$0xff]
    %v3486 = vld [vmem:[#allocation7 + $0x4c8] sm:$0xff]
    %v3487 = vld [vmem:[#allocation7 + $0x4d0] sm:$0xff]
    %v3488 = vld [vmem:[#allocation7 + $0x4d8] sm:$0xff]
    %v3489 = vld [vmem:[#allocation7 + $0x4e0] sm:$0xff]
    %v3490 = vld [vmem:[#allocation7 + $0x4e8] sm:$0xff]
    %v3491 = vld [vmem:[#allocation7 + $0x4f0] sm:$0xff]
    %v3492 = vld [vmem:[#allocation7 + $0x4f8] sm:$0xff]
    %v3493 = vld [vmem:[#allocation7 + $0x500] sm:$0xff]
    %v3494 = vld [vmem:[#allocation7 + $0x508] sm:$0xff]
    %v3495 = vld [vmem:[#allocation7 + $0x510] sm:$0xff]
    %v3496 = vld [vmem:[#allocation7 + $0x518] sm:$0xff]
    %v3497 = vld [vmem:[#allocation7 + $0x520] sm:$0xff]
    %v3498 = vld [vmem:[#allocation7 + $0x528] sm:$0xff]
    %v3499 = vld [vmem:[#allocation7 + $0x530] sm:$0xff]
    %v3500 = vld [vmem:[#allocation7 + $0x538] sm:$0xff]
    %v3501 = vld [vmem:[#allocation7 + $0x540] sm:$0xff]
    %v3502 = vld [vmem:[#allocation7 + $0x548] sm:$0xff]
    %v3503 = vld [vmem:[#allocation7 + $0x550] sm:$0xff]
    %v3504 = vld [vmem:[#allocation7 + $0x558] sm:$0xff]
    %v3505 = vld [vmem:[#allocation7 + $0x560] sm:$0xff]
    %v3506 = vld [vmem:[#allocation7 + $0x568] sm:$0xff]
    %v3507 = vld [vmem:[#allocation7 + $0x570] sm:$0xff]
    %v3508 = vld [vmem:[#allocation7 + $0x578] sm:$0xff]
    %v3509 = vld [vmem:[#allocation7 + $0x580] sm:$0xff]
    %v3510 = vld [vmem:[#allocation7 + $0x588] sm:$0xff]
    %v3511 = vld [vmem:[#allocation7 + $0x590] sm:$0xff]
    %v3512 = vld [vmem:[#allocation7 + $0x598] sm:$0xff]
    %v3513 = vld [vmem:[#allocation7 + $0x5a0] sm:$0xff]
    %v3514 = vld [vmem:[#allocation7 + $0x5a8] sm:$0xff]
    %v3515 = vld [vmem:[#allocation7 + $0x5b0] sm:$0xff]
    %v3516 = vld [vmem:[#allocation7 + $0x5b8] sm:$0xff]
    %v3517 = vld [vmem:[#allocation7 + $0x5c0] sm:$0xff]
    %v3518 = vld [vmem:[#allocation7 + $0x5c8] sm:$0xff]
    %v3519 = vld [vmem:[#allocation7 + $0x5d0] sm:$0xff]
    %v3520 = vld [vmem:[#allocation7 + $0x5d8] sm:$0xff]
    %v3521 = vld [vmem:[#allocation7 + $0x5e0] sm:$0xff]
    %v3522 = vld [vmem:[#allocation7 + $0x5e8] sm:$0xff]
    %v3523 = vld [vmem:[#allocation7 + $0x5f0] sm:$0xff]
    %v3524 = vld [vmem:[#allocation7 + $0x5f8] sm:$0xff]
    %v3525 = vld [vmem:[#allocation7 + $0x600] sm:$0xff]
    %v3526 = vld [vmem:[#allocation7 + $0x608] sm:$0xff]
    %v3527 = vld [vmem:[#allocation7 + $0x610] sm:$0xff]
    %v3528 = vld [vmem:[#allocation7 + $0x618] sm:$0xff]
    %v3529 = vld [vmem:[#allocation7 + $0x620] sm:$0xff]
    %v3530 = vld [vmem:[#allocation7 + $0x628] sm:$0xff]
    %v3531 = vld [vmem:[#allocation7 + $0x630] sm:$0xff]
    %v3532 = vld [vmem:[#allocation7 + $0x638] sm:$0xff]
    %v3533 = vld [vmem:[#allocation7 + $0x640] sm:$0xff]
    %v3534 = vld [vmem:[#allocation7 + $0x648] sm:$0xff]
    %v3535 = vld [vmem:[#allocation7 + $0x650] sm:$0xff]
    %v3536 = vld [vmem:[#allocation7 + $0x658] sm:$0xff]
    %v3537 = vld [vmem:[#allocation7 + $0x660] sm:$0xff]
    %v3538 = vld [vmem:[#allocation7 + $0x668] sm:$0xff]
    %v3539 = vld [vmem:[#allocation7 + $0x670] sm:$0xff]
    %v3540 = vld [vmem:[#allocation7 + $0x678] sm:$0xff]
    %v3541 = vld [vmem:[#allocation7 + $0x680] sm:$0xff]
    %v3542 = vld [vmem:[#allocation7 + $0x688] sm:$0xff]
    %v3543 = vld [vmem:[#allocation7 + $0x690] sm:$0xff]
    %v3544 = vld [vmem:[#allocation7 + $0x698] sm:$0xff]
    %v3545 = vld [vmem:[#allocation7 + $0x6a0] sm:$0xff]
    %v3546 = vld [vmem:[#allocation7 + $0x6a8] sm:$0xff]
    %v3547 = vld [vmem:[#allocation7 + $0x6b0] sm:$0xff]
    %v3548 = vld [vmem:[#allocation7 + $0x6b8] sm:$0xff]
    %v3549 = vld [vmem:[#allocation7 + $0x6c0] sm:$0xff]
    %v3550 = vld [vmem:[#allocation7 + $0x6c8] sm:$0xff]
    %v3551 = vld [vmem:[#allocation7 + $0x6d0] sm:$0xff]
    %v3552 = vld [vmem:[#allocation7 + $0x6d8] sm:$0xff]
    %v3553 = vld [vmem:[#allocation7 + $0x6e0] sm:$0xff]
    %v3554 = vld [vmem:[#allocation7 + $0x6e8] sm:$0xff]
    %v3555 = vld [vmem:[#allocation7 + $0x6f0] sm:$0xff]
    %v3556 = vld [vmem:[#allocation7 + $0x6f8] sm:$0xff]
    %v3557 = vld [vmem:[#allocation7 + $0x700] sm:$0xff]
    %v3558 = vld [vmem:[#allocation7 + $0x708] sm:$0xff]
    %v3559 = vld [vmem:[#allocation7 + $0x710] sm:$0xff]
    %v3560 = vld [vmem:[#allocation7 + $0x718] sm:$0xff]
    %v3561 = vld [vmem:[#allocation7 + $0x720] sm:$0xff]
    %v3562 = vld [vmem:[#allocation7 + $0x728] sm:$0xff]
    %v3563 = vld [vmem:[#allocation7 + $0x730] sm:$0xff]
    %v3564 = vld [vmem:[#allocation7 + $0x738] sm:$0xff]
    %v3565 = vld [vmem:[#allocation7 + $0x740] sm:$0xff]
    %v3566 = vld [vmem:[#allocation7 + $0x748] sm:$0xff]
    %v3567 = vld [vmem:[#allocation7 + $0x750] sm:$0xff]
    %v3568 = vld [vmem:[#allocation7 + $0x758] sm:$0xff]
    %v3569 = vld [vmem:[#allocation7 + $0x760] sm:$0xff]
    %v3570 = vld [vmem:[#allocation7 + $0x768] sm:$0xff]
    %v3571 = vld [vmem:[#allocation7 + $0x770] sm:$0xff]
    %v3572 = vld [vmem:[#allocation7 + $0x778] sm:$0xff]
    %v3573 = vld [vmem:[#allocation7 + $0x780] sm:$0xff]
    %v3574 = vld [vmem:[#allocation7 + $0x788] sm:$0xff]
    %v3575 = vld [vmem:[#allocation7 + $0x790] sm:$0xff]
    %v3576 = vld [vmem:[#allocation7 + $0x798] sm:$0xff]
    %v3577 = vld [vmem:[#allocation7 + $0x7a0] sm:$0xff]
    %v3578 = vld [vmem:[#allocation7 + $0x7a8] sm:$0xff]
    %v3579 = vld [vmem:[#allocation7 + $0x7b0] sm:$0xff]
    %v3580 = vld [vmem:[#allocation7 + $0x7b8] sm:$0xff]
    %v3581 = vld [vmem:[#allocation7 + $0x7c0] sm:$0xff]
    %v3582 = vld [vmem:[#allocation7 + $0x7c8] sm:$0xff]
    %v3583 = vld [vmem:[#allocation7 + $0x7d0] sm:$0xff]
    %v3584 = vld [vmem:[#allocation7 + $0x7d8] sm:$0xff]
    %v3585 = vld [vmem:[#allocation7 + $0x7e0] sm:$0xff]
    %v3586 = vld [vmem:[#allocation7 + $0x7e8] sm:$0xff]
    %v3587 = vld [vmem:[#allocation7 + $0x7f0] sm:$0xff]
    %v3588 = vld [vmem:[#allocation7 + $0x7f8] sm:$0xff]
    %v3589 = vld [vmem:[%s12] sm:$0xff]
    %v3591 = vlaneseq
    %v3592 = vshrl.u32 %v3591, 7
    %v3593 = vsub.s32 0, %v3592
    %v3594 = vrot.slane %v3589, %v3593
    %v3595 = vlaneseq
    %v3596 = vshrl.u32 %v3595, 7
    %v3597 = vsub.s32 1, %v3596
    %v3598 = vrot.slane %v3589, %v3597
    %v3599 = vlaneseq
    %v3600 = vshrl.u32 %v3599, 7
    %v3601 = vsub.s32 2, %v3600
    %v3602 = vrot.slane %v3589, %v3601
    %v3603 = vlaneseq
    %v3604 = vshrl.u32 %v3603, 7
    %v3605 = vsub.s32 3, %v3604
    %v3606 = vrot.slane %v3589, %v3605
    %v3607 = vlaneseq
    %v3608 = vshrl.u32 %v3607, 7
    %v3609 = vsub.s32 4, %v3608
    %v3610 = vrot.slane %v3589, %v3609
    %v3611 = vlaneseq
    %v3612 = vshrl.u32 %v3611, 7
    %v3613 = vsub.s32 5, %v3612
    %v3614 = vrot.slane %v3589, %v3613
    %v3615 = vlaneseq
    %v3616 = vshrl.u32 %v3615, 7
    %v3617 = vsub.s32 6, %v3616
    %v3618 = vrot.slane %v3589, %v3617
    %v3619 = vlaneseq
    %v3620 = vshrl.u32 %v3619, 7
    %v3621 = vsub.s32 7, %v3620
    %v3622 = vrot.slane %v3589, %v3621
    %v3887 = vunpack.c.l.b16 %v3333
    %v3888 = vunpack.c.h.b16 %v3333
    %v3889 = vunpack.c.l.b16 %v3334
    %v3890 = vunpack.c.h.b16 %v3334
    %v3891 = vunpack.c.l.b16 %v3335
    %v3892 = vunpack.c.h.b16 %v3335
    %v3893 = vunpack.c.l.b16 %v3336
    %v3894 = vunpack.c.h.b16 %v3336
    %v3895 = vunpack.c.l.b16 %v3337
    %v3896 = vunpack.c.h.b16 %v3337
    %v3897 = vunpack.c.l.b16 %v3338
    %v3898 = vunpack.c.h.b16 %v3338
    %v3899 = vunpack.c.l.b16 %v3339
    %v3900 = vunpack.c.h.b16 %v3339
    %v3901 = vunpack.c.l.b16 %v3340
    %v3902 = vunpack.c.h.b16 %v3340
    %v3903 = vunpack.c.l.b16 %v3341
    %v3904 = vunpack.c.h.b16 %v3341
    %v3905 = vunpack.c.l.b16 %v3342
    %v3906 = vunpack.c.h.b16 %v3342
    %v3907 = vunpack.c.l.b16 %v3343
    %v3908 = vunpack.c.h.b16 %v3343
    %v3909 = vunpack.c.l.b16 %v3344
    %v3910 = vunpack.c.h.b16 %v3344
    %v3911 = vunpack.c.l.b16 %v3345
    %v3912 = vunpack.c.h.b16 %v3345
    %v3913 = vunpack.c.l.b16 %v3346
    %v3914 = vunpack.c.h.b16 %v3346
    %v3915 = vunpack.c.l.b16 %v3347
    %v3916 = vunpack.c.h.b16 %v3347
    %v3917 = vunpack.c.l.b16 %v3348
    %v3918 = vunpack.c.h.b16 %v3348
    %v3919 = vunpack.c.l.b16 %v3349
    %v3920 = vunpack.c.h.b16 %v3349
    %v3921 = vunpack.c.l.b16 %v3350
    %v3922 = vunpack.c.h.b16 %v3350
    %v3923 = vunpack.c.l.b16 %v3351
    %v3924 = vunpack.c.h.b16 %v3351
    %v3925 = vunpack.c.l.b16 %v3352
    %v3926 = vunpack.c.h.b16 %v3352
    %v3927 = vunpack.c.l.b16 %v3353
    %v3928 = vunpack.c.h.b16 %v3353
    %v3929 = vunpack.c.l.b16 %v3354
    %v3930 = vunpack.c.h.b16 %v3354
    %v3931 = vunpack.c.l.b16 %v3355
    %v3932 = vunpack.c.h.b16 %v3355
    %v3933 = vunpack.c.l.b16 %v3356
    %v3934 = vunpack.c.h.b16 %v3356
    %v3935 = vunpack.c.l.b16 %v3357
    %v3936 = vunpack.c.h.b16 %v3357
    %v3937 = vunpack.c.l.b16 %v3358
    %v3938 = vunpack.c.h.b16 %v3358
    %v3939 = vunpack.c.l.b16 %v3359
    %v3940 = vunpack.c.h.b16 %v3359
    %v3941 = vunpack.c.l.b16 %v3360
    %v3942 = vunpack.c.h.b16 %v3360
    %v3943 = vunpack.c.l.b16 %v3361
    %v3944 = vunpack.c.h.b16 %v3361
    %v3945 = vunpack.c.l.b16 %v3362
    %v3946 = vunpack.c.h.b16 %v3362
    %v3947 = vunpack.c.l.b16 %v3363
    %v3948 = vunpack.c.h.b16 %v3363
    %v3949 = vunpack.c.l.b16 %v3364
    %v3950 = vunpack.c.h.b16 %v3364
    %v3951 = vunpack.c.l.b16 %v3365
    %v3952 = vunpack.c.h.b16 %v3365
    %v3953 = vunpack.c.l.b16 %v3366
    %v3954 = vunpack.c.h.b16 %v3366
    %v3955 = vunpack.c.l.b16 %v3367
    %v3956 = vunpack.c.h.b16 %v3367
    %v3957 = vunpack.c.l.b16 %v3368
    %v3958 = vunpack.c.h.b16 %v3368
    %v3959 = vunpack.c.l.b16 %v3369
    %v3960 = vunpack.c.h.b16 %v3369
    %v3961 = vunpack.c.l.b16 %v3370
    %v3962 = vunpack.c.h.b16 %v3370
    %v3963 = vunpack.c.l.b16 %v3371
    %v3964 = vunpack.c.h.b16 %v3371
    %v3965 = vunpack.c.l.b16 %v3372
    %v3966 = vunpack.c.h.b16 %v3372
    %v3967 = vunpack.c.l.b16 %v3373
    %v3968 = vunpack.c.h.b16 %v3373
    %v3969 = vunpack.c.l.b16 %v3374
    %v3970 = vunpack.c.h.b16 %v3374
    %v3971 = vunpack.c.l.b16 %v3375
    %v3972 = vunpack.c.h.b16 %v3375
    %v3973 = vunpack.c.l.b16 %v3376
    %v3974 = vunpack.c.h.b16 %v3376
    %v3975 = vunpack.c.l.b16 %v3377
    %v3976 = vunpack.c.h.b16 %v3377
    %v3977 = vunpack.c.l.b16 %v3378
    %v3978 = vunpack.c.h.b16 %v3378
    %v3979 = vunpack.c.l.b16 %v3379
    %v3980 = vunpack.c.h.b16 %v3379
    %v3981 = vunpack.c.l.b16 %v3380
    %v3982 = vunpack.c.h.b16 %v3380
    %v3983 = vunpack.c.l.b16 %v3381
    %v3984 = vunpack.c.h.b16 %v3381
    %v3985 = vunpack.c.l.b16 %v3382
    %v3986 = vunpack.c.h.b16 %v3382
    %v3987 = vunpack.c.l.b16 %v3383
    %v3988 = vunpack.c.h.b16 %v3383
    %v3989 = vunpack.c.l.b16 %v3384
    %v3990 = vunpack.c.h.b16 %v3384
    %v3991 = vunpack.c.l.b16 %v3385
    %v3992 = vunpack.c.h.b16 %v3385
    %v3993 = vunpack.c.l.b16 %v3386
    %v3994 = vunpack.c.h.b16 %v3386
    %v3995 = vunpack.c.l.b16 %v3387
    %v3996 = vunpack.c.h.b16 %v3387
    %v3997 = vunpack.c.l.b16 %v3388
    %v3998 = vunpack.c.h.b16 %v3388
    %v3999 = vunpack.c.l.b16 %v3389
    %v4000 = vunpack.c.h.b16 %v3389
    %v4001 = vunpack.c.l.b16 %v3390
    %v4002 = vunpack.c.h.b16 %v3390
    %v4003 = vunpack.c.l.b16 %v3391
    %v4004 = vunpack.c.h.b16 %v3391
    %v4005 = vunpack.c.l.b16 %v3392
    %v4006 = vunpack.c.h.b16 %v3392
    %v4007 = vunpack.c.l.b16 %v3393
    %v4008 = vunpack.c.h.b16 %v3393
    %v4009 = vunpack.c.l.b16 %v3394
    %v4010 = vunpack.c.h.b16 %v3394
    %v4011 = vunpack.c.l.b16 %v3395
    %v4012 = vunpack.c.h.b16 %v3395
    %v4013 = vunpack.c.l.b16 %v3396
    %v4014 = vunpack.c.h.b16 %v3396
    %v4015 = vunpack.c.l.b16 %v3397
    %v4016 = vunpack.c.h.b16 %v3397
    %v4017 = vunpack.c.l.b16 %v3398
    %v4018 = vunpack.c.h.b16 %v3398
    %v4019 = vunpack.c.l.b16 %v3399
    %v4020 = vunpack.c.h.b16 %v3399
    %v4021 = vunpack.c.l.b16 %v3400
    %v4022 = vunpack.c.h.b16 %v3400
    %v4023 = vunpack.c.l.b16 %v3401
    %v4024 = vunpack.c.h.b16 %v3401
    %v4025 = vunpack.c.l.b16 %v3402
    %v4026 = vunpack.c.h.b16 %v3402
    %v4027 = vunpack.c.l.b16 %v3403
    %v4028 = vunpack.c.h.b16 %v3403
    %v4029 = vunpack.c.l.b16 %v3404
    %v4030 = vunpack.c.h.b16 %v3404
    %v4031 = vunpack.c.l.b16 %v3405
    %v4032 = vunpack.c.h.b16 %v3405
    %v4033 = vunpack.c.l.b16 %v3406
    %v4034 = vunpack.c.h.b16 %v3406
    %v4035 = vunpack.c.l.b16 %v3407
    %v4036 = vunpack.c.h.b16 %v3407
    %v4037 = vunpack.c.l.b16 %v3408
    %v4038 = vunpack.c.h.b16 %v3408
    %v4039 = vunpack.c.l.b16 %v3409
    %v4040 = vunpack.c.h.b16 %v3409
    %v4041 = vunpack.c.l.b16 %v3410
    %v4042 = vunpack.c.h.b16 %v3410
    %v4043 = vunpack.c.l.b16 %v3411
    %v4044 = vunpack.c.h.b16 %v3411
    %v4045 = vunpack.c.l.b16 %v3412
    %v4046 = vunpack.c.h.b16 %v3412
    %v4047 = vunpack.c.l.b16 %v3413
    %v4048 = vunpack.c.h.b16 %v3413
    %v4049 = vunpack.c.l.b16 %v3414
    %v4050 = vunpack.c.h.b16 %v3414
    %v4051 = vunpack.c.l.b16 %v3415
    %v4052 = vunpack.c.h.b16 %v3415
    %v4053 = vunpack.c.l.b16 %v3416
    %v4054 = vunpack.c.h.b16 %v3416
    %v4055 = vunpack.c.l.b16 %v3417
    %v4056 = vunpack.c.h.b16 %v3417
    %v4057 = vunpack.c.l.b16 %v3418
    %v4058 = vunpack.c.h.b16 %v3418
    %v4059 = vunpack.c.l.b16 %v3419
    %v4060 = vunpack.c.h.b16 %v3419
    %v4061 = vunpack.c.l.b16 %v3420
    %v4062 = vunpack.c.h.b16 %v3420
    %v4063 = vunpack.c.l.b16 %v3421
    %v4064 = vunpack.c.h.b16 %v3421
    %v4065 = vunpack.c.l.b16 %v3422
    %v4066 = vunpack.c.h.b16 %v3422
    %v4067 = vunpack.c.l.b16 %v3423
    %v4068 = vunpack.c.h.b16 %v3423
    %v4069 = vunpack.c.l.b16 %v3424
    %v4070 = vunpack.c.h.b16 %v3424
    %v4071 = vunpack.c.l.b16 %v3425
    %v4072 = vunpack.c.h.b16 %v3425
    %v4073 = vunpack.c.l.b16 %v3426
    %v4074 = vunpack.c.h.b16 %v3426
    %v4075 = vunpack.c.l.b16 %v3427
    %v4076 = vunpack.c.h.b16 %v3427
    %v4077 = vunpack.c.l.b16 %v3428
    %v4078 = vunpack.c.h.b16 %v3428
    %v4079 = vunpack.c.l.b16 %v3429
    %v4080 = vunpack.c.h.b16 %v3429
    %v4081 = vunpack.c.l.b16 %v3430
    %v4082 = vunpack.c.h.b16 %v3430
    %v4083 = vunpack.c.l.b16 %v3431
    %v4084 = vunpack.c.h.b16 %v3431
    %v4085 = vunpack.c.l.b16 %v3432
    %v4086 = vunpack.c.h.b16 %v3432
    %v4087 = vunpack.c.l.b16 %v3433
    %v4088 = vunpack.c.h.b16 %v3433
    %v4089 = vunpack.c.l.b16 %v3434
    %v4090 = vunpack.c.h.b16 %v3434
    %v4091 = vunpack.c.l.b16 %v3435
    %v4092 = vunpack.c.h.b16 %v3435
    %v4093 = vunpack.c.l.b16 %v3436
    %v4094 = vunpack.c.h.b16 %v3436
    %v4095 = vunpack.c.l.b16 %v3437
    %v4096 = vunpack.c.h.b16 %v3437
    %v4097 = vunpack.c.l.b16 %v3438
    %v4098 = vunpack.c.h.b16 %v3438
    %v4099 = vunpack.c.l.b16 %v3439
    %v4100 = vunpack.c.h.b16 %v3439
    %v4101 = vunpack.c.l.b16 %v3440
    %v4102 = vunpack.c.h.b16 %v3440
    %v4103 = vunpack.c.l.b16 %v3441
    %v4104 = vunpack.c.h.b16 %v3441
    %v4105 = vunpack.c.l.b16 %v3442
    %v4106 = vunpack.c.h.b16 %v3442
    %v4107 = vunpack.c.l.b16 %v3443
    %v4108 = vunpack.c.h.b16 %v3443
    %v4109 = vunpack.c.l.b16 %v3444
    %v4110 = vunpack.c.h.b16 %v3444
    %v4111 = vunpack.c.l.b16 %v3445
    %v4112 = vunpack.c.h.b16 %v3445
    %v4113 = vunpack.c.l.b16 %v3446
    %v4114 = vunpack.c.h.b16 %v3446
    %v4115 = vunpack.c.l.b16 %v3447
    %v4116 = vunpack.c.h.b16 %v3447
    %v4117 = vunpack.c.l.b16 %v3448
    %v4118 = vunpack.c.h.b16 %v3448
    %v4119 = vunpack.c.l.b16 %v3449
    %v4120 = vunpack.c.h.b16 %v3449
    %v4121 = vunpack.c.l.b16 %v3450
    %v4122 = vunpack.c.h.b16 %v3450
    %v4123 = vunpack.c.l.b16 %v3451
    %v4124 = vunpack.c.h.b16 %v3451
    %v4125 = vunpack.c.l.b16 %v3452
    %v4126 = vunpack.c.h.b16 %v3452
    %v4127 = vunpack.c.l.b16 %v3453
    %v4128 = vunpack.c.h.b16 %v3453
    %v4129 = vunpack.c.l.b16 %v3454
    %v4130 = vunpack.c.h.b16 %v3454
    %v4131 = vunpack.c.l.b16 %v3455
    %v4132 = vunpack.c.h.b16 %v3455
    %v4133 = vunpack.c.l.b16 %v3456
    %v4134 = vunpack.c.h.b16 %v3456
    %v4135 = vunpack.c.l.b16 %v3457
    %v4136 = vunpack.c.h.b16 %v3457
    %v4137 = vunpack.c.l.b16 %v3458
    %v4138 = vunpack.c.h.b16 %v3458
    %v4139 = vunpack.c.l.b16 %v3459
    %v4140 = vunpack.c.h.b16 %v3459
    %v4141 = vunpack.c.l.b16 %v3460
    %v4142 = vunpack.c.h.b16 %v3460
    %v4143 = vunpack.c.l.b16 %v3461
    %v4144 = vunpack.c.h.b16 %v3461
    %v4145 = vunpack.c.l.b16 %v3462
    %v4146 = vunpack.c.h.b16 %v3462
    %v4147 = vunpack.c.l.b16 %v3463
    %v4148 = vunpack.c.h.b16 %v3463
    %v4149 = vunpack.c.l.b16 %v3464
    %v4150 = vunpack.c.h.b16 %v3464
    %v4151 = vunpack.c.l.b16 %v3465
    %v4152 = vunpack.c.h.b16 %v3465
    %v4153 = vunpack.c.l.b16 %v3466
    %v4154 = vunpack.c.h.b16 %v3466
    %v4155 = vunpack.c.l.b16 %v3467
    %v4156 = vunpack.c.h.b16 %v3467
    %v4157 = vunpack.c.l.b16 %v3468
    %v4158 = vunpack.c.h.b16 %v3468
    %v4159 = vunpack.c.l.b16 %v3469
    %v4160 = vunpack.c.h.b16 %v3469
    %v4161 = vunpack.c.l.b16 %v3470
    %v4162 = vunpack.c.h.b16 %v3470
    %v4163 = vunpack.c.l.b16 %v3471
    %v4164 = vunpack.c.h.b16 %v3471
    %v4165 = vunpack.c.l.b16 %v3472
    %v4166 = vunpack.c.h.b16 %v3472
    %v4167 = vunpack.c.l.b16 %v3473
    %v4168 = vunpack.c.h.b16 %v3473
    %v4169 = vunpack.c.l.b16 %v3474
    %v4170 = vunpack.c.h.b16 %v3474
    %v4171 = vunpack.c.l.b16 %v3475
    %v4172 = vunpack.c.h.b16 %v3475
    %v4173 = vunpack.c.l.b16 %v3476
    %v4174 = vunpack.c.h.b16 %v3476
    %v4175 = vunpack.c.l.b16 %v3477
    %v4176 = vunpack.c.h.b16 %v3477
    %v4177 = vunpack.c.l.b16 %v3478
    %v4178 = vunpack.c.h.b16 %v3478
    %v4179 = vunpack.c.l.b16 %v3479
    %v4180 = vunpack.c.h.b16 %v3479
    %v4181 = vunpack.c.l.b16 %v3480
    %v4182 = vunpack.c.h.b16 %v3480
    %v4183 = vunpack.c.l.b16 %v3481
    %v4184 = vunpack.c.h.b16 %v3481
    %v4185 = vunpack.c.l.b16 %v3482
    %v4186 = vunpack.c.h.b16 %v3482
    %v4187 = vunpack.c.l.b16 %v3483
    %v4188 = vunpack.c.h.b16 %v3483
    %v4189 = vunpack.c.l.b16 %v3484
    %v4190 = vunpack.c.h.b16 %v3484
    %v4191 = vunpack.c.l.b16 %v3485
    %v4192 = vunpack.c.h.b16 %v3485
    %v4193 = vunpack.c.l.b16 %v3486
    %v4194 = vunpack.c.h.b16 %v3486
    %v4195 = vunpack.c.l.b16 %v3487
    %v4196 = vunpack.c.h.b16 %v3487
    %v4197 = vunpack.c.l.b16 %v3488
    %v4198 = vunpack.c.h.b16 %v3488
    %v4199 = vunpack.c.l.b16 %v3489
    %v4200 = vunpack.c.h.b16 %v3489
    %v4201 = vunpack.c.l.b16 %v3490
    %v4202 = vunpack.c.h.b16 %v3490
    %v4203 = vunpack.c.l.b16 %v3491
    %v4204 = vunpack.c.h.b16 %v3491
    %v4205 = vunpack.c.l.b16 %v3492
    %v4206 = vunpack.c.h.b16 %v3492
    %v4207 = vunpack.c.l.b16 %v3493
    %v4208 = vunpack.c.h.b16 %v3493
    %v4209 = vunpack.c.l.b16 %v3494
    %v4210 = vunpack.c.h.b16 %v3494
    %v4211 = vunpack.c.l.b16 %v3495
    %v4212 = vunpack.c.h.b16 %v3495
    %v4213 = vunpack.c.l.b16 %v3496
    %v4214 = vunpack.c.h.b16 %v3496
    %v4215 = vunpack.c.l.b16 %v3497
    %v4216 = vunpack.c.h.b16 %v3497
    %v4217 = vunpack.c.l.b16 %v3498
    %v4218 = vunpack.c.h.b16 %v3498
    %v4219 = vunpack.c.l.b16 %v3499
    %v4220 = vunpack.c.h.b16 %v3499
    %v4221 = vunpack.c.l.b16 %v3500
    %v4222 = vunpack.c.h.b16 %v3500
    %v4223 = vunpack.c.l.b16 %v3501
    %v4224 = vunpack.c.h.b16 %v3501
    %v4225 = vunpack.c.l.b16 %v3502
    %v4226 = vunpack.c.h.b16 %v3502
    %v4227 = vunpack.c.l.b16 %v3503
    %v4228 = vunpack.c.h.b16 %v3503
    %v4229 = vunpack.c.l.b16 %v3504
    %v4230 = vunpack.c.h.b16 %v3504
    %v4231 = vunpack.c.l.b16 %v3505
    %v4232 = vunpack.c.h.b16 %v3505
    %v4233 = vunpack.c.l.b16 %v3506
    %v4234 = vunpack.c.h.b16 %v3506
    %v4235 = vunpack.c.l.b16 %v3507
    %v4236 = vunpack.c.h.b16 %v3507
    %v4237 = vunpack.c.l.b16 %v3508
    %v4238 = vunpack.c.h.b16 %v3508
    %v4239 = vunpack.c.l.b16 %v3509
    %v4240 = vunpack.c.h.b16 %v3509
    %v4241 = vunpack.c.l.b16 %v3510
    %v4242 = vunpack.c.h.b16 %v3510
    %v4243 = vunpack.c.l.b16 %v3511
    %v4244 = vunpack.c.h.b16 %v3511
    %v4245 = vunpack.c.l.b16 %v3512
    %v4246 = vunpack.c.h.b16 %v3512
    %v4247 = vunpack.c.l.b16 %v3513
    %v4248 = vunpack.c.h.b16 %v3513
    %v4249 = vunpack.c.l.b16 %v3514
    %v4250 = vunpack.c.h.b16 %v3514
    %v4251 = vunpack.c.l.b16 %v3515
    %v4252 = vunpack.c.h.b16 %v3515
    %v4253 = vunpack.c.l.b16 %v3516
    %v4254 = vunpack.c.h.b16 %v3516
    %v4255 = vunpack.c.l.b16 %v3517
    %v4256 = vunpack.c.h.b16 %v3517
    %v4257 = vunpack.c.l.b16 %v3518
    %v4258 = vunpack.c.h.b16 %v3518
    %v4259 = vunpack.c.l.b16 %v3519
    %v4260 = vunpack.c.h.b16 %v3519
    %v4261 = vunpack.c.l.b16 %v3520
    %v4262 = vunpack.c.h.b16 %v3520
    %v4263 = vunpack.c.l.b16 %v3521
    %v4264 = vunpack.c.h.b16 %v3521
    %v4265 = vunpack.c.l.b16 %v3522
    %v4266 = vunpack.c.h.b16 %v3522
    %v4267 = vunpack.c.l.b16 %v3523
    %v4268 = vunpack.c.h.b16 %v3523
    %v4269 = vunpack.c.l.b16 %v3524
    %v4270 = vunpack.c.h.b16 %v3524
    %v4271 = vunpack.c.l.b16 %v3525
    %v4272 = vunpack.c.h.b16 %v3525
    %v4273 = vunpack.c.l.b16 %v3526
    %v4274 = vunpack.c.h.b16 %v3526
    %v4275 = vunpack.c.l.b16 %v3527
    %v4276 = vunpack.c.h.b16 %v3527
    %v4277 = vunpack.c.l.b16 %v3528
    %v4278 = vunpack.c.h.b16 %v3528
    %v4279 = vunpack.c.l.b16 %v3529
    %v4280 = vunpack.c.h.b16 %v3529
    %v4281 = vunpack.c.l.b16 %v3530
    %v4282 = vunpack.c.h.b16 %v3530
    %v4283 = vunpack.c.l.b16 %v3531
    %v4284 = vunpack.c.h.b16 %v3531
    %v4285 = vunpack.c.l.b16 %v3532
    %v4286 = vunpack.c.h.b16 %v3532
    %v4287 = vunpack.c.l.b16 %v3533
    %v4288 = vunpack.c.h.b16 %v3533
    %v4289 = vunpack.c.l.b16 %v3534
    %v4290 = vunpack.c.h.b16 %v3534
    %v4291 = vunpack.c.l.b16 %v3535
    %v4292 = vunpack.c.h.b16 %v3535
    %v4293 = vunpack.c.l.b16 %v3536
    %v4294 = vunpack.c.h.b16 %v3536
    %v4295 = vunpack.c.l.b16 %v3537
    %v4296 = vunpack.c.h.b16 %v3537
    %v4297 = vunpack.c.l.b16 %v3538
    %v4298 = vunpack.c.h.b16 %v3538
    %v4299 = vunpack.c.l.b16 %v3539
    %v4300 = vunpack.c.h.b16 %v3539
    %v4301 = vunpack.c.l.b16 %v3540
    %v4302 = vunpack.c.h.b16 %v3540
    %v4303 = vunpack.c.l.b16 %v3541
    %v4304 = vunpack.c.h.b16 %v3541
    %v4305 = vunpack.c.l.b16 %v3542
    %v4306 = vunpack.c.h.b16 %v3542
    %v4307 = vunpack.c.l.b16 %v3543
    %v4308 = vunpack.c.h.b16 %v3543
    %v4309 = vunpack.c.l.b16 %v3544
    %v4310 = vunpack.c.h.b16 %v3544
    %v4311 = vunpack.c.l.b16 %v3545
    %v4312 = vunpack.c.h.b16 %v3545
    %v4313 = vunpack.c.l.b16 %v3546
    %v4314 = vunpack.c.h.b16 %v3546
    %v4315 = vunpack.c.l.b16 %v3547
    %v4316 = vunpack.c.h.b16 %v3547
    %v4317 = vunpack.c.l.b16 %v3548
    %v4318 = vunpack.c.h.b16 %v3548
    %v4319 = vunpack.c.l.b16 %v3549
    %v4320 = vunpack.c.h.b16 %v3549
    %v4321 = vunpack.c.l.b16 %v3550
    %v4322 = vunpack.c.h.b16 %v3550
    %v4323 = vunpack.c.l.b16 %v3551
    %v4324 = vunpack.c.h.b16 %v3551
    %v4325 = vunpack.c.l.b16 %v3552
    %v4326 = vunpack.c.h.b16 %v3552
    %v4327 = vunpack.c.l.b16 %v3553
    %v4328 = vunpack.c.h.b16 %v3553
    %v4329 = vunpack.c.l.b16 %v3554
    %v4330 = vunpack.c.h.b16 %v3554
    %v4331 = vunpack.c.l.b16 %v3555
    %v4332 = vunpack.c.h.b16 %v3555
    %v4333 = vunpack.c.l.b16 %v3556
    %v4334 = vunpack.c.h.b16 %v3556
    %v4335 = vunpack.c.l.b16 %v3557
    %v4336 = vunpack.c.h.b16 %v3557
    %v4337 = vunpack.c.l.b16 %v3558
    %v4338 = vunpack.c.h.b16 %v3558
    %v4339 = vunpack.c.l.b16 %v3559
    %v4340 = vunpack.c.h.b16 %v3559
    %v4341 = vunpack.c.l.b16 %v3560
    %v4342 = vunpack.c.h.b16 %v3560
    %v4343 = vunpack.c.l.b16 %v3561
    %v4344 = vunpack.c.h.b16 %v3561
    %v4345 = vunpack.c.l.b16 %v3562
    %v4346 = vunpack.c.h.b16 %v3562
    %v4347 = vunpack.c.l.b16 %v3563
    %v4348 = vunpack.c.h.b16 %v3563
    %v4349 = vunpack.c.l.b16 %v3564
    %v4350 = vunpack.c.h.b16 %v3564
    %v4351 = vunpack.c.l.b16 %v3565
    %v4352 = vunpack.c.h.b16 %v3565
    %v4353 = vunpack.c.l.b16 %v3566
    %v4354 = vunpack.c.h.b16 %v3566
    %v4355 = vunpack.c.l.b16 %v3567
    %v4356 = vunpack.c.h.b16 %v3567
    %v4357 = vunpack.c.l.b16 %v3568
    %v4358 = vunpack.c.h.b16 %v3568
    %v4359 = vunpack.c.l.b16 %v3569
    %v4360 = vunpack.c.h.b16 %v3569
    %v4361 = vunpack.c.l.b16 %v3570
    %v4362 = vunpack.c.h.b16 %v3570
    %v4363 = vunpack.c.l.b16 %v3571
    %v4364 = vunpack.c.h.b16 %v3571
    %v4365 = vunpack.c.l.b16 %v3572
    %v4366 = vunpack.c.h.b16 %v3572
    %v4367 = vunpack.c.l.b16 %v3573
    %v4368 = vunpack.c.h.b16 %v3573
    %v4369 = vunpack.c.l.b16 %v3574
    %v4370 = vunpack.c.h.b16 %v3574
    %v4371 = vunpack.c.l.b16 %v3575
    %v4372 = vunpack.c.h.b16 %v3575
    %v4373 = vunpack.c.l.b16 %v3576
    %v4374 = vunpack.c.h.b16 %v3576
    %v4375 = vunpack.c.l.b16 %v3577
    %v4376 = vunpack.c.h.b16 %v3577
    %v4377 = vunpack.c.l.b16 %v3578
    %v4378 = vunpack.c.h.b16 %v3578
    %v4379 = vunpack.c.l.b16 %v3579
    %v4380 = vunpack.c.h.b16 %v3579
    %v4381 = vunpack.c.l.b16 %v3580
    %v4382 = vunpack.c.h.b16 %v3580
    %v4383 = vunpack.c.l.b16 %v3581
    %v4384 = vunpack.c.h.b16 %v3581
    %v4385 = vunpack.c.l.b16 %v3582
    %v4386 = vunpack.c.h.b16 %v3582
    %v4387 = vunpack.c.l.b16 %v3583
    %v4388 = vunpack.c.h.b16 %v3583
    %v4389 = vunpack.c.l.b16 %v3584
    %v4390 = vunpack.c.h.b16 %v3584
    %v4391 = vunpack.c.l.b16 %v3585
    %v4392 = vunpack.c.h.b16 %v3585
    %v4393 = vunpack.c.l.b16 %v3586
    %v4394 = vunpack.c.h.b16 %v3586
    %v4395 = vunpack.c.l.b16 %v3587
    %v4396 = vunpack.c.h.b16 %v3587
    %v4397 = vunpack.c.l.b16 %v3588
    %v4398 = vunpack.c.h.b16 %v3588
    %v4399 = vpack.c.b16 %v3895, %v3887
    %v4400 = vpack.c.b16 %v3896, %v3888
    %v4401 = vpack.c.b16 %v3897, %v3889
    %v4402 = vpack.c.b16 %v3898, %v3890
    %v4403 = vpack.c.b16 %v3899, %v3891
    %v4404 = vpack.c.b16 %v3900, %v3892
    %v4405 = vpack.c.b16 %v3901, %v3893
    %v4406 = vpack.c.b16 %v3902, %v3894
    %v4407 = vpack.c.b16 %v3911, %v3903
    %v4408 = vpack.c.b16 %v3912, %v3904
    %v4409 = vpack.c.b16 %v3913, %v3905
    %v4410 = vpack.c.b16 %v3914, %v3906
    %v4411 = vpack.c.b16 %v3915, %v3907
    %v4412 = vpack.c.b16 %v3916, %v3908
    %v4413 = vpack.c.b16 %v3917, %v3909
    %v4414 = vpack.c.b16 %v3918, %v3910
    %v4415 = vpack.c.b16 %v3927, %v3919
    %v4416 = vpack.c.b16 %v3928, %v3920
    %v4417 = vpack.c.b16 %v3929, %v3921
    %v4418 = vpack.c.b16 %v3930, %v3922
    %v4419 = vpack.c.b16 %v3931, %v3923
    %v4420 = vpack.c.b16 %v3932, %v3924
    %v4421 = vpack.c.b16 %v3933, %v3925
    %v4422 = vpack.c.b16 %v3934, %v3926
    %v4423 = vpack.c.b16 %v3943, %v3935
    %v4424 = vpack.c.b16 %v3944, %v3936
    %v4425 = vpack.c.b16 %v3945, %v3937
    %v4426 = vpack.c.b16 %v3946, %v3938
    %v4427 = vpack.c.b16 %v3947, %v3939
    %v4428 = vpack.c.b16 %v3948, %v3940
    %v4429 = vpack.c.b16 %v3949, %v3941
    %v4430 = vpack.c.b16 %v3950, %v3942
    %v4431 = vpack.c.b16 %v3959, %v3951
    %v4432 = vpack.c.b16 %v3960, %v3952
    %v4433 = vpack.c.b16 %v3961, %v3953
    %v4434 = vpack.c.b16 %v3962, %v3954
    %v4435 = vpack.c.b16 %v3963, %v3955
    %v4436 = vpack.c.b16 %v3964, %v3956
    %v4437 = vpack.c.b16 %v3965, %v3957
    %v4438 = vpack.c.b16 %v3966, %v3958
    %v4439 = vpack.c.b16 %v3975, %v3967
    %v4440 = vpack.c.b16 %v3976, %v3968
    %v4441 = vpack.c.b16 %v3977, %v3969
    %v4442 = vpack.c.b16 %v3978, %v3970
    %v4443 = vpack.c.b16 %v3979, %v3971
    %v4444 = vpack.c.b16 %v3980, %v3972
    %v4445 = vpack.c.b16 %v3981, %v3973
    %v4446 = vpack.c.b16 %v3982, %v3974
    %v4447 = vpack.c.b16 %v3991, %v3983
    %v4448 = vpack.c.b16 %v3992, %v3984
    %v4449 = vpack.c.b16 %v3993, %v3985
    %v4450 = vpack.c.b16 %v3994, %v3986
    %v4451 = vpack.c.b16 %v3995, %v3987
    %v4452 = vpack.c.b16 %v3996, %v3988
    %v4453 = vpack.c.b16 %v3997, %v3989
    %v4454 = vpack.c.b16 %v3998, %v3990
    %v4455 = vpack.c.b16 %v4007, %v3999
    %v4456 = vpack.c.b16 %v4008, %v4000
    %v4457 = vpack.c.b16 %v4009, %v4001
    %v4458 = vpack.c.b16 %v4010, %v4002
    %v4459 = vpack.c.b16 %v4011, %v4003
    %v4460 = vpack.c.b16 %v4012, %v4004
    %v4461 = vpack.c.b16 %v4013, %v4005
    %v4462 = vpack.c.b16 %v4014, %v4006
    %v4463 = vpack.c.b16 %v4023, %v4015
    %v4464 = vpack.c.b16 %v4024, %v4016
    %v4465 = vpack.c.b16 %v4025, %v4017
    %v4466 = vpack.c.b16 %v4026, %v4018
    %v4467 = vpack.c.b16 %v4027, %v4019
    %v4468 = vpack.c.b16 %v4028, %v4020
    %v4469 = vpack.c.b16 %v4029, %v4021
    %v4470 = vpack.c.b16 %v4030, %v4022
    %v4471 = vpack.c.b16 %v4039, %v4031
    %v4472 = vpack.c.b16 %v4040, %v4032
    %v4473 = vpack.c.b16 %v4041, %v4033
    %v4474 = vpack.c.b16 %v4042, %v4034
    %v4475 = vpack.c.b16 %v4043, %v4035
    %v4476 = vpack.c.b16 %v4044, %v4036
    %v4477 = vpack.c.b16 %v4045, %v4037
    %v4478 = vpack.c.b16 %v4046, %v4038
    %v4479 = vpack.c.b16 %v4055, %v4047
    %v4480 = vpack.c.b16 %v4056, %v4048
    %v4481 = vpack.c.b16 %v4057, %v4049
    %v4482 = vpack.c.b16 %v4058, %v4050
    %v4483 = vpack.c.b16 %v4059, %v4051
    %v4484 = vpack.c.b16 %v4060, %v4052
    %v4485 = vpack.c.b16 %v4061, %v4053
    %v4486 = vpack.c.b16 %v4062, %v4054
    %v4487 = vpack.c.b16 %v4071, %v4063
    %v4488 = vpack.c.b16 %v4072, %v4064
    %v4489 = vpack.c.b16 %v4073, %v4065
    %v4490 = vpack.c.b16 %v4074, %v4066
    %v4491 = vpack.c.b16 %v4075, %v4067
    %v4492 = vpack.c.b16 %v4076, %v4068
    %v4493 = vpack.c.b16 %v4077, %v4069
    %v4494 = vpack.c.b16 %v4078, %v4070
    %v4495 = vpack.c.b16 %v4087, %v4079
    %v4496 = vpack.c.b16 %v4088, %v4080
    %v4497 = vpack.c.b16 %v4089, %v4081
    %v4498 = vpack.c.b16 %v4090, %v4082
    %v4499 = vpack.c.b16 %v4091, %v4083
    %v4500 = vpack.c.b16 %v4092, %v4084
    %v4501 = vpack.c.b16 %v4093, %v4085
    %v4502 = vpack.c.b16 %v4094, %v4086
    %v4503 = vpack.c.b16 %v4103, %v4095
    %v4504 = vpack.c.b16 %v4104, %v4096
    %v4505 = vpack.c.b16 %v4105, %v4097
    %v4506 = vpack.c.b16 %v4106, %v4098
    %v4507 = vpack.c.b16 %v4107, %v4099
    %v4508 = vpack.c.b16 %v4108, %v4100
    %v4509 = vpack.c.b16 %v4109, %v4101
    %v4510 = vpack.c.b16 %v4110, %v4102
    %v4511 = vpack.c.b16 %v4119, %v4111
    %v4512 = vpack.c.b16 %v4120, %v4112
    %v4513 = vpack.c.b16 %v4121, %v4113
    %v4514 = vpack.c.b16 %v4122, %v4114
    %v4515 = vpack.c.b16 %v4123, %v4115
    %v4516 = vpack.c.b16 %v4124, %v4116
    %v4517 = vpack.c.b16 %v4125, %v4117
    %v4518 = vpack.c.b16 %v4126, %v4118
    %v4519 = vpack.c.b16 %v4135, %v4127
    %v4520 = vpack.c.b16 %v4136, %v4128
    %v4521 = vpack.c.b16 %v4137, %v4129
    %v4522 = vpack.c.b16 %v4138, %v4130
    %v4523 = vpack.c.b16 %v4139, %v4131
    %v4524 = vpack.c.b16 %v4140, %v4132
    %v4525 = vpack.c.b16 %v4141, %v4133
    %v4526 = vpack.c.b16 %v4142, %v4134
    %v4527 = vpack.c.b16 %v4151, %v4143
    %v4528 = vpack.c.b16 %v4152, %v4144
    %v4529 = vpack.c.b16 %v4153, %v4145
    %v4530 = vpack.c.b16 %v4154, %v4146
    %v4531 = vpack.c.b16 %v4155, %v4147
    %v4532 = vpack.c.b16 %v4156, %v4148
    %v4533 = vpack.c.b16 %v4157, %v4149
    %v4534 = vpack.c.b16 %v4158, %v4150
    %v4535 = vpack.c.b16 %v4167, %v4159
    %v4536 = vpack.c.b16 %v4168, %v4160
    %v4537 = vpack.c.b16 %v4169, %v4161
    %v4538 = vpack.c.b16 %v4170, %v4162
    %v4539 = vpack.c.b16 %v4171, %v4163
    %v4540 = vpack.c.b16 %v4172, %v4164
    %v4541 = vpack.c.b16 %v4173, %v4165
    %v4542 = vpack.c.b16 %v4174, %v4166
    %v4543 = vpack.c.b16 %v4183, %v4175
    %v4544 = vpack.c.b16 %v4184, %v4176
    %v4545 = vpack.c.b16 %v4185, %v4177
    %v4546 = vpack.c.b16 %v4186, %v4178
    %v4547 = vpack.c.b16 %v4187, %v4179
    %v4548 = vpack.c.b16 %v4188, %v4180
    %v4549 = vpack.c.b16 %v4189, %v4181
    %v4550 = vpack.c.b16 %v4190, %v4182
    %v4551 = vpack.c.b16 %v4199, %v4191
    %v4552 = vpack.c.b16 %v4200, %v4192
    %v4553 = vpack.c.b16 %v4201, %v4193
    %v4554 = vpack.c.b16 %v4202, %v4194
    %v4555 = vpack.c.b16 %v4203, %v4195
    %v4556 = vpack.c.b16 %v4204, %v4196
    %v4557 = vpack.c.b16 %v4205, %v4197
    %v4558 = vpack.c.b16 %v4206, %v4198
    %v4559 = vpack.c.b16 %v4215, %v4207
    %v4560 = vpack.c.b16 %v4216, %v4208
    %v4561 = vpack.c.b16 %v4217, %v4209
    %v4562 = vpack.c.b16 %v4218, %v4210
    %v4563 = vpack.c.b16 %v4219, %v4211
    %v4564 = vpack.c.b16 %v4220, %v4212
    %v4565 = vpack.c.b16 %v4221, %v4213
    %v4566 = vpack.c.b16 %v4222, %v4214
    %v4567 = vpack.c.b16 %v4231, %v4223
    %v4568 = vpack.c.b16 %v4232, %v4224
    %v4569 = vpack.c.b16 %v4233, %v4225
    %v4570 = vpack.c.b16 %v4234, %v4226
    %v4571 = vpack.c.b16 %v4235, %v4227
    %v4572 = vpack.c.b16 %v4236, %v4228
    %v4573 = vpack.c.b16 %v4237, %v4229
    %v4574 = vpack.c.b16 %v4238, %v4230
    %v4575 = vpack.c.b16 %v4247, %v4239
    %v4576 = vpack.c.b16 %v4248, %v4240
    %v4577 = vpack.c.b16 %v4249, %v4241
    %v4578 = vpack.c.b16 %v4250, %v4242
    %v4579 = vpack.c.b16 %v4251, %v4243
    %v4580 = vpack.c.b16 %v4252, %v4244
    %v4581 = vpack.c.b16 %v4253, %v4245
    %v4582 = vpack.c.b16 %v4254, %v4246
    %v4583 = vpack.c.b16 %v4263, %v4255
    %v4584 = vpack.c.b16 %v4264, %v4256
    %v4585 = vpack.c.b16 %v4265, %v4257
    %v4586 = vpack.c.b16 %v4266, %v4258
    %v4587 = vpack.c.b16 %v4267, %v4259
    %v4588 = vpack.c.b16 %v4268, %v4260
    %v4589 = vpack.c.b16 %v4269, %v4261
    %v4590 = vpack.c.b16 %v4270, %v4262
    %v4591 = vpack.c.b16 %v4279, %v4271
    %v4592 = vpack.c.b16 %v4280, %v4272
    %v4593 = vpack.c.b16 %v4281, %v4273
    %v4594 = vpack.c.b16 %v4282, %v4274
    %v4595 = vpack.c.b16 %v4283, %v4275
    %v4596 = vpack.c.b16 %v4284, %v4276
    %v4597 = vpack.c.b16 %v4285, %v4277
    %v4598 = vpack.c.b16 %v4286, %v4278
    %v4599 = vpack.c.b16 %v4295, %v4287
    %v4600 = vpack.c.b16 %v4296, %v4288
    %v4601 = vpack.c.b16 %v4297, %v4289
    %v4602 = vpack.c.b16 %v4298, %v4290
    %v4603 = vpack.c.b16 %v4299, %v4291
    %v4604 = vpack.c.b16 %v4300, %v4292
    %v4605 = vpack.c.b16 %v4301, %v4293
    %v4606 = vpack.c.b16 %v4302, %v4294
    %v4607 = vpack.c.b16 %v4311, %v4303
    %v4608 = vpack.c.b16 %v4312, %v4304
    %v4609 = vpack.c.b16 %v4313, %v4305
    %v4610 = vpack.c.b16 %v4314, %v4306
    %v4611 = vpack.c.b16 %v4315, %v4307
    %v4612 = vpack.c.b16 %v4316, %v4308
    %v4613 = vpack.c.b16 %v4317, %v4309
    %v4614 = vpack.c.b16 %v4318, %v4310
    %v4615 = vpack.c.b16 %v4327, %v4319
    %v4616 = vpack.c.b16 %v4328, %v4320
    %v4617 = vpack.c.b16 %v4329, %v4321
    %v4618 = vpack.c.b16 %v4330, %v4322
    %v4619 = vpack.c.b16 %v4331, %v4323
    %v4620 = vpack.c.b16 %v4332, %v4324
    %v4621 = vpack.c.b16 %v4333, %v4325
    %v4622 = vpack.c.b16 %v4334, %v4326
    %v4623 = vpack.c.b16 %v4343, %v4335
    %v4624 = vpack.c.b16 %v4344, %v4336
    %v4625 = vpack.c.b16 %v4345, %v4337
    %v4626 = vpack.c.b16 %v4346, %v4338
    %v4627 = vpack.c.b16 %v4347, %v4339
    %v4628 = vpack.c.b16 %v4348, %v4340
    %v4629 = vpack.c.b16 %v4349, %v4341
    %v4630 = vpack.c.b16 %v4350, %v4342
    %v4631 = vpack.c.b16 %v4359, %v4351
    %v4632 = vpack.c.b16 %v4360, %v4352
    %v4633 = vpack.c.b16 %v4361, %v4353
    %v4634 = vpack.c.b16 %v4362, %v4354
    %v4635 = vpack.c.b16 %v4363, %v4355
    %v4636 = vpack.c.b16 %v4364, %v4356
    %v4637 = vpack.c.b16 %v4365, %v4357
    %v4638 = vpack.c.b16 %v4366, %v4358
    %v4639 = vpack.c.b16 %v4375, %v4367
    %v4640 = vpack.c.b16 %v4376, %v4368
    %v4641 = vpack.c.b16 %v4377, %v4369
    %v4642 = vpack.c.b16 %v4378, %v4370
    %v4643 = vpack.c.b16 %v4379, %v4371
    %v4644 = vpack.c.b16 %v4380, %v4372
    %v4645 = vpack.c.b16 %v4381, %v4373
    %v4646 = vpack.c.b16 %v4382, %v4374
    %v4647 = vpack.c.b16 %v4391, %v4383
    %v4648 = vpack.c.b16 %v4392, %v4384
    %v4649 = vpack.c.b16 %v4393, %v4385
    %v4650 = vpack.c.b16 %v4394, %v4386
    %v4651 = vpack.c.b16 %v4395, %v4387
    %v4652 = vpack.c.b16 %v4396, %v4388
    %v4653 = vpack.c.b16 %v4397, %v4389
    %v4654 = vpack.c.b16 %v4398, %v4390
    %4911 = vmatprep.subr.bf16.mxu0 %v4400
    %4912 = vmatpush1.bf16.msra.mxu0 %v4399
    %4913 = vmatprep.subr.bf16.mxu0 %v4408
    %4914 = vmatpush1.bf16.msra.mxu0 %v4407
    %4915 = vmatprep.subr.bf16.mxu0 %v4416
    %4916 = vmatpush1.bf16.msra.mxu0 %v4415
    %4917 = vmatprep.subr.bf16.mxu0 %v4424
    %4918 = vmatpush1.bf16.msra.mxu0 %v4423
    %4919 = vmatprep.subr.bf16.mxu0 %v4432
    %4920 = vmatpush1.bf16.msra.mxu0 %v4431
    %4921 = vmatprep.subr.bf16.mxu0 %v4440
    %4922 = vmatpush1.bf16.msra.mxu0 %v4439
    %4923 = vmatprep.subr.bf16.mxu0 %v4448
    %4924 = vmatpush1.bf16.msra.mxu0 %v4447
    %4925 = vmatprep.subr.bf16.mxu0 %v4456
    %4926 = vmatpush1.bf16.msra.mxu0 %v4455
    %4927 = vmatprep.subr.bf16.mxu0 %v4464
    %4928 = vmatpush1.bf16.msra.mxu0 %v4463
    %4929 = vmatprep.subr.bf16.mxu0 %v4472
    %4930 = vmatpush1.bf16.msra.mxu0 %v4471
    %4931 = vmatprep.subr.bf16.mxu0 %v4480
    %4932 = vmatpush1.bf16.msra.mxu0 %v4479
    %4933 = vmatprep.subr.bf16.mxu0 %v4488
    %4934 = vmatpush1.bf16.msra.mxu0 %v4487
    %4935 = vmatprep.subr.bf16.mxu0 %v4496
    %4936 = vmatpush1.bf16.msra.mxu0 %v4495
    %4937 = vmatprep.subr.bf16.mxu0 %v4504
    %4938 = vmatpush1.bf16.msra.mxu0 %v4503
    %4939 = vmatprep.subr.bf16.mxu0 %v4512
    %4940 = vmatpush1.bf16.msra.mxu0 %v4511
    %4941 = vmatprep.subr.bf16.mxu0 %v4520
    %4942 = vmatpush1.bf16.msra.mxu0 %v4519
    %4943 = vmatprep.mubr.bf16.mxu0 %v3330
    %4944 = vmatmul.mubr.bf16.gmra.mrb[0].mxu0 %v3329
    %v4945 = vpop.f32.mrb[0].mxu0
    %v4946 = vadd.f32 %v3594, %v4945
    %v4947 = vpop.f32.mrb[0].mxu0
    %v4948 = vadd.f32 %v3598, %v4947
    %v4949 = vpop.f32.mrb[0].mxu0
    %v4950 = vpop.f32.mrb[0].mxu0
    %4951 = vdwg.mxu0
    %4952 = vmatprep.subr.bf16.mxu0 %v4528
    %4953 = vmatpush1.bf16.msra.mxu0 %v4527
    %4954 = vmatprep.subr.bf16.mxu0 %v4536
    %4955 = vmatpush1.bf16.msra.mxu0 %v4535
    %4956 = vmatprep.subr.bf16.mxu0 %v4544
    %4957 = vmatpush1.bf16.msra.mxu0 %v4543
    %4958 = vmatprep.subr.bf16.mxu0 %v4552
    %4959 = vmatpush1.bf16.msra.mxu0 %v4551
    %4960 = vmatprep.subr.bf16.mxu0 %v4560
    %4961 = vmatpush1.bf16.msra.mxu0 %v4559
    %4962 = vmatprep.subr.bf16.mxu0 %v4568
    %4963 = vmatpush1.bf16.msra.mxu0 %v4567
    %4964 = vmatprep.subr.bf16.mxu0 %v4576
    %4965 = vmatpush1.bf16.msra.mxu0 %v4575
    %4966 = vmatprep.subr.bf16.mxu0 %v4584
    %4967 = vmatpush1.bf16.msra.mxu0 %v4583
    %4968 = vmatprep.subr.bf16.mxu0 %v4592
    %4969 = vmatpush1.bf16.msra.mxu0 %v4591
    %4970 = vmatprep.subr.bf16.mxu0 %v4600
    %4971 = vmatpush1.bf16.msra.mxu0 %v4599
    %4972 = vmatprep.subr.bf16.mxu0 %v4608
    %4973 = vmatpush1.bf16.msra.mxu0 %v4607
    %4974 = vmatprep.subr.bf16.mxu0 %v4616
    %4975 = vmatpush1.bf16.msra.mxu0 %v4615
    %4976 = vmatprep.subr.bf16.mxu0 %v4624
    %4977 = vmatpush1.bf16.msra.mxu0 %v4623
    %4978 = vmatprep.subr.bf16.mxu0 %v4632
    %4979 = vmatpush1.bf16.msra.mxu0 %v4631
    %4980 = vmatprep.subr.bf16.mxu0 %v4640
    %4981 = vmatpush1.bf16.msra.mxu0 %v4639
    %4982 = vmatprep.subr.bf16.mxu0 %v4648
    %4983 = vmatpush1.bf16.msra.mxu0 %v4647
    %4984 = vmatprep.mubr.bf16.mxu0 %v3332
    %4985 = vmatmul.mubr.bf16.gmra.mrb[0].mxu0 %v3331
    %v4986 = vpop.f32.mrb[0].mxu0
    %v4987 = vadd.f32 %v4946, %v4986
    %v4988 = vpop.f32.mrb[0].mxu0
    %v4989 = vadd.f32 %v4948, %v4988
    %v4990 = vpop.f32.mrb[0].mxu0
    %v4991 = vpop.f32.mrb[0].mxu0
    %4992 = vdwg.mxu0
    %4993 = vmatprep.subr.bf16.mxu0 %v4402
    %4994 = vmatpush1.bf16.msra.mxu0 %v4401
    %4995 = vmatprep.subr.bf16.mxu0 %v4410
    %4996 = vmatpush1.bf16.msra.mxu0 %v4409
    %4997 = vmatprep.subr.bf16.mxu0 %v4418
    %4998 = vmatpush1.bf16.msra.mxu0 %v4417
    %4999 = vmatprep.subr.bf16.mxu0 %v4426
    %5000 = vmatpush1.bf16.msra.mxu0 %v4425
    %5001 = vmatprep.subr.bf16.mxu0 %v4434
    %5002 = vmatpush1.bf16.msra.mxu0 %v4433
    %5003 = vmatprep.subr.bf16.mxu0 %v4442
    %5004 = vmatpush1.bf16.msra.mxu0 %v4441
    %5005 = vmatprep.subr.bf16.mxu0 %v4450
    %5006 = vmatpush1.bf16.msra.mxu0 %v4449
    %5007 = vmatprep.subr.bf16.mxu0 %v4458
    %5008 = vmatpush1.bf16.msra.mxu0 %v4457
    %5009 = vmatprep.subr.bf16.mxu0 %v4466
    %5010 = vmatpush1.bf16.msra.mxu0 %v4465
    %5011 = vmatprep.subr.bf16.mxu0 %v4474
    %5012 = vmatpush1.bf16.msra.mxu0 %v4473
    %5013 = vmatprep.subr.bf16.mxu0 %v4482
    %5014 = vmatpush1.bf16.msra.mxu0 %v4481
    %5015 = vmatprep.subr.bf16.mxu0 %v4490
    %5016 = vmatpush1.bf16.msra.mxu0 %v4489
    %5017 = vmatprep.subr.bf16.mxu0 %v4498
    %5018 = vmatpush1.bf16.msra.mxu0 %v4497
    %5019 = vmatprep.subr.bf16.mxu0 %v4506
    %5020 = vmatpush1.bf16.msra.mxu0 %v4505
    %5021 = vmatprep.subr.bf16.mxu0 %v4514
    %5022 = vmatpush1.bf16.msra.mxu0 %v4513
    %5023 = vmatprep.subr.bf16.mxu0 %v4522
    %5024 = vmatpush1.bf16.msra.mxu0 %v4521
    %5025 = vmatprep.mubr.bf16.mxu0 %v3330
    %5026 = vmatmul.mubr.bf16.gmra.mrb[0].mxu0 %v3329
    %v5027 = vpop.f32.mrb[0].mxu0
    %v5028 = vadd.f32 %v3602, %v5027
    %v5029 = vpop.f32.mrb[0].mxu0
    %v5030 = vadd.f32 %v3606, %v5029
    %v5031 = vpop.f32.mrb[0].mxu0
    %v5032 = vpop.f32.mrb[0].mxu0
    %5033 = vdwg.mxu0
    %5034 = vmatprep.subr.bf16.mxu0 %v4530
    %5035 = vmatpush1.bf16.msra.mxu0 %v4529
    %5036 = vmatprep.subr.bf16.mxu0 %v4538
    %5037 = vmatpush1.bf16.msra.mxu0 %v4537
    %5038 = vmatprep.subr.bf16.mxu0 %v4546
    %5039 = vmatpush1.bf16.msra.mxu0 %v4545
    %5040 = vmatprep.subr.bf16.mxu0 %v4554
    %5041 = vmatpush1.bf16.msra.mxu0 %v4553
    %5042 = vmatprep.subr.bf16.mxu0 %v4562
    %5043 = vmatpush1.bf16.msra.mxu0 %v4561
    %5044 = vmatprep.subr.bf16.mxu0 %v4570
    %5045 = vmatpush1.bf16.msra.mxu0 %v4569
    %5046 = vmatprep.subr.bf16.mxu0 %v4578
    %5047 = vmatpush1.bf16.msra.mxu0 %v4577
    %5048 = vmatprep.subr.bf16.mxu0 %v4586
    %5049 = vmatpush1.bf16.msra.mxu0 %v4585
    %5050 = vmatprep.subr.bf16.mxu0 %v4594
    %5051 = vmatpush1.bf16.msra.mxu0 %v4593
    %5052 = vmatprep.subr.bf16.mxu0 %v4602
    %5053 = vmatpush1.bf16.msra.mxu0 %v4601
    %5054 = vmatprep.subr.bf16.mxu0 %v4610
    %5055 = vmatpush1.bf16.msra.mxu0 %v4609
    %5056 = vmatprep.subr.bf16.mxu0 %v4618
    %5057 = vmatpush1.bf16.msra.mxu0 %v4617
    %5058 = vmatprep.subr.bf16.mxu0 %v4626
    %5059 = vmatpush1.bf16.msra.mxu0 %v4625
    %5060 = vmatprep.subr.bf16.mxu0 %v4634
    %5061 = vmatpush1.bf16.msra.mxu0 %v4633
    %5062 = vmatprep.subr.bf16.mxu0 %v4642
    %5063 = vmatpush1.bf16.msra.mxu0 %v4641
    %5064 = vmatprep.subr.bf16.mxu0 %v4650
    %5065 = vmatpush1.bf16.msra.mxu0 %v4649
    %5066 = vmatprep.mubr.bf16.mxu0 %v3332
    %5067 = vmatmul.mubr.bf16.gmra.mrb[0].mxu0 %v3331
    %v5068 = vpop.f32.mrb[0].mxu0
    %v5069 = vadd.f32 %v5028, %v5068
    %v5070 = vpop.f32.mrb[0].mxu0
    %v5071 = vadd.f32 %v5030, %v5070
    %v5072 = vpop.f32.mrb[0].mxu0
    %v5073 = vpop.f32.mrb[0].mxu0
    %5074 = vdwg.mxu0
    %5075 = vmatprep.subr.bf16.mxu0 %v4404
    %5076 = vmatpush1.bf16.msra.mxu0 %v4403
    %5077 = vmatprep.subr.bf16.mxu0 %v4412
    %5078 = vmatpush1.bf16.msra.mxu0 %v4411
    %5079 = vmatprep.subr.bf16.mxu0 %v4420
    %5080 = vmatpush1.bf16.msra.mxu0 %v4419
    %5081 = vmatprep.subr.bf16.mxu0 %v4428
    %5082 = vmatpush1.bf16.msra.mxu0 %v4427
    %5083 = vmatprep.subr.bf16.mxu0 %v4436
    %5084 = vmatpush1.bf16.msra.mxu0 %v4435
    %5085 = vmatprep.subr.bf16.mxu0 %v4444
    %5086 = vmatpush1.bf16.msra.mxu0 %v4443
    %5087 = vmatprep.subr.bf16.mxu0 %v4452
    %5088 = vmatpush1.bf16.msra.mxu0 %v4451
    %5089 = vmatprep.subr.bf16.mxu0 %v4460
    %5090 = vmatpush1.bf16.msra.mxu0 %v4459
    %5091 = vmatprep.subr.bf16.mxu0 %v4468
    %5092 = vmatpush1.bf16.msra.mxu0 %v4467
    %5093 = vmatprep.subr.bf16.mxu0 %v4476
    %5094 = vmatpush1.bf16.msra.mxu0 %v4475
    %5095 = vmatprep.subr.bf16.mxu0 %v4484
    %5096 = vmatpush1.bf16.msra.mxu0 %v4483
    %5097 = vmatprep.subr.bf16.mxu0 %v4492
    %5098 = vmatpush1.bf16.msra.mxu0 %v4491
    %5099 = vmatprep.subr.bf16.mxu0 %v4500
    %5100 = vmatpush1.bf16.msra.mxu0 %v4499
    %5101 = vmatprep.subr.bf16.mxu0 %v4508
    %5102 = vmatpush1.bf16.msra.mxu0 %v4507
    %5103 = vmatprep.subr.bf16.mxu0 %v4516
    %5104 = vmatpush1.bf16.msra.mxu0 %v4515
    %5105 = vmatprep.subr.bf16.mxu0 %v4524
    %5106 = vmatpush1.bf16.msra.mxu0 %v4523
    %5107 = vmatprep.mubr.bf16.mxu0 %v3330
    %5108 = vmatmul.mubr.bf16.gmra.mrb[0].mxu0 %v3329
    %v5109 = vpop.f32.mrb[0].mxu0
    %v5110 = vadd.f32 %v3610, %v5109
    %v5111 = vpop.f32.mrb[0].mxu0
    %v5112 = vadd.f32 %v3614, %v5111
    %v5113 = vpop.f32.mrb[0].mxu0
    %v5114 = vpop.f32.mrb[0].mxu0
    %5115 = vdwg.mxu0
    %5116 = vmatprep.subr.bf16.mxu0 %v4532
    %5117 = vmatpush1.bf16.msra.mxu0 %v4531
    %5118 = vmatprep.subr.bf16.mxu0 %v4540
    %5119 = vmatpush1.bf16.msra.mxu0 %v4539
    %5120 = vmatprep.subr.bf16.mxu0 %v4548
    %5121 = vmatpush1.bf16.msra.mxu0 %v4547
    %5122 = vmatprep.subr.bf16.mxu0 %v4556
    %5123 = vmatpush1.bf16.msra.mxu0 %v4555
    %5124 = vmatprep.subr.bf16.mxu0 %v4564
    %5125 = vmatpush1.bf16.msra.mxu0 %v4563
    %5126 = vmatprep.subr.bf16.mxu0 %v4572
    %5127 = vmatpush1.bf16.msra.mxu0 %v4571
    %5128 = vmatprep.subr.bf16.mxu0 %v4580
    %5129 = vmatpush1.bf16.msra.mxu0 %v4579
    %5130 = vmatprep.subr.bf16.mxu0 %v4588
    %5131 = vmatpush1.bf16.msra.mxu0 %v4587
    %5132 = vmatprep.subr.bf16.mxu0 %v4596
    %5133 = vmatpush1.bf16.msra.mxu0 %v4595
    %5134 = vmatprep.subr.bf16.mxu0 %v4604
    %5135 = vmatpush1.bf16.msra.mxu0 %v4603
    %5136 = vmatprep.subr.bf16.mxu0 %v4612
    %5137 = vmatpush1.bf16.msra.mxu0 %v4611
    %5138 = vmatprep.subr.bf16.mxu0 %v4620
    %5139 = vmatpush1.bf16.msra.mxu0 %v4619
    %5140 = vmatprep.subr.bf16.mxu0 %v4628
    %5141 = vmatpush1.bf16.msra.mxu0 %v4627
    %5142 = vmatprep.subr.bf16.mxu0 %v4636
    %5143 = vmatpush1.bf16.msra.mxu0 %v4635
    %5144 = vmatprep.subr.bf16.mxu0 %v4644
    %5145 = vmatpush1.bf16.msra.mxu0 %v4643
    %5146 = vmatprep.subr.bf16.mxu0 %v4652
    %5147 = vmatpush1.bf16.msra.mxu0 %v4651
    %5148 = vmatprep.mubr.bf16.mxu0 %v3332
    %5149 = vmatmul.mubr.bf16.gmra.mrb[0].mxu0 %v3331
    %v5150 = vpop.f32.mrb[0].mxu0
    %v5151 = vadd.f32 %v5110, %v5150
    %v5152 = vpop.f32.mrb[0].mxu0
    %v5153 = vadd.f32 %v5112, %v5152
    %v5154 = vpop.f32.mrb[0].mxu0
    %v5155 = vpop.f32.mrb[0].mxu0
    %5156 = vdwg.mxu0
    %5157 = vmatprep.subr.bf16.mxu0 %v4406
    %5158 = vmatpush1.bf16.msra.mxu0 %v4405
    %5159 = vmatprep.subr.bf16.mxu0 %v4414
    %5160 = vmatpush1.bf16.msra.mxu0 %v4413
    %5161 = vmatprep.subr.bf16.mxu0 %v4422
    %5162 = vmatpush1.bf16.msra.mxu0 %v4421
    %5163 = vmatprep.subr.bf16.mxu0 %v4430
    %5164 = vmatpush1.bf16.msra.mxu0 %v4429
    %5165 = vmatprep.subr.bf16.mxu0 %v4438
    %5166 = vmatpush1.bf16.msra.mxu0 %v4437
    %5167 = vmatprep.subr.bf16.mxu0 %v4446
    %5168 = vmatpush1.bf16.msra.mxu0 %v4445
    %5169 = vmatprep.subr.bf16.mxu0 %v4454
    %5170 = vmatpush1.bf16.msra.mxu0 %v4453
    %5171 = vmatprep.subr.bf16.mxu0 %v4462
    %5172 = vmatpush1.bf16.msra.mxu0 %v4461
    %5173 = vmatprep.subr.bf16.mxu0 %v4470
    %5174 = vmatpush1.bf16.msra.mxu0 %v4469
    %5175 = vmatprep.subr.bf16.mxu0 %v4478
    %5176 = vmatpush1.bf16.msra.mxu0 %v4477
    %5177 = vmatprep.subr.bf16.mxu0 %v4486
    %5178 = vmatpush1.bf16.msra.mxu0 %v4485
    %5179 = vmatprep.subr.bf16.mxu0 %v4494
    %5180 = vmatpush1.bf16.msra.mxu0 %v4493
    %5181 = vmatprep.subr.bf16.mxu0 %v4502
    %5182 = vmatpush1.bf16.msra.mxu0 %v4501
    %5183 = vmatprep.subr.bf16.mxu0 %v4510
    %5184 = vmatpush1.bf16.msra.mxu0 %v4509
    %5185 = vmatprep.subr.bf16.mxu0 %v4518
    %5186 = vmatpush1.bf16.msra.mxu0 %v4517
    %5187 = vmatprep.subr.bf16.mxu0 %v4526
    %5188 = vmatpush1.bf16.msra.mxu0 %v4525
    %5189 = vmatprep.mubr.bf16.mxu0 %v3330
    %5190 = vmatmul.mubr.bf16.gmra.mrb[0].mxu0 %v3329
    %v5191 = vpop.f32.mrb[0].mxu0
    %v5192 = vadd.f32 %v3618, %v5191
    %v5193 = vpop.f32.mrb[0].mxu0
    %v5194 = vadd.f32 %v3622, %v5193
    %v5195 = vpop.f32.mrb[0].mxu0
    %v5196 = vpop.f32.mrb[0].mxu0
    %5197 = vdwg.mxu0
    %5198 = vmatprep.subr.bf16.mxu0 %v4534
    %5199 = vmatpush1.bf16.msra.mxu0 %v4533
    %5200 = vmatprep.subr.bf16.mxu0 %v4542
    %5201 = vmatpush1.bf16.msra.mxu0 %v4541
    %5202 = vmatprep.subr.bf16.mxu0 %v4550
    %5203 = vmatpush1.bf16.msra.mxu0 %v4549
    %5204 = vmatprep.subr.bf16.mxu0 %v4558
    %5205 = vmatpush1.bf16.msra.mxu0 %v4557
    %5206 = vmatprep.subr.bf16.mxu0 %v4566
    %5207 = vmatpush1.bf16.msra.mxu0 %v4565
    %5208 = vmatprep.subr.bf16.mxu0 %v4574
    %5209 = vmatpush1.bf16.msra.mxu0 %v4573
    %5210 = vmatprep.subr.bf16.mxu0 %v4582
    %5211 = vmatpush1.bf16.msra.mxu0 %v4581
    %5212 = vmatprep.subr.bf16.mxu0 %v4590
    %5213 = vmatpush1.bf16.msra.mxu0 %v4589
    %5214 = vmatprep.subr.bf16.mxu0 %v4598
    %5215 = vmatpush1.bf16.msra.mxu0 %v4597
    %5216 = vmatprep.subr.bf16.mxu0 %v4606
    %5217 = vmatpush1.bf16.msra.mxu0 %v4605
    %5218 = vmatprep.subr.bf16.mxu0 %v4614
    %5219 = vmatpush1.bf16.msra.mxu0 %v4613
    %5220 = vmatprep.subr.bf16.mxu0 %v4622
    %5221 = vmatpush1.bf16.msra.mxu0 %v4621
    %5222 = vmatprep.subr.bf16.mxu0 %v4630
    %5223 = vmatpush1.bf16.msra.mxu0 %v4629
    %5224 = vmatprep.subr.bf16.mxu0 %v4638
    %5225 = vmatpush1.bf16.msra.mxu0 %v4637
    %5226 = vmatprep.subr.bf16.mxu0 %v4646
    %5227 = vmatpush1.bf16.msra.mxu0 %v4645
    %5228 = vmatprep.subr.bf16.mxu0 %v4654
    %5229 = vmatpush1.bf16.msra.mxu0 %v4653
    %5230 = vmatprep.mubr.bf16.mxu0 %v3332
    %5231 = vmatmul.mubr.bf16.gmra.mrb[0].mxu0 %v3331
    %v5232 = vpop.f32.mrb[0].mxu0
    %v5233 = vadd.f32 %v5192, %v5232
    %v5234 = vpop.f32.mrb[0].mxu0
    %v5235 = vadd.f32 %v5194, %v5234
    %v5236 = vpop.f32.mrb[0].mxu0
    %v5237 = vpop.f32.mrb[0].mxu0
    %5238 = vdwg.mxu0
    %v5239 = vxor.u32 %v4987, 2147483648
    %v5240 = vxor.u32 %v4989, 2147483648
    %v5241 = vxor.u32 %v5069, 2147483648
    %v5242 = vxor.u32 %v5071, 2147483648
    %v5243 = vxor.u32 %v5151, 2147483648
    %v5244 = vxor.u32 %v5153, 2147483648
    %v5245 = vxor.u32 %v5233, 2147483648
    %v5246 = vxor.u32 %v5235, 2147483648
    %v5247 = vmul.f32 %v5239, 1.442695
    %v5248 = vpow.pop %v5247
    %v5249 = vmul.f32 %v5240, 1.442695
    %v5250 = vpow.pop %v5249
    %v5251 = vmul.f32 %v5241, 1.442695
    %v5252 = vpow.pop %v5251
    %v5253 = vmul.f32 %v5242, 1.442695
    %v5254 = vpow.pop %v5253
    %v5255 = vmul.f32 %v5243, 1.442695
    %v5256 = vpow.pop %v5255
    %v5257 = vmul.f32 %v5244, 1.442695
    %v5258 = vpow.pop %v5257
    %v5259 = vmul.f32 %v5245, 1.442695
    %v5260 = vpow.pop %v5259
    %v5261 = vmul.f32 %v5246, 1.442695
    %v5262 = vpow.pop %v5261
    %v5263 = vadd.f32 %v5248, 1.0
    %v5264 = vadd.f32 %v5250, 1.0
    %v5265 = vadd.f32 %v5252, 1.0
    %v5266 = vadd.f32 %v5254, 1.0
    %v5267 = vadd.f32 %v5256, 1.0
    %v5268 = vadd.f32 %v5258, 1.0
    %v5269 = vadd.f32 %v5260, 1.0
    %v5270 = vadd.f32 %v5262, 1.0
    %v5271 = vrcp.pop %v5263
    %v5272 = vmul.f32 1.0, %v5271
    %v5273 = vrcp.pop %v5264
    %v5274 = vmul.f32 1.0, %v5273
    %v5275 = vrcp.pop %v5265
    %v5276 = vmul.f32 1.0, %v5275
    %v5277 = vrcp.pop %v5266
    %v5278 = vmul.f32 1.0, %v5277
    %v5279 = vrcp.pop %v5267
    %v5280 = vmul.f32 1.0, %v5279
    %v5281 = vrcp.pop %v5268
    %v5282 = vmul.f32 1.0, %v5281
    %v5283 = vrcp.pop %v5269
    %v5284 = vmul.f32 1.0, %v5283
    %v5285 = vrcp.pop %v5270
    %v5286 = vmul.f32 1.0, %v5285
    %5287 = vst [vmem:[%s13] sm:$0xff] %v5272
    %5288 = vst [vmem:[%s13 + $0x8] sm:$0xff] %v5274
    %5289 = vst [vmem:[%s13 + $0x10] sm:$0xff] %v5276
    %5290 = vst [vmem:[%s13 + $0x18] sm:$0xff] %v5278
    %5291 = vst [vmem:[%s13 + $0x20] sm:$0xff] %v5280
    %5292 = vst [vmem:[%s13 + $0x28] sm:$0xff] %v5282
    %5293 = vst [vmem:[%s13 + $0x30] sm:$0xff] %v5284
    %5294 = vst [vmem:[%s13 + $0x38] sm:$0xff] %v5286
    // Predicated region
    $region70: #{ae_forward.1} parent=1 // pred_check
      _
    $region71: #{ae_forward.1} parent=1 // pred_check_branch
      %5296 = sbr.rel (0) target = $region73
    $region72: #{ae_forward.1} parent=1 // pred_region
      _
    $region73: #{ae_forward.1} parent=1 // pred_fallthru
      _
    // Predicated region
    $region74: #{ae_forward.1} parent=1 // pred_check
      _
    $region75: #{ae_forward.1} parent=1 // pred_check_branch
      %5298 = sbr.rel (0) target = $region77
    $region76: #{ae_forward.1} parent=1 // pred_region
      _
    $region77: #{ae_forward.1} parent=1 // pred_fallthru
      _
    %5299 = vsyncpa [#allocation3], 1
    %5300 = vsyncpa [#allocation5], 1
    %5301 = vsyncpa [#allocation8], 1

</llo_original>
